<compile_context>
chip_gen: v7x
topology: tpu7x:2x2x1
jax: 0.10.0
libtpu: 0.0.40
codegen_flags: <defaults>
</compile_context>

<pallas_src>
import jax
import jax.numpy as jnp
from jax import lax
from jax.experimental import pallas as pl
from jax.experimental.pallas import tpu as pltpu

# config = {'epsilon': 0.031, 'num_steps': 10, 'step_size': 0.007,
#           'random_start': True, 'loss_func': 'xent'}
EPSILON = 0.031
NUM_STEPS = 10
STEP_SIZE = 0.007
RANDOM_START = True

NEG_PAD_BIAS = -1e9  # bias for padded (fake) classes -> softmax prob == 0


def _round_up(x, m):
    return ((x + m - 1) // m) * m


def pgd_kernel(x0_ref, inp_ref, tgt_ref, w_ref, wt_ref, b_ref,
               logits_ref, xadv_ref):
    """Full PGD loop + final forward pass for one batch block.

    x0_ref     : (B_BLK, D_PAD)   PGD starting point (inputs + random start), f32
    inp_ref    : (B_BLK, D_PAD)   clean inputs (center of the L_inf ball), f32
    tgt_ref    : (B_BLK, 1)       int32 class targets (-1 on padded rows)
    w_ref      : (D_PAD, NC_PAD)  classifier weight, bf16 (zero-padded)
    wt_ref     : (NC_PAD, D_PAD)  pre-transposed weight, bf16
    b_ref      : (1, NC_PAD)      classifier bias, f32 (-1e9 on padded classes)
    logits_ref : (B_BLK, NC_PAD)  output logits of basic_net(x_adv), f32
    xadv_ref   : (B_BLK, D_PAD)   adversarial example, f32
    """
    inputs = inp_ref[...]                      # f32
    x = x0_ref[...]                            # f32 starting point
    w = w_ref[...]                             # bf16
    w_t = wt_ref[...]                          # bf16 (transpose hoisted out of loop)

    b_blk, nc_pad = logits_ref.shape

    # --- hoisted out of the PGD loop (perf review) ---------------------------
    # bias broadcast emitted once (JAX does not CSE broadcast_in_dim)
    b_bcast = jnp.broadcast_to(b_ref[...], (b_blk, nc_pad))
    # one-hot targets built in-kernel (padded rows have target -1 -> all zeros)
    tgt = tgt_ref[...]                                           # (b_blk, 1) i32
    class_iota = lax.broadcasted_iota(jnp.int32, (b_blk, nc_pad), 1)
    onehot = (class_iota == tgt).astype(jnp.float32)
    # eps-ball intersected with [0,1]: single clamp per step instead of two
    lo = jnp.maximum(inputs - EPSILON, 0.0)
    hi = jnp.minimum(inputs + EPSILON, 1.0)
    # copysign bit-trick constants for step_size * sign(gx)
    step_bits = lax.bitcast_convert_type(jnp.float32(STEP_SIZE), jnp.uint32)
    sign_mask = jnp.uint32(0x80000000)
    # --------------------------------------------------------------------------

    def forward(xc):
        # basic_net forward: (B_BLK, D_PAD) @ (D_PAD, NC_PAD) + bias; bf16 MXU,
        # f32 accumulate.
        return jnp.dot(xc.astype(jnp.bfloat16), w,
                       preferred_element_type=jnp.float32) + b_bcast

    def body(_, xc):
        logits = forward(xc)
        # numerically stable softmax (padded classes contribute exactly 0)
        m = jnp.max(logits, axis=-1, keepdims=True)
        e = jnp.exp(logits - m)
        inv = 1.0 / jnp.sum(e, axis=-1, keepdims=True)           # (b_blk, 1)
        glogits = e * inv - onehot                               # dCE/dlogits
        # grad wrt x: (B_BLK, NC_PAD) @ (NC_PAD, D_PAD) on the MXU
        gx = jnp.dot(glogits.astype(jnp.bfloat16), w_t,
                     preferred_element_type=jnp.float32)
        # step_size * sign(gx) via copysign bit-trick.
        # TODO(synk): sign(0) maps to +step_size here vs 0 in torch.sign; a
        # zero gradient component is measure-zero for float inputs.
        delta = lax.bitcast_convert_type(
            (lax.bitcast_convert_type(gx, jnp.uint32) & sign_mask) | step_bits,
            jnp.float32)
        # PGD update + hoisted clamp (all f32 on the VPU)
        return jnp.minimum(jnp.maximum(xc + delta, lo), hi)

    x = lax.fori_loop(0, NUM_STEPS, body, x, unroll=True)

    xadv_ref[...] = x
    logits_ref[...] = forward(x)


def _plan_blocks(batch, d_pad, nc_pad, b_blk_req=128):
    """Pick the batch-block size and VMEM limit. Shrinks the block (never the
    limit) if the estimate would exceed the 56 MiB cap (headroom on v7x)."""
    f32, bf16 = 4, 2
    cap = 56 << 20
    b8 = _round_up(batch, 8)

    def est(b_blk):
        e = 2 * b_blk * d_pad * f32 * 2        # x0 + inputs (double buffered)
        e += 2 * b_blk * d_pad * f32           # x_adv output (double buffered)
        e += 2 * b_blk * nc_pad * f32          # logits output
        e += 2 * b_blk * 4                     # targets
        e += 2 * d_pad * nc_pad * bf16 * 2     # W + W^T (two buffer slots each)
        e += 2 * nc_pad * f32                  # bias
        e += 6 * b_blk * d_pad * f32           # in-loop live set (x, lo, hi, gx, temps)
        e += 4 << 20                           # compiler/internal scratch headroom
        return e

    b_blk = min(b_blk_req, b8)
    # Ensure >=2 grid blocks when the batch allows it, so the "parallel" axis
    # actually shards across both v7x TensorCores.
    if b8 // b_blk < 2 and b8 >= 16:
        b_blk = b8 // 2
    b_blk = max(8, (b_blk // 8) * 8)
    while est(b_blk) > cap and b_blk > 8:
        b_blk = max(8, ((b_blk // 2) // 8) * 8)

    vmem = max(min(est(b_blk), cap), 32 << 20)
    return b_blk, vmem


def attack_pgd(inputs, targets, w, b, seed, *, b_blk=128):
    """inputs: (B, C, H, W) float32 in [0,1]; targets: (B,) int32; seed: int32.

    Returns (logits, x_adv) matching AttackPGD.forward:
      logits: (B, NUM_CLASSES), x_adv: (B, C, H, W).
    """
    B, C, H, W_ = inputs.shape
    D = C * H * W_
    NC = w.shape[1]
    NC_PAD = _round_up(NC, 128)               # lane-dense class axis
    D_PAD = _round_up(D, 128)                 # lane-dense feature axis

    B_BLK, vmem_bytes = _plan_blocks(B, D_PAD, NC_PAD, b_blk)
    B_PAD = _round_up(B, B_BLK)
    grid = (B_PAD // B_BLK,)

    x_flat = inputs.reshape(B, D).astype(jnp.float32)

    # Random start generated wrapper-side (pltpu.prng_* has no interpret/CPU
    # lowering); uniform in [-eps, eps), matching torch's uniform_ up to the
    # half-open endpoint.
    if RANDOM_START:
        key = jax.random.PRNGKey(seed)
        noise = jax.random.uniform(key, (B, D), jnp.float32, -EPSILON, EPSILON)
        x0 = x_flat + noise
    else:
        x0 = x_flat

    pad2 = ((0, B_PAD - B), (0, D_PAD - D))
    x_flat_p = jnp.pad(x_flat, pad2)
    x0_p = jnp.pad(x0, pad2)

    tgt = jnp.pad(targets.astype(jnp.int32), (0, B_PAD - B), constant_values=-1)
    tgt = tgt.reshape(B_PAD, 1)

    w_pad = jnp.pad(w.astype(jnp.float32), ((0, D_PAD - D), (0, NC_PAD - NC)))
    w_bf = w_pad.astype(jnp.bfloat16)           # (D_PAD, NC_PAD)
    wt_bf = w_pad.T.astype(jnp.bfloat16)        # (NC_PAD, D_PAD), transpose hoisted
    b_pad = jnp.full((1, NC_PAD), NEG_PAD_BIAS, jnp.float32)
    b_pad = b_pad.at[0, :NC].set(b.reshape(-1).astype(jnp.float32))

    logits_pad, xadv_pad = pl.pallas_call(
        pgd_kernel,
        out_shape=(jax.ShapeDtypeStruct((B_PAD, NC_PAD), jnp.float32),
                   jax.ShapeDtypeStruct((B_PAD, D_PAD), jnp.float32)),
        grid=grid,
        in_specs=[
            pl.BlockSpec((B_BLK, D_PAD), lambda i: (i, 0)),     # x0 (start)
            pl.BlockSpec((B_BLK, D_PAD), lambda i: (i, 0)),     # clean inputs
            pl.BlockSpec((B_BLK, 1), lambda i: (i, 0)),         # targets
            pl.BlockSpec((D_PAD, NC_PAD), lambda i: (0, 0)),    # W   (resident)
            pl.BlockSpec((NC_PAD, D_PAD), lambda i: (0, 0)),    # W^T (resident)
            pl.BlockSpec((1, NC_PAD), lambda i: (0, 0)),        # bias
        ],
        out_specs=(
            pl.BlockSpec((B_BLK, NC_PAD), lambda i: (i, 0)),    # logits
            pl.BlockSpec((B_BLK, D_PAD), lambda i: (i, 0)),     # x_adv
        ),
        compiler_params=pltpu.CompilerParams(
            dimension_semantics=("parallel",),
            vmem_limit_bytes=vmem_bytes,
        ),
    )(x0_p, x_flat_p, tgt, w_bf, wt_bf, b_pad)

    logits = logits_pad[:B, :NC]
    x_adv = xadv_pad[:B, :D].reshape(B, C, H, W_)
    return logits, x_adv


if __name__ == "__main__":
    key = jax.random.PRNGKey(0)
    k_img, k_tgt, k_w, k_b, k_seed = jax.random.split(key, 5)

    B, C, H, W_ = 2, 4, 16, 16
    NUM_CLASSES = 10
    D = C * H * W_

    inputs = jax.random.uniform(k_img, (B, C, H, W_), jnp.float32)  # images in [0,1]
    targets = jax.random.randint(k_tgt, (B,), 0, NUM_CLASSES, dtype=jnp.int32)
    w = jax.random.normal(k_w, (D, NUM_CLASSES), jnp.float32) * 0.05
    b = jax.random.normal(k_b, (NUM_CLASSES,), jnp.float32) * 0.01
    seed = jax.random.randint(k_seed, (), 0, 2**31 - 1, dtype=jnp.int32)

    logits, x_adv = attack_pgd(inputs, targets, w, b, seed)
    jax.block_until_ready((logits, x_adv))

    assert logits.shape == (B, NUM_CLASSES)
    assert x_adv.shape == (B, C, H, W_)
    # adversarial examples must stay in the eps-ball intersected with [0,1]
    assert bool(jnp.all(x_adv >= 0.0)) and bool(jnp.all(x_adv <= 1.0))
    assert bool(jnp.all(jnp.abs(x_adv - inputs) <= EPSILON + 1e-5))
    print("KERNEL_OK")
</pallas_src>

<mosaic_0001>
module attributes {stable_mosaic.version = 11 : i64} {
  func.func @pgd_kernel(%arg0: i32, %arg1: memref<8x1024xf32, #tpu.memory_space<vmem>>, %arg2: memref<8x1024xf32, #tpu.memory_space<vmem>>, %arg3: memref<8x1xi32, #tpu.memory_space<vmem>>, %arg4: memref<1024x128xbf16, #tpu.memory_space<vmem>>, %arg5: memref<128x1024xbf16, #tpu.memory_space<vmem>>, %arg6: memref<1x128xf32, #tpu.memory_space<vmem>>, %arg7: memref<8x128xf32, #tpu.memory_space<vmem>>, %arg8: memref<8x1024xf32, #tpu.memory_space<vmem>>) attributes {dimension_semantics = [#tpu.dimension_semantics<parallel>], iteration_bounds = array<i64: 1>, scalar_prefetch = 0 : i64, scratch_operands = 0 : i64, tpu.core_type = #tpu.core_type<tc>, window_params = [{transform_indices = @transform_0, window_bounds = array<i64: 8, 1024>}, {transform_indices = @transform_1, window_bounds = array<i64: 8, 1024>}, {transform_indices = @transform_2, window_bounds = array<i64: 8, 1>}, {pipeline_mode = #tpu.pipeline_mode<synchronous>, transform_indices = @transform_3, window_bounds = array<i64: 1024, 128>}, {pipeline_mode = #tpu.pipeline_mode<synchronous>, transform_indices = @transform_4, window_bounds = array<i64: 128, 1024>}, {pipeline_mode = #tpu.pipeline_mode<synchronous>, transform_indices = @transform_5, window_bounds = array<i64: 1, 128>}, {transform_indices = @transform_6, window_bounds = array<i64: 8, 128>}, {transform_indices = @transform_7, window_bounds = array<i64: 8, 1024>}]} {
    %c0 = arith.constant 0 : index
    %c0_0 = arith.constant 0 : index
    %0 = vector.load %arg2[%c0, %c0_0] : memref<8x1024xf32, #tpu.memory_space<vmem>>, vector<8x1024xf32>
    %c0_1 = arith.constant 0 : index
    %c0_2 = arith.constant 0 : index
    %1 = vector.load %arg1[%c0_1, %c0_2] : memref<8x1024xf32, #tpu.memory_space<vmem>>, vector<8x1024xf32>
    %c0_3 = arith.constant 0 : index
    %c0_4 = arith.constant 0 : index
    %2 = vector.load %arg4[%c0_3, %c0_4] : memref<1024x128xbf16, #tpu.memory_space<vmem>>, vector<1024x128xbf16>
    %c0_5 = arith.constant 0 : index
    %c0_6 = arith.constant 0 : index
    %3 = vector.load %arg5[%c0_5, %c0_6] : memref<128x1024xbf16, #tpu.memory_space<vmem>>, vector<128x1024xbf16>
    %c0_7 = arith.constant 0 : index
    %c0_8 = arith.constant 0 : index
    %4 = vector.load %arg6[%c0_7, %c0_8] : memref<1x128xf32, #tpu.memory_space<vmem>>, vector<1x128xf32>
    %5 = vector.shape_cast %4 : vector<1x128xf32> to vector<1x128xf32>
    %6 = vector.broadcast %5 : vector<1x128xf32> to vector<8x128xf32>
    %c0_9 = arith.constant 0 : index
    %c0_10 = arith.constant 0 : index
    %7 = vector.load %arg3[%c0_9, %c0_10] : memref<8x1xi32, #tpu.memory_space<vmem>>, vector<8x1xi32>
    %8 = tpu.iota {dimensions = array<i32: 1>} : vector<8x128xi32>
    %9 = vector.broadcast %7 : vector<8x1xi32> to vector<8x128xi32>
    %10 = arith.cmpi eq, %8, %9 : vector<8x128xi32>
    %11 = arith.extui %10 : vector<8x128xi1> to vector<8x128xi32>
    %12 = arith.sitofp %11 : vector<8x128xi32> to vector<8x128xf32>
    %cst = arith.constant 3.100000e-02 : f32
    %13 = vector.broadcast %cst : f32 to vector<8x1024xf32>
    %14 = arith.subf %0, %13 : vector<8x1024xf32>
    %cst_11 = arith.constant 0.000000e+00 : f32
    %15 = vector.broadcast %cst_11 : f32 to vector<8x1024xf32>
    %16 = arith.maximumf %14, %15 : vector<8x1024xf32>
    %cst_12 = arith.constant 3.100000e-02 : f32
    %17 = vector.broadcast %cst_12 : f32 to vector<8x1024xf32>
    %18 = arith.addf %0, %17 : vector<8x1024xf32>
    %cst_13 = arith.constant 1.000000e+00 : f32
    %19 = vector.broadcast %cst_13 : f32 to vector<8x1024xf32>
    %20 = arith.minimumf %18, %19 : vector<8x1024xf32>
    %cst_14 = arith.constant 7.000000e-03 : f32
    %21 = arith.bitcast %cst_14 : f32 to i32
    %c-2147483648_i32 = arith.constant -2147483648 : i32
    %c0_i32 = arith.constant 0 : i32
    %22 = arith.truncf %1 : vector<8x1024xf32> to vector<8x1024xbf16>
    %cst_15 = arith.constant dense<0.000000e+00> : vector<8x128xf32>
    %23 = tpu.matmul %22, %2, %cst_15 {dimension_numbers = #tpu.dot_dimension_numbers<[1], [0], [0], [1], [0, 0, 1, 1], [], []>} : vector<8x1024xbf16>, vector<1024x128xbf16>, vector<8x128xf32> -> vector<8x128xf32>
    %24 = arith.addf %23, %6 : vector<8x128xf32>
    %cst_16 = arith.constant dense<0xFF800000> : vector<8xf32>
    %25 = vector.multi_reduction <maximumf>, %24, %cst_16 [1] : vector<8x128xf32> to vector<8xf32>
    %26 = vector.shape_cast %25 : vector<8xf32> to vector<8x1xf32>
    %27 = vector.broadcast %26 : vector<8x1xf32> to vector<8x128xf32>
    %28 = arith.subf %24, %27 : vector<8x128xf32>
    %29 = math.exp %28 : vector<8x128xf32>
    %cst_17 = arith.constant dense<0.000000e+00> : vector<8xf32>
    %30 = vector.multi_reduction <add>, %29, %cst_17 [1] : vector<8x128xf32> to vector<8xf32>
    %31 = vector.shape_cast %30 : vector<8xf32> to vector<8x1xf32>
    %cst_18 = arith.constant 1.000000e+00 : f32
    %32 = vector.broadcast %cst_18 : f32 to vector<8x1xf32>
    %33 = arith.divf %32, %31 : vector<8x1xf32>
    %34 = vector.broadcast %33 : vector<8x1xf32> to vector<8x128xf32>
    %35 = arith.mulf %29, %34 : vector<8x128xf32>
    %36 = arith.subf %35, %12 : vector<8x128xf32>
    %37 = arith.truncf %36 : vector<8x128xf32> to vector<8x128xbf16>
    %cst_19 = arith.constant dense<0.000000e+00> : vector<8x1024xf32>
    %38 = tpu.matmul %37, %3, %cst_19 {dimension_numbers = #tpu.dot_dimension_numbers<[1], [0], [0], [1], [0, 0, 1, 1], [], []>} : vector<8x128xbf16>, vector<128x1024xbf16>, vector<8x1024xf32> -> vector<8x1024xf32>
    %39 = tpu.bitcast %38 : vector<8x1024xf32> -> vector<8x1024xi32>
    %40 = vector.broadcast %c-2147483648_i32 : i32 to vector<8x1024xi32>
    %41 = arith.andi %39, %40 : vector<8x1024xi32>
    %42 = vector.broadcast %21 : i32 to vector<8x1024xi32>
    %43 = arith.ori %41, %42 : vector<8x1024xi32>
    %44 = tpu.bitcast %43 : vector<8x1024xi32> -> vector<8x1024xf32>
    %45 = arith.addf %1, %44 : vector<8x1024xf32>
    %46 = arith.maximumf %45, %16 : vector<8x1024xf32>
    %47 = arith.minimumf %46, %20 : vector<8x1024xf32>
    %c1_i32 = arith.constant 1 : i32
    %48 = arith.truncf %47 : vector<8x1024xf32> to vector<8x1024xbf16>
    %cst_20 = arith.constant dense<0.000000e+00> : vector<8x128xf32>
    %49 = tpu.matmul %48, %2, %cst_20 {dimension_numbers = #tpu.dot_dimension_numbers<[1], [0], [0], [1], [0, 0, 1, 1], [], []>} : vector<8x1024xbf16>, vector<1024x128xbf16>, vector<8x128xf32> -> vector<8x128xf32>
    %50 = arith.addf %49, %6 : vector<8x128xf32>
    %cst_21 = arith.constant dense<0xFF800000> : vector<8xf32>
    %51 = vector.multi_reduction <maximumf>, %50, %cst_21 [1] : vector<8x128xf32> to vector<8xf32>
    %52 = vector.shape_cast %51 : vector<8xf32> to vector<8x1xf32>
    %53 = vector.broadcast %52 : vector<8x1xf32> to vector<8x128xf32>
    %54 = arith.subf %50, %53 : vector<8x128xf32>
    %55 = math.exp %54 : vector<8x128xf32>
    %cst_22 = arith.constant dense<0.000000e+00> : vector<8xf32>
    %56 = vector.multi_reduction <add>, %55, %cst_22 [1] : vector<8x128xf32> to vector<8xf32>
    %57 = vector.shape_cast %56 : vector<8xf32> to vector<8x1xf32>
    %cst_23 = arith.constant 1.000000e+00 : f32
    %58 = vector.broadcast %cst_23 : f32 to vector<8x1xf32>
    %59 = arith.divf %58, %57 : vector<8x1xf32>
    %60 = vector.broadcast %59 : vector<8x1xf32> to vector<8x128xf32>
    %61 = arith.mulf %55, %60 : vector<8x128xf32>
    %62 = arith.subf %61, %12 : vector<8x128xf32>
    %63 = arith.truncf %62 : vector<8x128xf32> to vector<8x128xbf16>
    %cst_24 = arith.constant dense<0.000000e+00> : vector<8x1024xf32>
    %64 = tpu.matmul %63, %3, %cst_24 {dimension_numbers = #tpu.dot_dimension_numbers<[1], [0], [0], [1], [0, 0, 1, 1], [], []>} : vector<8x128xbf16>, vector<128x1024xbf16>, vector<8x1024xf32> -> vector<8x1024xf32>
    %65 = tpu.bitcast %64 : vector<8x1024xf32> -> vector<8x1024xi32>
    %66 = vector.broadcast %c-2147483648_i32 : i32 to vector<8x1024xi32>
    %67 = arith.andi %65, %66 : vector<8x1024xi32>
    %68 = vector.broadcast %21 : i32 to vector<8x1024xi32>
    %69 = arith.ori %67, %68 : vector<8x1024xi32>
    %70 = tpu.bitcast %69 : vector<8x1024xi32> -> vector<8x1024xf32>
    %71 = arith.addf %47, %70 : vector<8x1024xf32>
    %72 = arith.maximumf %71, %16 : vector<8x1024xf32>
    %73 = arith.minimumf %72, %20 : vector<8x1024xf32>
    %c2_i32 = arith.constant 2 : i32
    %74 = arith.truncf %73 : vector<8x1024xf32> to vector<8x1024xbf16>
    %cst_25 = arith.constant dense<0.000000e+00> : vector<8x128xf32>
    %75 = tpu.matmul %74, %2, %cst_25 {dimension_numbers = #tpu.dot_dimension_numbers<[1], [0], [0], [1], [0, 0, 1, 1], [], []>} : vector<8x1024xbf16>, vector<1024x128xbf16>, vector<8x128xf32> -> vector<8x128xf32>
    %76 = arith.addf %75, %6 : vector<8x128xf32>
    %cst_26 = arith.constant dense<0xFF800000> : vector<8xf32>
    %77 = vector.multi_reduction <maximumf>, %76, %cst_26 [1] : vector<8x128xf32> to vector<8xf32>
    %78 = vector.shape_cast %77 : vector<8xf32> to vector<8x1xf32>
    %79 = vector.broadcast %78 : vector<8x1xf32> to vector<8x128xf32>
    %80 = arith.subf %76, %79 : vector<8x128xf32>
    %81 = math.exp %80 : vector<8x128xf32>
    %cst_27 = arith.constant dense<0.000000e+00> : vector<8xf32>
    %82 = vector.multi_reduction <add>, %81, %cst_27 [1] : vector<8x128xf32> to vector<8xf32>
    %83 = vector.shape_cast %82 : vector<8xf32> to vector<8x1xf32>
    %cst_28 = arith.constant 1.000000e+00 : f32
    %84 = vector.broadcast %cst_28 : f32 to vector<8x1xf32>
    %85 = arith.divf %84, %83 : vector<8x1xf32>
    %86 = vector.broadcast %85 : vector<8x1xf32> to vector<8x128xf32>
    %87 = arith.mulf %81, %86 : vector<8x128xf32>
    %88 = arith.subf %87, %12 : vector<8x128xf32>
    %89 = arith.truncf %88 : vector<8x128xf32> to vector<8x128xbf16>
    %cst_29 = arith.constant dense<0.000000e+00> : vector<8x1024xf32>
    %90 = tpu.matmul %89, %3, %cst_29 {dimension_numbers = #tpu.dot_dimension_numbers<[1], [0], [0], [1], [0, 0, 1, 1], [], []>} : vector<8x128xbf16>, vector<128x1024xbf16>, vector<8x1024xf32> -> vector<8x1024xf32>
    %91 = tpu.bitcast %90 : vector<8x1024xf32> -> vector<8x1024xi32>
    %92 = vector.broadcast %c-2147483648_i32 : i32 to vector<8x1024xi32>
    %93 = arith.andi %91, %92 : vector<8x1024xi32>
    %94 = vector.broadcast %21 : i32 to vector<8x1024xi32>
    %95 = arith.ori %93, %94 : vector<8x1024xi32>
    %96 = tpu.bitcast %95 : vector<8x1024xi32> -> vector<8x1024xf32>
    %97 = arith.addf %73, %96 : vector<8x1024xf32>
    %98 = arith.maximumf %97, %16 : vector<8x1024xf32>
    %99 = arith.minimumf %98, %20 : vector<8x1024xf32>
    %c3_i32 = arith.constant 3 : i32
    %100 = arith.truncf %99 : vector<8x1024xf32> to vector<8x1024xbf16>
    %cst_30 = arith.constant dense<0.000000e+00> : vector<8x128xf32>
    %101 = tpu.matmul %100, %2, %cst_30 {dimension_numbers = #tpu.dot_dimension_numbers<[1], [0], [0], [1], [0, 0, 1, 1], [], []>} : vector<8x1024xbf16>, vector<1024x128xbf16>, vector<8x128xf32> -> vector<8x128xf32>
    %102 = arith.addf %101, %6 : vector<8x128xf32>
    %cst_31 = arith.constant dense<0xFF800000> : vector<8xf32>
    %103 = vector.multi_reduction <maximumf>, %102, %cst_31 [1] : vector<8x128xf32> to vector<8xf32>
    %104 = vector.shape_cast %103 : vector<8xf32> to vector<8x1xf32>
    %105 = vector.broadcast %104 : vector<8x1xf32> to vector<8x128xf32>
    %106 = arith.subf %102, %105 : vector<8x128xf32>
    %107 = math.exp %106 : vector<8x128xf32>
    %cst_32 = arith.constant dense<0.000000e+00> : vector<8xf32>
    %108 = vector.multi_reduction <add>, %107, %cst_32 [1] : vector<8x128xf32> to vector<8xf32>
    %109 = vector.shape_cast %108 : vector<8xf32> to vector<8x1xf32>
    %cst_33 = arith.constant 1.000000e+00 : f32
    %110 = vector.broadcast %cst_33 : f32 to vector<8x1xf32>
    %111 = arith.divf %110, %109 : vector<8x1xf32>
    %112 = vector.broadcast %111 : vector<8x1xf32> to vector<8x128xf32>
    %113 = arith.mulf %107, %112 : vector<8x128xf32>
    %114 = arith.subf %113, %12 : vector<8x128xf32>
    %115 = arith.truncf %114 : vector<8x128xf32> to vector<8x128xbf16>
    %cst_34 = arith.constant dense<0.000000e+00> : vector<8x1024xf32>
    %116 = tpu.matmul %115, %3, %cst_34 {dimension_numbers = #tpu.dot_dimension_numbers<[1], [0], [0], [1], [0, 0, 1, 1], [], []>} : vector<8x128xbf16>, vector<128x1024xbf16>, vector<8x1024xf32> -> vector<8x1024xf32>
    %117 = tpu.bitcast %116 : vector<8x1024xf32> -> vector<8x1024xi32>
    %118 = vector.broadcast %c-2147483648_i32 : i32 to vector<8x1024xi32>
    %119 = arith.andi %117, %118 : vector<8x1024xi32>
    %120 = vector.broadcast %21 : i32 to vector<8x1024xi32>
    %121 = arith.ori %119, %120 : vector<8x1024xi32>
    %122 = tpu.bitcast %121 : vector<8x1024xi32> -> vector<8x1024xf32>
    %123 = arith.addf %99, %122 : vector<8x1024xf32>
    %124 = arith.maximumf %123, %16 : vector<8x1024xf32>
    %125 = arith.minimumf %124, %20 : vector<8x1024xf32>
    %c4_i32 = arith.constant 4 : i32
    %126 = arith.truncf %125 : vector<8x1024xf32> to vector<8x1024xbf16>
    %cst_35 = arith.constant dense<0.000000e+00> : vector<8x128xf32>
    %127 = tpu.matmul %126, %2, %cst_35 {dimension_numbers = #tpu.dot_dimension_numbers<[1], [0], [0], [1], [0, 0, 1, 1], [], []>} : vector<8x1024xbf16>, vector<1024x128xbf16>, vector<8x128xf32> -> vector<8x128xf32>
    %128 = arith.addf %127, %6 : vector<8x128xf32>
    %cst_36 = arith.constant dense<0xFF800000> : vector<8xf32>
    %129 = vector.multi_reduction <maximumf>, %128, %cst_36 [1] : vector<8x128xf32> to vector<8xf32>
    %130 = vector.shape_cast %129 : vector<8xf32> to vector<8x1xf32>
    %131 = vector.broadcast %130 : vector<8x1xf32> to vector<8x128xf32>
    %132 = arith.subf %128, %131 : vector<8x128xf32>
    %133 = math.exp %132 : vector<8x128xf32>
    %cst_37 = arith.constant dense<0.000000e+00> : vector<8xf32>
    %134 = vector.multi_reduction <add>, %133, %cst_37 [1] : vector<8x128xf32> to vector<8xf32>
    %135 = vector.shape_cast %134 : vector<8xf32> to vector<8x1xf32>
    %cst_38 = arith.constant 1.000000e+00 : f32
    %136 = vector.broadcast %cst_38 : f32 to vector<8x1xf32>
    %137 = arith.divf %136, %135 : vector<8x1xf32>
    %138 = vector.broadcast %137 : vector<8x1xf32> to vector<8x128xf32>
    %139 = arith.mulf %133, %138 : vector<8x128xf32>
    %140 = arith.subf %139, %12 : vector<8x128xf32>
    %141 = arith.truncf %140 : vector<8x128xf32> to vector<8x128xbf16>
    %cst_39 = arith.constant dense<0.000000e+00> : vector<8x1024xf32>
    %142 = tpu.matmul %141, %3, %cst_39 {dimension_numbers = #tpu.dot_dimension_numbers<[1], [0], [0], [1], [0, 0, 1, 1], [], []>} : vector<8x128xbf16>, vector<128x1024xbf16>, vector<8x1024xf32> -> vector<8x1024xf32>
    %143 = tpu.bitcast %142 : vector<8x1024xf32> -> vector<8x1024xi32>
    %144 = vector.broadcast %c-2147483648_i32 : i32 to vector<8x1024xi32>
    %145 = arith.andi %143, %144 : vector<8x1024xi32>
    %146 = vector.broadcast %21 : i32 to vector<8x1024xi32>
    %147 = arith.ori %145, %146 : vector<8x1024xi32>
    %148 = tpu.bitcast %147 : vector<8x1024xi32> -> vector<8x1024xf32>
    %149 = arith.addf %125, %148 : vector<8x1024xf32>
    %150 = arith.maximumf %149, %16 : vector<8x1024xf32>
    %151 = arith.minimumf %150, %20 : vector<8x1024xf32>
    %c5_i32 = arith.constant 5 : i32
    %152 = arith.truncf %151 : vector<8x1024xf32> to vector<8x1024xbf16>
    %cst_40 = arith.constant dense<0.000000e+00> : vector<8x128xf32>
    %153 = tpu.matmul %152, %2, %cst_40 {dimension_numbers = #tpu.dot_dimension_numbers<[1], [0], [0], [1], [0, 0, 1, 1], [], []>} : vector<8x1024xbf16>, vector<1024x128xbf16>, vector<8x128xf32> -> vector<8x128xf32>
    %154 = arith.addf %153, %6 : vector<8x128xf32>
    %cst_41 = arith.constant dense<0xFF800000> : vector<8xf32>
    %155 = vector.multi_reduction <maximumf>, %154, %cst_41 [1] : vector<8x128xf32> to vector<8xf32>
    %156 = vector.shape_cast %155 : vector<8xf32> to vector<8x1xf32>
    %157 = vector.broadcast %156 : vector<8x1xf32> to vector<8x128xf32>
    %158 = arith.subf %154, %157 : vector<8x128xf32>
    %159 = math.exp %158 : vector<8x128xf32>
    %cst_42 = arith.constant dense<0.000000e+00> : vector<8xf32>
    %160 = vector.multi_reduction <add>, %159, %cst_42 [1] : vector<8x128xf32> to vector<8xf32>
    %161 = vector.shape_cast %160 : vector<8xf32> to vector<8x1xf32>
    %cst_43 = arith.constant 1.000000e+00 : f32
    %162 = vector.broadcast %cst_43 : f32 to vector<8x1xf32>
    %163 = arith.divf %162, %161 : vector<8x1xf32>
    %164 = vector.broadcast %163 : vector<8x1xf32> to vector<8x128xf32>
    %165 = arith.mulf %159, %164 : vector<8x128xf32>
    %166 = arith.subf %165, %12 : vector<8x128xf32>
    %167 = arith.truncf %166 : vector<8x128xf32> to vector<8x128xbf16>
    %cst_44 = arith.constant dense<0.000000e+00> : vector<8x1024xf32>
    %168 = tpu.matmul %167, %3, %cst_44 {dimension_numbers = #tpu.dot_dimension_numbers<[1], [0], [0], [1], [0, 0, 1, 1], [], []>} : vector<8x128xbf16>, vector<128x1024xbf16>, vector<8x1024xf32> -> vector<8x1024xf32>
    %169 = tpu.bitcast %168 : vector<8x1024xf32> -> vector<8x1024xi32>
    %170 = vector.broadcast %c-2147483648_i32 : i32 to vector<8x1024xi32>
    %171 = arith.andi %169, %170 : vector<8x1024xi32>
    %172 = vector.broadcast %21 : i32 to vector<8x1024xi32>
    %173 = arith.ori %171, %172 : vector<8x1024xi32>
    %174 = tpu.bitcast %173 : vector<8x1024xi32> -> vector<8x1024xf32>
    %175 = arith.addf %151, %174 : vector<8x1024xf32>
    %176 = arith.maximumf %175, %16 : vector<8x1024xf32>
    %177 = arith.minimumf %176, %20 : vector<8x1024xf32>
    %c6_i32 = arith.constant 6 : i32
    %178 = arith.truncf %177 : vector<8x1024xf32> to vector<8x1024xbf16>
    %cst_45 = arith.constant dense<0.000000e+00> : vector<8x128xf32>
    %179 = tpu.matmul %178, %2, %cst_45 {dimension_numbers = #tpu.dot_dimension_numbers<[1], [0], [0], [1], [0, 0, 1, 1], [], []>} : vector<8x1024xbf16>, vector<1024x128xbf16>, vector<8x128xf32> -> vector<8x128xf32>
    %180 = arith.addf %179, %6 : vector<8x128xf32>
    %cst_46 = arith.constant dense<0xFF800000> : vector<8xf32>
    %181 = vector.multi_reduction <maximumf>, %180, %cst_46 [1] : vector<8x128xf32> to vector<8xf32>
    %182 = vector.shape_cast %181 : vector<8xf32> to vector<8x1xf32>
    %183 = vector.broadcast %182 : vector<8x1xf32> to vector<8x128xf32>
    %184 = arith.subf %180, %183 : vector<8x128xf32>
    %185 = math.exp %184 : vector<8x128xf32>
    %cst_47 = arith.constant dense<0.000000e+00> : vector<8xf32>
    %186 = vector.multi_reduction <add>, %185, %cst_47 [1] : vector<8x128xf32> to vector<8xf32>
    %187 = vector.shape_cast %186 : vector<8xf32> to vector<8x1xf32>
    %cst_48 = arith.constant 1.000000e+00 : f32
    %188 = vector.broadcast %cst_48 : f32 to vector<8x1xf32>
    %189 = arith.divf %188, %187 : vector<8x1xf32>
    %190 = vector.broadcast %189 : vector<8x1xf32> to vector<8x128xf32>
    %191 = arith.mulf %185, %190 : vector<8x128xf32>
    %192 = arith.subf %191, %12 : vector<8x128xf32>
    %193 = arith.truncf %192 : vector<8x128xf32> to vector<8x128xbf16>
    %cst_49 = arith.constant dense<0.000000e+00> : vector<8x1024xf32>
    %194 = tpu.matmul %193, %3, %cst_49 {dimension_numbers = #tpu.dot_dimension_numbers<[1], [0], [0], [1], [0, 0, 1, 1], [], []>} : vector<8x128xbf16>, vector<128x1024xbf16>, vector<8x1024xf32> -> vector<8x1024xf32>
    %195 = tpu.bitcast %194 : vector<8x1024xf32> -> vector<8x1024xi32>
    %196 = vector.broadcast %c-2147483648_i32 : i32 to vector<8x1024xi32>
    %197 = arith.andi %195, %196 : vector<8x1024xi32>
    %198 = vector.broadcast %21 : i32 to vector<8x1024xi32>
    %199 = arith.ori %197, %198 : vector<8x1024xi32>
    %200 = tpu.bitcast %199 : vector<8x1024xi32> -> vector<8x1024xf32>
    %201 = arith.addf %177, %200 : vector<8x1024xf32>
    %202 = arith.maximumf %201, %16 : vector<8x1024xf32>
    %203 = arith.minimumf %202, %20 : vector<8x1024xf32>
    %c7_i32 = arith.constant 7 : i32
    %204 = arith.truncf %203 : vector<8x1024xf32> to vector<8x1024xbf16>
    %cst_50 = arith.constant dense<0.000000e+00> : vector<8x128xf32>
    %205 = tpu.matmul %204, %2, %cst_50 {dimension_numbers = #tpu.dot_dimension_numbers<[1], [0], [0], [1], [0, 0, 1, 1], [], []>} : vector<8x1024xbf16>, vector<1024x128xbf16>, vector<8x128xf32> -> vector<8x128xf32>
    %206 = arith.addf %205, %6 : vector<8x128xf32>
    %cst_51 = arith.constant dense<0xFF800000> : vector<8xf32>
    %207 = vector.multi_reduction <maximumf>, %206, %cst_51 [1] : vector<8x128xf32> to vector<8xf32>
    %208 = vector.shape_cast %207 : vector<8xf32> to vector<8x1xf32>
    %209 = vector.broadcast %208 : vector<8x1xf32> to vector<8x128xf32>
    %210 = arith.subf %206, %209 : vector<8x128xf32>
    %211 = math.exp %210 : vector<8x128xf32>
    %cst_52 = arith.constant dense<0.000000e+00> : vector<8xf32>
    %212 = vector.multi_reduction <add>, %211, %cst_52 [1] : vector<8x128xf32> to vector<8xf32>
    %213 = vector.shape_cast %212 : vector<8xf32> to vector<8x1xf32>
    %cst_53 = arith.constant 1.000000e+00 : f32
    %214 = vector.broadcast %cst_53 : f32 to vector<8x1xf32>
    %215 = arith.divf %214, %213 : vector<8x1xf32>
    %216 = vector.broadcast %215 : vector<8x1xf32> to vector<8x128xf32>
    %217 = arith.mulf %211, %216 : vector<8x128xf32>
    %218 = arith.subf %217, %12 : vector<8x128xf32>
    %219 = arith.truncf %218 : vector<8x128xf32> to vector<8x128xbf16>
    %cst_54 = arith.constant dense<0.000000e+00> : vector<8x1024xf32>
    %220 = tpu.matmul %219, %3, %cst_54 {dimension_numbers = #tpu.dot_dimension_numbers<[1], [0], [0], [1], [0, 0, 1, 1], [], []>} : vector<8x128xbf16>, vector<128x1024xbf16>, vector<8x1024xf32> -> vector<8x1024xf32>
    %221 = tpu.bitcast %220 : vector<8x1024xf32> -> vector<8x1024xi32>
    %222 = vector.broadcast %c-2147483648_i32 : i32 to vector<8x1024xi32>
    %223 = arith.andi %221, %222 : vector<8x1024xi32>
    %224 = vector.broadcast %21 : i32 to vector<8x1024xi32>
    %225 = arith.ori %223, %224 : vector<8x1024xi32>
    %226 = tpu.bitcast %225 : vector<8x1024xi32> -> vector<8x1024xf32>
    %227 = arith.addf %203, %226 : vector<8x1024xf32>
    %228 = arith.maximumf %227, %16 : vector<8x1024xf32>
    %229 = arith.minimumf %228, %20 : vector<8x1024xf32>
    %c8_i32 = arith.constant 8 : i32
    %230 = arith.truncf %229 : vector<8x1024xf32> to vector<8x1024xbf16>
    %cst_55 = arith.constant dense<0.000000e+00> : vector<8x128xf32>
    %231 = tpu.matmul %230, %2, %cst_55 {dimension_numbers = #tpu.dot_dimension_numbers<[1], [0], [0], [1], [0, 0, 1, 1], [], []>} : vector<8x1024xbf16>, vector<1024x128xbf16>, vector<8x128xf32> -> vector<8x128xf32>
    %232 = arith.addf %231, %6 : vector<8x128xf32>
    %cst_56 = arith.constant dense<0xFF800000> : vector<8xf32>
    %233 = vector.multi_reduction <maximumf>, %232, %cst_56 [1] : vector<8x128xf32> to vector<8xf32>
    %234 = vector.shape_cast %233 : vector<8xf32> to vector<8x1xf32>
    %235 = vector.broadcast %234 : vector<8x1xf32> to vector<8x128xf32>
    %236 = arith.subf %232, %235 : vector<8x128xf32>
    %237 = math.exp %236 : vector<8x128xf32>
    %cst_57 = arith.constant dense<0.000000e+00> : vector<8xf32>
    %238 = vector.multi_reduction <add>, %237, %cst_57 [1] : vector<8x128xf32> to vector<8xf32>
    %239 = vector.shape_cast %238 : vector<8xf32> to vector<8x1xf32>
    %cst_58 = arith.constant 1.000000e+00 : f32
    %240 = vector.broadcast %cst_58 : f32 to vector<8x1xf32>
    %241 = arith.divf %240, %239 : vector<8x1xf32>
    %242 = vector.broadcast %241 : vector<8x1xf32> to vector<8x128xf32>
    %243 = arith.mulf %237, %242 : vector<8x128xf32>
    %244 = arith.subf %243, %12 : vector<8x128xf32>
    %245 = arith.truncf %244 : vector<8x128xf32> to vector<8x128xbf16>
    %cst_59 = arith.constant dense<0.000000e+00> : vector<8x1024xf32>
    %246 = tpu.matmul %245, %3, %cst_59 {dimension_numbers = #tpu.dot_dimension_numbers<[1], [0], [0], [1], [0, 0, 1, 1], [], []>} : vector<8x128xbf16>, vector<128x1024xbf16>, vector<8x1024xf32> -> vector<8x1024xf32>
    %247 = tpu.bitcast %246 : vector<8x1024xf32> -> vector<8x1024xi32>
    %248 = vector.broadcast %c-2147483648_i32 : i32 to vector<8x1024xi32>
    %249 = arith.andi %247, %248 : vector<8x1024xi32>
    %250 = vector.broadcast %21 : i32 to vector<8x1024xi32>
    %251 = arith.ori %249, %250 : vector<8x1024xi32>
    %252 = tpu.bitcast %251 : vector<8x1024xi32> -> vector<8x1024xf32>
    %253 = arith.addf %229, %252 : vector<8x1024xf32>
    %254 = arith.maximumf %253, %16 : vector<8x1024xf32>
    %255 = arith.minimumf %254, %20 : vector<8x1024xf32>
    %c9_i32 = arith.constant 9 : i32
    %256 = arith.truncf %255 : vector<8x1024xf32> to vector<8x1024xbf16>
    %cst_60 = arith.constant dense<0.000000e+00> : vector<8x128xf32>
    %257 = tpu.matmul %256, %2, %cst_60 {dimension_numbers = #tpu.dot_dimension_numbers<[1], [0], [0], [1], [0, 0, 1, 1], [], []>} : vector<8x1024xbf16>, vector<1024x128xbf16>, vector<8x128xf32> -> vector<8x128xf32>
    %258 = arith.addf %257, %6 : vector<8x128xf32>
    %cst_61 = arith.constant dense<0xFF800000> : vector<8xf32>
    %259 = vector.multi_reduction <maximumf>, %258, %cst_61 [1] : vector<8x128xf32> to vector<8xf32>
    %260 = vector.shape_cast %259 : vector<8xf32> to vector<8x1xf32>
    %261 = vector.broadcast %260 : vector<8x1xf32> to vector<8x128xf32>
    %262 = arith.subf %258, %261 : vector<8x128xf32>
    %263 = math.exp %262 : vector<8x128xf32>
    %cst_62 = arith.constant dense<0.000000e+00> : vector<8xf32>
    %264 = vector.multi_reduction <add>, %263, %cst_62 [1] : vector<8x128xf32> to vector<8xf32>
    %265 = vector.shape_cast %264 : vector<8xf32> to vector<8x1xf32>
    %cst_63 = arith.constant 1.000000e+00 : f32
    %266 = vector.broadcast %cst_63 : f32 to vector<8x1xf32>
    %267 = arith.divf %266, %265 : vector<8x1xf32>
    %268 = vector.broadcast %267 : vector<8x1xf32> to vector<8x128xf32>
    %269 = arith.mulf %263, %268 : vector<8x128xf32>
    %270 = arith.subf %269, %12 : vector<8x128xf32>
    %271 = arith.truncf %270 : vector<8x128xf32> to vector<8x128xbf16>
    %cst_64 = arith.constant dense<0.000000e+00> : vector<8x1024xf32>
    %272 = tpu.matmul %271, %3, %cst_64 {dimension_numbers = #tpu.dot_dimension_numbers<[1], [0], [0], [1], [0, 0, 1, 1], [], []>} : vector<8x128xbf16>, vector<128x1024xbf16>, vector<8x1024xf32> -> vector<8x1024xf32>
    %273 = tpu.bitcast %272 : vector<8x1024xf32> -> vector<8x1024xi32>
    %274 = vector.broadcast %c-2147483648_i32 : i32 to vector<8x1024xi32>
    %275 = arith.andi %273, %274 : vector<8x1024xi32>
    %276 = vector.broadcast %21 : i32 to vector<8x1024xi32>
    %277 = arith.ori %275, %276 : vector<8x1024xi32>
    %278 = tpu.bitcast %277 : vector<8x1024xi32> -> vector<8x1024xf32>
    %279 = arith.addf %255, %278 : vector<8x1024xf32>
    %280 = arith.maximumf %279, %16 : vector<8x1024xf32>
    %281 = arith.minimumf %280, %20 : vector<8x1024xf32>
    %c0_65 = arith.constant 0 : index
    %c0_66 = arith.constant 0 : index
    %282 = vector.load %arg8[%c0_65, %c0_66] : memref<8x1024xf32, #tpu.memory_space<vmem>>, vector<8x1024xf32>
    tpu.vector_store %arg8[%c0_65, %c0_66], %281 {strides = array<i32>} : memref<8x1024xf32, #tpu.memory_space<vmem>>, vector<8x1024xf32>,
    %283 = arith.truncf %281 : vector<8x1024xf32> to vector<8x1024xbf16>
    %cst_67 = arith.constant dense<0.000000e+00> : vector<8x128xf32>
    %284 = tpu.matmul %283, %2, %cst_67 {dimension_numbers = #tpu.dot_dimension_numbers<[1], [0], [0], [1], [0, 0, 1, 1], [], []>} : vector<8x1024xbf16>, vector<1024x128xbf16>, vector<8x128xf32> -> vector<8x128xf32>
    %285 = arith.addf %284, %6 : vector<8x128xf32>
    %c0_68 = arith.constant 0 : index
    %c0_69 = arith.constant 0 : index
    %286 = vector.load %arg7[%c0_68, %c0_69] : memref<8x128xf32, #tpu.memory_space<vmem>>, vector<8x128xf32>
    tpu.vector_store %arg7[%c0_68, %c0_69], %285 {strides = array<i32>} : memref<8x128xf32, #tpu.memory_space<vmem>>, vector<8x128xf32>,
    return
  }
  func.func @transform_0(%arg0: i32) -> (i32, i32) {
    %c0_i32 = arith.constant 0 : i32
    %c0_i32_0 = arith.constant 0 : i32
    return %arg0, %c0_i32 : i32, i32
  }
  func.func @transform_1(%arg0: i32) -> (i32, i32) {
    %c0_i32 = arith.constant 0 : i32
    %c0_i32_0 = arith.constant 0 : i32
    return %arg0, %c0_i32 : i32, i32
  }
  func.func @transform_2(%arg0: i32) -> (i32, i32) {
    %c0_i32 = arith.constant 0 : i32
    %c0_i32_0 = arith.constant 0 : i32
    return %arg0, %c0_i32 : i32, i32
  }
  func.func @transform_3(%arg0: i32) -> (i32, i32) {
    %c0_i32 = arith.constant 0 : i32
    %c0_i32_0 = arith.constant 0 : i32
    %c0_i32_1 = arith.constant 0 : i32
    return %c0_i32, %c0_i32_0 : i32, i32
  }
  func.func @transform_4(%arg0: i32) -> (i32, i32) {
    %c0_i32 = arith.constant 0 : i32
    %c0_i32_0 = arith.constant 0 : i32
    %c0_i32_1 = arith.constant 0 : i32
    return %c0_i32, %c0_i32_0 : i32, i32
  }
  func.func @transform_5(%arg0: i32) -> (i32, i32) {
    %c0_i32 = arith.constant 0 : i32
    %c0_i32_0 = arith.constant 0 : i32
    %c0_i32_1 = arith.constant 0 : i32
    return %c0_i32, %c0_i32_0 : i32, i32
  }
  func.func @transform_6(%arg0: i32) -> (i32, i32) {
    %c0_i32 = arith.constant 0 : i32
    %c0_i32_0 = arith.constant 0 : i32
    return %arg0, %c0_i32 : i32, i32
  }
  func.func @transform_7(%arg0: i32) -> (i32, i32) {
    %c0_i32 = arith.constant 0 : i32
    %c0_i32_0 = arith.constant 0 : i32
    return %arg0, %c0_i32 : i32, i32
  }
}

</mosaic_0001>

<llo_original>
// kernel: tpu_custom_call.1
$region0: #{tpu_custom_call.1}
  #allocation0 [shape = 'u32[]', space=smem, size = 0x4, offset = 0x4, fixed_abs, tag = 'smem constant byte address 0x4 - core index']
  #allocation1 [shape = 'u32[144,128]{1,0:T(1,128)}', space=vmem, size = 0x12000, scoped, tag = 'internal scratch']
  %s0 = inlined_call_operand.hbm [shape: f32[8,1024], index: 0, kind: input, shape index: {}]
  %s1 = inlined_call_operand.hbm [shape: f32[8,1024], index: 1, kind: input, shape index: {}]
  %s2 = inlined_call_operand.vmem [shape: s32[8,1], index: 2, kind: input, shape index: {}]
  %s3 = inlined_call_operand.hbm [shape: bf16[1024,128], index: 3, kind: input, shape index: {}]
  %s4 = inlined_call_operand.hbm [shape: bf16[128,1024], index: 4, kind: input, shape index: {}]
  %s5 = inlined_call_operand.vmem [shape: f32[1,128], index: 5, kind: input, shape index: {}]
  %s6 = inlined_call_operand.hbm [shape: f32[8,128], index: 6, kind: output, shape index: {0}]
  %s7 = inlined_call_operand.hbm [shape: f32[8,1024], index: 7, kind: output, shape index: {1}]
  %8 = xla_tuple %s6, %s7
  %s9 = sld [smem:[#allocation0]]
  $region58: #{tpu_custom_call.1} parent=0
    _
  %s11 = ssub.s32 1, %s9
  %s12 = scalar_select 0, %s11, %s9
  $region1: #{tpu_custom_call.1} parent=0
    #allocation2 [shape = 'u8[32768]{0}', space=vmem, size = 0x8000, scoped, tag = 'input window, operand 0, single buffered']
    #allocation3 [shape = 's32[1]{0}', space=sflag, size = 0x4, scoped, tag = 'scoped memory for tpu_custom_call.1']
    #allocation4 [shape = 's32[1]{0}', space=sflag, size = 0x4, scoped, tag = 'scoped memory for tpu_custom_call.1']
    #allocation5 [shape = 'u8[32768]{0}', space=vmem, size = 0x8000, scoped, tag = 'input window, operand 1, single buffered']
    #allocation6 [shape = 's32[1]{0}', space=sflag, size = 0x4, scoped, tag = 'scoped memory for tpu_custom_call.1']
    #allocation7 [shape = 'u8[262144]{0}', space=vmem, size = 0x40000, scoped, tag = 'input window, operand 3, single buffered']
    #allocation8 [shape = 'u8[262144]{0}', space=vmem, size = 0x40000, scoped, tag = 'input window, operand 4, single buffered']
    #allocation9 [shape = 's32[1]{0}', space=sflag, size = 0x4, scoped, tag = 'scoped memory for tpu_custom_call.1']
    #allocation10 [shape = 'u8[4096]{0}', space=vmem, size = 0x1000, scoped, tag = 'output window, operand 0, single buffered']
    #allocation11 [shape = 'u8[32768]{0}', space=vmem, size = 0x8000, scoped, tag = 'output window, operand 1, single buffered']
    #allocation12 [shape = 's32[1]{0}', space=sflag, size = 0x4, scoped, tag = 'scoped memory for tpu_custom_call.1']
    %13 = vsyncpa [#allocation3], 0
    %14 = vsyncpa [#allocation6], 0
    %15 = vsyncpa [#allocation9], 0
    %16 = vsyncpa [#allocation4], 0
    %17 = vsyncpa [#allocation12], 0
    // Predicated region
    $region2: #{tpu_custom_call.1} parent=1 // pred_check
      _
    $region3: #{tpu_custom_call.1} parent=1 // pred_check_branch
      %19 = sbr.rel (0) target = $region5
    $region4: #{tpu_custom_call.1} parent=1 // pred_region
      %s21 = ssub.s32 1024, 1024
      %22 = vsyncadd [#allocation3], %s21
      %s24 = sshll.u32 [#allocation2], 4
      %s25 = int_to_ptr.vmem [resolvable:$true] %s24
      %27 = dma.hbm_to_vmem [thread:$0]  %s0, 1024, %s25, [#allocation3]
    $region5: #{tpu_custom_call.1} parent=1 // pred_fallthru
      _
    // Predicated region
    $region6: #{tpu_custom_call.1} parent=1 // pred_check
      _
    $region7: #{tpu_custom_call.1} parent=1 // pred_check_branch
      %29 = sbr.rel (0) target = $region9
    $region8: #{tpu_custom_call.1} parent=1 // pred_region
      %s31 = ssub.s32 1024, 1024
      %32 = vsyncadd [#allocation6], %s31
      %s34 = sshll.u32 [#allocation5], 4
      %s35 = int_to_ptr.vmem [resolvable:$true] %s34
      %37 = dma.hbm_to_vmem [thread:$0]  %s1, 1024, %s35, [#allocation6]
    $region9: #{tpu_custom_call.1} parent=1 // pred_fallthru
      _
    // Predicated region
    $region10: #{tpu_custom_call.1} parent=1 // pred_check
      _
    $region11: #{tpu_custom_call.1} parent=1 // pred_check_branch
      %39 = sbr.rel (0) target = $region13
    $region12: #{tpu_custom_call.1} parent=1 // pred_region
      _
    $region13: #{tpu_custom_call.1} parent=1 // pred_fallthru
      _
    // Predicated region
    $region14: #{tpu_custom_call.1} parent=1 // pred_check
      _
    $region15: #{tpu_custom_call.1} parent=1 // pred_check_branch
      %41 = sbr.rel (0) target = $region17
    $region16: #{tpu_custom_call.1} parent=1 // pred_region
      %s43 = ssub.s32 8192, 8192
      %44 = vsyncadd [#allocation6], %s43
      %s45 = sshll.u32 [#allocation7], 4
      %s46 = int_to_ptr.vmem [resolvable:$true] %s45
      %51 = dma.hbm_to_vmem [thread:$0]  %s3, 8192, %s46, [#allocation6], 64, 64, 4
    $region17: #{tpu_custom_call.1} parent=1 // pred_fallthru
      _
    // Predicated region
    $region18: #{tpu_custom_call.1} parent=1 // pred_check
      _
    $region19: #{tpu_custom_call.1} parent=1 // pred_check_branch
      %53 = sbr.rel (0) target = $region21
    $region20: #{tpu_custom_call.1} parent=1 // pred_region
      %s55 = ssub.s32 8192, 8192
      %56 = vsyncadd [#allocation9], %s55
      %s57 = sshll.u32 [#allocation8], 4
      %s58 = int_to_ptr.vmem [resolvable:$true] %s57
      %63 = dma.hbm_to_vmem [thread:$0]  %s4, 8192, %s58, [#allocation9], 512, 512, 32
    $region21: #{tpu_custom_call.1} parent=1 // pred_fallthru
      _
    // Predicated region
    $region22: #{tpu_custom_call.1} parent=1 // pred_check
      _
    $region23: #{tpu_custom_call.1} parent=1 // pred_check_branch
      %65 = sbr.rel (0) target = $region25
    $region24: #{tpu_custom_call.1} parent=1 // pred_region
      _
    $region25: #{tpu_custom_call.1} parent=1 // pred_fallthru
      _
    // Predicated region
    $region26: #{tpu_custom_call.1} parent=1 // pred_check
      _
    $region27: #{tpu_custom_call.1} parent=1 // pred_check_branch
      %67 = sbr.rel (0) target = $region29
    $region28: #{tpu_custom_call.1} parent=1 // pred_region
      %68 = dma.done [#allocation3], 1024
    $region29: #{tpu_custom_call.1} parent=1 // pred_fallthru
      _
    // Predicated region
    $region30: #{tpu_custom_call.1} parent=1 // pred_check
      _
    $region31: #{tpu_custom_call.1} parent=1 // pred_check_branch
      %70 = sbr.rel (0) target = $region33
    $region32: #{tpu_custom_call.1} parent=1 // pred_region
      %71 = dma.done [#allocation6], 1024
    $region33: #{tpu_custom_call.1} parent=1 // pred_fallthru
      _
    // Predicated region
    $region34: #{tpu_custom_call.1} parent=1 // pred_check
      _
    $region35: #{tpu_custom_call.1} parent=1 // pred_check_branch
      %73 = sbr.rel (0) target = $region37
    $region36: #{tpu_custom_call.1} parent=1 // pred_region
      %74 = dma.done [#allocation6], 8192
    $region37: #{tpu_custom_call.1} parent=1 // pred_fallthru
      _
    // Predicated region
    $region38: #{tpu_custom_call.1} parent=1 // pred_check
      _
    $region39: #{tpu_custom_call.1} parent=1 // pred_check_branch
      %76 = sbr.rel (0) target = $region41
    $region40: #{tpu_custom_call.1} parent=1 // pred_region
      %77 = dma.done [#allocation9], 8192
    $region41: #{tpu_custom_call.1} parent=1 // pred_fallthru
      _
    %v79 = vld [vmem:[#allocation5] sm:$0xff]
    %v80 = vld [vmem:[#allocation5 + $0x8] sm:$0xff]
    %v81 = vld [vmem:[#allocation5 + $0x10] sm:$0xff]
    %v82 = vld [vmem:[#allocation5 + $0x18] sm:$0xff]
    %v83 = vld [vmem:[#allocation5 + $0x20] sm:$0xff]
    %v84 = vld [vmem:[#allocation5 + $0x28] sm:$0xff]
    %v85 = vld [vmem:[#allocation5 + $0x30] sm:$0xff]
    %v86 = vld [vmem:[#allocation5 + $0x38] sm:$0xff]
    %v87 = vld [vmem:[#allocation2] sm:$0xff]
    %v88 = vld [vmem:[#allocation2 + $0x8] sm:$0xff]
    %v89 = vld [vmem:[#allocation2 + $0x10] sm:$0xff]
    %v90 = vld [vmem:[#allocation2 + $0x18] sm:$0xff]
    %v91 = vld [vmem:[#allocation2 + $0x20] sm:$0xff]
    %v92 = vld [vmem:[#allocation2 + $0x28] sm:$0xff]
    %v93 = vld [vmem:[#allocation2 + $0x30] sm:$0xff]
    %v94 = vld [vmem:[#allocation2 + $0x38] sm:$0xff]
    %v95 = vld [vmem:[#allocation7] sm:$0xf]
    %v96 = vld [vmem:[#allocation7 + $0x4] sm:$0xf]
    %v97 = vld [vmem:[#allocation7 + $0x8] sm:$0xf]
    %v98 = vld [vmem:[#allocation7 + $0xc] sm:$0xf]
    %v99 = vld [vmem:[#allocation7 + $0x10] sm:$0xf]
    %v100 = vld [vmem:[#allocation7 + $0x14] sm:$0xf]
    %v101 = vld [vmem:[#allocation7 + $0x18] sm:$0xf]
    %v102 = vld [vmem:[#allocation7 + $0x1c] sm:$0xf]
    %v103 = vld [vmem:[#allocation7 + $0x20] sm:$0xf]
    %v104 = vld [vmem:[#allocation7 + $0x24] sm:$0xf]
    %v105 = vld [vmem:[#allocation7 + $0x28] sm:$0xf]
    %v106 = vld [vmem:[#allocation7 + $0x2c] sm:$0xf]
    %v107 = vld [vmem:[#allocation7 + $0x30] sm:$0xf]
    %v108 = vld [vmem:[#allocation7 + $0x34] sm:$0xf]
    %v109 = vld [vmem:[#allocation7 + $0x38] sm:$0xf]
    %v110 = vld [vmem:[#allocation7 + $0x3c] sm:$0xf]
    %v111 = vld [vmem:[#allocation7 + $0x40] sm:$0xf]
    %v112 = vld [vmem:[#allocation7 + $0x44] sm:$0xf]
    %v113 = vld [vmem:[#allocation7 + $0x48] sm:$0xf]
    %v114 = vld [vmem:[#allocation7 + $0x4c] sm:$0xf]
    %v115 = vld [vmem:[#allocation7 + $0x50] sm:$0xf]
    %v116 = vld [vmem:[#allocation7 + $0x54] sm:$0xf]
    %v117 = vld [vmem:[#allocation7 + $0x58] sm:$0xf]
    %v118 = vld [vmem:[#allocation7 + $0x5c] sm:$0xf]
    %v119 = vld [vmem:[#allocation7 + $0x60] sm:$0xf]
    %v120 = vld [vmem:[#allocation7 + $0x64] sm:$0xf]
    %v121 = vld [vmem:[#allocation7 + $0x68] sm:$0xf]
    %v122 = vld [vmem:[#allocation7 + $0x6c] sm:$0xf]
    %v123 = vld [vmem:[#allocation7 + $0x70] sm:$0xf]
    %v124 = vld [vmem:[#allocation7 + $0x74] sm:$0xf]
    %v125 = vld [vmem:[#allocation7 + $0x78] sm:$0xf]
    %v126 = vld [vmem:[#allocation7 + $0x7c] sm:$0xf]
    %v127 = vld [vmem:[#allocation7 + $0x80] sm:$0xf]
    %v128 = vld [vmem:[#allocation7 + $0x84] sm:$0xf]
    %v129 = vld [vmem:[#allocation7 + $0x88] sm:$0xf]
    %v130 = vld [vmem:[#allocation7 + $0x8c] sm:$0xf]
    %v131 = vld [vmem:[#allocation7 + $0x90] sm:$0xf]
    %v132 = vld [vmem:[#allocation7 + $0x94] sm:$0xf]
    %v133 = vld [vmem:[#allocation7 + $0x98] sm:$0xf]
    %v134 = vld [vmem:[#allocation7 + $0x9c] sm:$0xf]
    %v135 = vld [vmem:[#allocation7 + $0xa0] sm:$0xf]
    %v136 = vld [vmem:[#allocation7 + $0xa4] sm:$0xf]
    %v137 = vld [vmem:[#allocation7 + $0xa8] sm:$0xf]
    %v138 = vld [vmem:[#allocation7 + $0xac] sm:$0xf]
    %v139 = vld [vmem:[#allocation7 + $0xb0] sm:$0xf]
    %v140 = vld [vmem:[#allocation7 + $0xb4] sm:$0xf]
    %v141 = vld [vmem:[#allocation7 + $0xb8] sm:$0xf]
    %v142 = vld [vmem:[#allocation7 + $0xbc] sm:$0xf]
    %v143 = vld [vmem:[#allocation7 + $0xc0] sm:$0xf]
    %v144 = vld [vmem:[#allocation7 + $0xc4] sm:$0xf]
    %v145 = vld [vmem:[#allocation7 + $0xc8] sm:$0xf]
    %v146 = vld [vmem:[#allocation7 + $0xcc] sm:$0xf]
    %v147 = vld [vmem:[#allocation7 + $0xd0] sm:$0xf]
    %v148 = vld [vmem:[#allocation7 + $0xd4] sm:$0xf]
    %v149 = vld [vmem:[#allocation7 + $0xd8] sm:$0xf]
    %v150 = vld [vmem:[#allocation7 + $0xdc] sm:$0xf]
    %v151 = vld [vmem:[#allocation7 + $0xe0] sm:$0xf]
    %v152 = vld [vmem:[#allocation7 + $0xe4] sm:$0xf]
    %v153 = vld [vmem:[#allocation7 + $0xe8] sm:$0xf]
    %v154 = vld [vmem:[#allocation7 + $0xec] sm:$0xf]
    %v155 = vld [vmem:[#allocation7 + $0xf0] sm:$0xf]
    %v156 = vld [vmem:[#allocation7 + $0xf4] sm:$0xf]
    %v157 = vld [vmem:[#allocation7 + $0xf8] sm:$0xf]
    %v158 = vld [vmem:[#allocation7 + $0xfc] sm:$0xf]
    %v159 = vld [vmem:[#allocation7 + $0x100] sm:$0xf]
    %v160 = vld [vmem:[#allocation7 + $0x104] sm:$0xf]
    %v161 = vld [vmem:[#allocation7 + $0x108] sm:$0xf]
    %v162 = vld [vmem:[#allocation7 + $0x10c] sm:$0xf]
    %v163 = vld [vmem:[#allocation7 + $0x110] sm:$0xf]
    %v164 = vld [vmem:[#allocation7 + $0x114] sm:$0xf]
    %v165 = vld [vmem:[#allocation7 + $0x118] sm:$0xf]
    %v166 = vld [vmem:[#allocation7 + $0x11c] sm:$0xf]
    %v167 = vld [vmem:[#allocation7 + $0x120] sm:$0xf]
    %v168 = vld [vmem:[#allocation7 + $0x124] sm:$0xf]
    %v169 = vld [vmem:[#allocation7 + $0x128] sm:$0xf]
    %v170 = vld [vmem:[#allocation7 + $0x12c] sm:$0xf]
    %v171 = vld [vmem:[#allocation7 + $0x130] sm:$0xf]
    %v172 = vld [vmem:[#allocation7 + $0x134] sm:$0xf]
    %v173 = vld [vmem:[#allocation7 + $0x138] sm:$0xf]
    %v174 = vld [vmem:[#allocation7 + $0x13c] sm:$0xf]
    %v175 = vld [vmem:[#allocation7 + $0x140] sm:$0xf]
    %v176 = vld [vmem:[#allocation7 + $0x144] sm:$0xf]
    %v177 = vld [vmem:[#allocation7 + $0x148] sm:$0xf]
    %v178 = vld [vmem:[#allocation7 + $0x14c] sm:$0xf]
    %v179 = vld [vmem:[#allocation7 + $0x150] sm:$0xf]
    %v180 = vld [vmem:[#allocation7 + $0x154] sm:$0xf]
    %v181 = vld [vmem:[#allocation7 + $0x158] sm:$0xf]
    %v182 = vld [vmem:[#allocation7 + $0x15c] sm:$0xf]
    %v183 = vld [vmem:[#allocation7 + $0x160] sm:$0xf]
    %v184 = vld [vmem:[#allocation7 + $0x164] sm:$0xf]
    %v185 = vld [vmem:[#allocation7 + $0x168] sm:$0xf]
    %v186 = vld [vmem:[#allocation7 + $0x16c] sm:$0xf]
    %v187 = vld [vmem:[#allocation7 + $0x170] sm:$0xf]
    %v188 = vld [vmem:[#allocation7 + $0x174] sm:$0xf]
    %v189 = vld [vmem:[#allocation7 + $0x178] sm:$0xf]
    %v190 = vld [vmem:[#allocation7 + $0x17c] sm:$0xf]
    %v191 = vld [vmem:[#allocation7 + $0x180] sm:$0xf]
    %v192 = vld [vmem:[#allocation7 + $0x184] sm:$0xf]
    %v193 = vld [vmem:[#allocation7 + $0x188] sm:$0xf]
    %v194 = vld [vmem:[#allocation7 + $0x18c] sm:$0xf]
    %v195 = vld [vmem:[#allocation7 + $0x190] sm:$0xf]
    %v196 = vld [vmem:[#allocation7 + $0x194] sm:$0xf]
    %v197 = vld [vmem:[#allocation7 + $0x198] sm:$0xf]
    %v198 = vld [vmem:[#allocation7 + $0x19c] sm:$0xf]
    %v199 = vld [vmem:[#allocation7 + $0x1a0] sm:$0xf]
    %v200 = vld [vmem:[#allocation7 + $0x1a4] sm:$0xf]
    %v201 = vld [vmem:[#allocation7 + $0x1a8] sm:$0xf]
    %v202 = vld [vmem:[#allocation7 + $0x1ac] sm:$0xf]
    %v203 = vld [vmem:[#allocation7 + $0x1b0] sm:$0xf]
    %v204 = vld [vmem:[#allocation7 + $0x1b4] sm:$0xf]
    %v205 = vld [vmem:[#allocation7 + $0x1b8] sm:$0xf]
    %v206 = vld [vmem:[#allocation7 + $0x1bc] sm:$0xf]
    %v207 = vld [vmem:[#allocation7 + $0x1c0] sm:$0xf]
    %v208 = vld [vmem:[#allocation7 + $0x1c4] sm:$0xf]
    %v209 = vld [vmem:[#allocation7 + $0x1c8] sm:$0xf]
    %v210 = vld [vmem:[#allocation7 + $0x1cc] sm:$0xf]
    %v211 = vld [vmem:[#allocation7 + $0x1d0] sm:$0xf]
    %v212 = vld [vmem:[#allocation7 + $0x1d4] sm:$0xf]
    %v213 = vld [vmem:[#allocation7 + $0x1d8] sm:$0xf]
    %v214 = vld [vmem:[#allocation7 + $0x1dc] sm:$0xf]
    %v215 = vld [vmem:[#allocation7 + $0x1e0] sm:$0xf]
    %v216 = vld [vmem:[#allocation7 + $0x1e4] sm:$0xf]
    %v217 = vld [vmem:[#allocation7 + $0x1e8] sm:$0xf]
    %v218 = vld [vmem:[#allocation7 + $0x1ec] sm:$0xf]
    %v219 = vld [vmem:[#allocation7 + $0x1f0] sm:$0xf]
    %v220 = vld [vmem:[#allocation7 + $0x1f4] sm:$0xf]
    %v221 = vld [vmem:[#allocation7 + $0x1f8] sm:$0xf]
    %v222 = vld [vmem:[#allocation7 + $0x1fc] sm:$0xf]
    %v223 = vld [vmem:[#allocation8] sm:$0xff]
    %v224 = vld [vmem:[#allocation8 + $0x8] sm:$0xff]
    %v225 = vld [vmem:[#allocation8 + $0x10] sm:$0xff]
    %v226 = vld [vmem:[#allocation8 + $0x18] sm:$0xff]
    %v227 = vld [vmem:[#allocation8 + $0x20] sm:$0xff]
    %v228 = vld [vmem:[#allocation8 + $0x28] sm:$0xff]
    %v229 = vld [vmem:[#allocation8 + $0x30] sm:$0xff]
    %v230 = vld [vmem:[#allocation8 + $0x38] sm:$0xff]
    %v231 = vld [vmem:[#allocation8 + $0x40] sm:$0xff]
    %v232 = vld [vmem:[#allocation8 + $0x48] sm:$0xff]
    %v233 = vld [vmem:[#allocation8 + $0x50] sm:$0xff]
    %v234 = vld [vmem:[#allocation8 + $0x58] sm:$0xff]
    %v235 = vld [vmem:[#allocation8 + $0x60] sm:$0xff]
    %v236 = vld [vmem:[#allocation8 + $0x68] sm:$0xff]
    %v237 = vld [vmem:[#allocation8 + $0x70] sm:$0xff]
    %v238 = vld [vmem:[#allocation8 + $0x78] sm:$0xff]
    %v239 = vld [vmem:[#allocation8 + $0x80] sm:$0xff]
    %v240 = vld [vmem:[#allocation8 + $0x88] sm:$0xff]
    %v241 = vld [vmem:[#allocation8 + $0x90] sm:$0xff]
    %v242 = vld [vmem:[#allocation8 + $0x98] sm:$0xff]
    %v243 = vld [vmem:[#allocation8 + $0xa0] sm:$0xff]
    %v244 = vld [vmem:[#allocation8 + $0xa8] sm:$0xff]
    %v245 = vld [vmem:[#allocation8 + $0xb0] sm:$0xff]
    %v246 = vld [vmem:[#allocation8 + $0xb8] sm:$0xff]
    %v247 = vld [vmem:[#allocation8 + $0xc0] sm:$0xff]
    %v248 = vld [vmem:[#allocation8 + $0xc8] sm:$0xff]
    %v249 = vld [vmem:[#allocation8 + $0xd0] sm:$0xff]
    %v250 = vld [vmem:[#allocation8 + $0xd8] sm:$0xff]
    %v251 = vld [vmem:[#allocation8 + $0xe0] sm:$0xff]
    %v252 = vld [vmem:[#allocation8 + $0xe8] sm:$0xff]
    %v253 = vld [vmem:[#allocation8 + $0xf0] sm:$0xff]
    %v254 = vld [vmem:[#allocation8 + $0xf8] sm:$0xff]
    %v255 = vld [vmem:[#allocation8 + $0x100] sm:$0xff]
    %v256 = vld [vmem:[#allocation8 + $0x108] sm:$0xff]
    %v257 = vld [vmem:[#allocation8 + $0x110] sm:$0xff]
    %v258 = vld [vmem:[#allocation8 + $0x118] sm:$0xff]
    %v259 = vld [vmem:[#allocation8 + $0x120] sm:$0xff]
    %v260 = vld [vmem:[#allocation8 + $0x128] sm:$0xff]
    %v261 = vld [vmem:[#allocation8 + $0x130] sm:$0xff]
    %v262 = vld [vmem:[#allocation8 + $0x138] sm:$0xff]
    %v263 = vld [vmem:[#allocation8 + $0x140] sm:$0xff]
    %v264 = vld [vmem:[#allocation8 + $0x148] sm:$0xff]
    %v265 = vld [vmem:[#allocation8 + $0x150] sm:$0xff]
    %v266 = vld [vmem:[#allocation8 + $0x158] sm:$0xff]
    %v267 = vld [vmem:[#allocation8 + $0x160] sm:$0xff]
    %v268 = vld [vmem:[#allocation8 + $0x168] sm:$0xff]
    %v269 = vld [vmem:[#allocation8 + $0x170] sm:$0xff]
    %v270 = vld [vmem:[#allocation8 + $0x178] sm:$0xff]
    %v271 = vld [vmem:[#allocation8 + $0x180] sm:$0xff]
    %v272 = vld [vmem:[#allocation8 + $0x188] sm:$0xff]
    %v273 = vld [vmem:[#allocation8 + $0x190] sm:$0xff]
    %v274 = vld [vmem:[#allocation8 + $0x198] sm:$0xff]
    %v275 = vld [vmem:[#allocation8 + $0x1a0] sm:$0xff]
    %v276 = vld [vmem:[#allocation8 + $0x1a8] sm:$0xff]
    %v277 = vld [vmem:[#allocation8 + $0x1b0] sm:$0xff]
    %v278 = vld [vmem:[#allocation8 + $0x1b8] sm:$0xff]
    %v279 = vld [vmem:[#allocation8 + $0x1c0] sm:$0xff]
    %v280 = vld [vmem:[#allocation8 + $0x1c8] sm:$0xff]
    %v281 = vld [vmem:[#allocation8 + $0x1d0] sm:$0xff]
    %v282 = vld [vmem:[#allocation8 + $0x1d8] sm:$0xff]
    %v283 = vld [vmem:[#allocation8 + $0x1e0] sm:$0xff]
    %v284 = vld [vmem:[#allocation8 + $0x1e8] sm:$0xff]
    %v285 = vld [vmem:[#allocation8 + $0x1f0] sm:$0xff]
    %v286 = vld [vmem:[#allocation8 + $0x1f8] sm:$0xff]
    %v287 = vld [vmem:[%s5] sm:$0x1]
    %v289 = vlaneseq
    %v290 = vshrl.u32 %v289, 7
    %v291 = vsub.s32 0, %v290
    %v292 = vrot.slane %v287, %v291
    %v294 = vld [vmem:[%s2] sm:$0xff]
    %v295 = vlaneseq
    %v296 = vand.u32 %v295, 127
    %297 = vset.pattern.permute.xlu0 0
    %298 = vperm.xlu0 %297, %v294
    %v299 = vpop.permute.xlu0 %298
    %vm300 = vcmp.eq.s32.totalorder %v296, %v299
    %v301 = vsel %vm300, 1, 0
    %v302 = vcvt.s32.f32 %v301
    %v303 = vsub.f32 %v79, 0.031
    %v304 = vsub.f32 %v80, 0.031
    %v305 = vsub.f32 %v81, 0.031
    %v306 = vsub.f32 %v82, 0.031
    %v307 = vsub.f32 %v83, 0.031
    %v308 = vsub.f32 %v84, 0.031
    %v309 = vsub.f32 %v85, 0.031
    %v310 = vsub.f32 %v86, 0.031
    %v311 = vmax.f32 %v303, 0.0
    %v312 = vmax.f32 %v304, 0.0
    %v313 = vmax.f32 %v305, 0.0
    %v314 = vmax.f32 %v306, 0.0
    %v315 = vmax.f32 %v307, 0.0
    %v316 = vmax.f32 %v308, 0.0
    %v317 = vmax.f32 %v309, 0.0
    %v318 = vmax.f32 %v310, 0.0
    %v319 = vadd.f32 %v79, 0.031
    %v320 = vadd.f32 %v80, 0.031
    %v321 = vadd.f32 %v81, 0.031
    %v322 = vadd.f32 %v82, 0.031
    %v323 = vadd.f32 %v83, 0.031
    %v324 = vadd.f32 %v84, 0.031
    %v325 = vadd.f32 %v85, 0.031
    %v326 = vadd.f32 %v86, 0.031
    %v327 = vmin.f32 %v319, 1.0
    %v328 = vmin.f32 %v320, 1.0
    %v329 = vmin.f32 %v321, 1.0
    %v330 = vmin.f32 %v322, 1.0
    %v331 = vmin.f32 %v323, 1.0
    %v332 = vmin.f32 %v324, 1.0
    %v333 = vmin.f32 %v325, 1.0
    %v334 = vmin.f32 %v326, 1.0
    %v335 = vpack.c.bf16 %v87, %v87
    %v336 = vpack.c.bf16 %v88, %v88
    %v337 = vpack.c.bf16 %v89, %v89
    %v338 = vpack.c.bf16 %v90, %v90
    %v339 = vpack.c.bf16 %v91, %v91
    %v340 = vpack.c.bf16 %v92, %v92
    %v341 = vpack.c.bf16 %v93, %v93
    %v342 = vpack.c.bf16 %v94, %v94
    %v471 = vunpack.c.l.b16 %v95
    %v472 = vunpack.c.l.b16 %v96
    %v473 = vunpack.c.l.b16 %v97
    %v474 = vunpack.c.l.b16 %v98
    %v475 = vunpack.c.l.b16 %v99
    %v476 = vunpack.c.l.b16 %v100
    %v477 = vunpack.c.l.b16 %v101
    %v478 = vunpack.c.l.b16 %v102
    %v479 = vunpack.c.l.b16 %v103
    %v480 = vunpack.c.l.b16 %v104
    %v481 = vunpack.c.l.b16 %v105
    %v482 = vunpack.c.l.b16 %v106
    %v483 = vunpack.c.l.b16 %v107
    %v484 = vunpack.c.l.b16 %v108
    %v485 = vunpack.c.l.b16 %v109
    %v486 = vunpack.c.l.b16 %v110
    %v487 = vunpack.c.l.b16 %v111
    %v488 = vunpack.c.l.b16 %v112
    %v489 = vunpack.c.l.b16 %v113
    %v490 = vunpack.c.l.b16 %v114
    %v491 = vunpack.c.l.b16 %v115
    %v492 = vunpack.c.l.b16 %v116
    %v493 = vunpack.c.l.b16 %v117
    %v494 = vunpack.c.l.b16 %v118
    %v495 = vunpack.c.l.b16 %v119
    %v496 = vunpack.c.l.b16 %v120
    %v497 = vunpack.c.l.b16 %v121
    %v498 = vunpack.c.l.b16 %v122
    %v499 = vunpack.c.l.b16 %v123
    %v500 = vunpack.c.l.b16 %v124
    %v501 = vunpack.c.l.b16 %v125
    %v502 = vunpack.c.l.b16 %v126
    %v503 = vunpack.c.l.b16 %v127
    %v504 = vunpack.c.l.b16 %v128
    %v505 = vunpack.c.l.b16 %v129
    %v506 = vunpack.c.l.b16 %v130
    %v507 = vunpack.c.l.b16 %v131
    %v508 = vunpack.c.l.b16 %v132
    %v509 = vunpack.c.l.b16 %v133
    %v510 = vunpack.c.l.b16 %v134
    %v511 = vunpack.c.l.b16 %v135
    %v512 = vunpack.c.l.b16 %v136
    %v513 = vunpack.c.l.b16 %v137
    %v514 = vunpack.c.l.b16 %v138
    %v515 = vunpack.c.l.b16 %v139
    %v516 = vunpack.c.l.b16 %v140
    %v517 = vunpack.c.l.b16 %v141
    %v518 = vunpack.c.l.b16 %v142
    %v519 = vunpack.c.l.b16 %v143
    %v520 = vunpack.c.l.b16 %v144
    %v521 = vunpack.c.l.b16 %v145
    %v522 = vunpack.c.l.b16 %v146
    %v523 = vunpack.c.l.b16 %v147
    %v524 = vunpack.c.l.b16 %v148
    %v525 = vunpack.c.l.b16 %v149
    %v526 = vunpack.c.l.b16 %v150
    %v527 = vunpack.c.l.b16 %v151
    %v528 = vunpack.c.l.b16 %v152
    %v529 = vunpack.c.l.b16 %v153
    %v530 = vunpack.c.l.b16 %v154
    %v531 = vunpack.c.l.b16 %v155
    %v532 = vunpack.c.l.b16 %v156
    %v533 = vunpack.c.l.b16 %v157
    %v534 = vunpack.c.l.b16 %v158
    %v535 = vunpack.c.l.b16 %v159
    %v536 = vunpack.c.l.b16 %v160
    %v537 = vunpack.c.l.b16 %v161
    %v538 = vunpack.c.l.b16 %v162
    %v539 = vunpack.c.l.b16 %v163
    %v540 = vunpack.c.l.b16 %v164
    %v541 = vunpack.c.l.b16 %v165
    %v542 = vunpack.c.l.b16 %v166
    %v543 = vunpack.c.l.b16 %v167
    %v544 = vunpack.c.l.b16 %v168
    %v545 = vunpack.c.l.b16 %v169
    %v546 = vunpack.c.l.b16 %v170
    %v547 = vunpack.c.l.b16 %v171
    %v548 = vunpack.c.l.b16 %v172
    %v549 = vunpack.c.l.b16 %v173
    %v550 = vunpack.c.l.b16 %v174
    %v551 = vunpack.c.l.b16 %v175
    %v552 = vunpack.c.l.b16 %v176
    %v553 = vunpack.c.l.b16 %v177
    %v554 = vunpack.c.l.b16 %v178
    %v555 = vunpack.c.l.b16 %v179
    %v556 = vunpack.c.l.b16 %v180
    %v557 = vunpack.c.l.b16 %v181
    %v558 = vunpack.c.l.b16 %v182
    %v559 = vunpack.c.l.b16 %v183
    %v560 = vunpack.c.l.b16 %v184
    %v561 = vunpack.c.l.b16 %v185
    %v562 = vunpack.c.l.b16 %v186
    %v563 = vunpack.c.l.b16 %v187
    %v564 = vunpack.c.l.b16 %v188
    %v565 = vunpack.c.l.b16 %v189
    %v566 = vunpack.c.l.b16 %v190
    %v567 = vunpack.c.l.b16 %v191
    %v568 = vunpack.c.l.b16 %v192
    %v569 = vunpack.c.l.b16 %v193
    %v570 = vunpack.c.l.b16 %v194
    %v571 = vunpack.c.l.b16 %v195
    %v572 = vunpack.c.l.b16 %v196
    %v573 = vunpack.c.l.b16 %v197
    %v574 = vunpack.c.l.b16 %v198
    %v575 = vunpack.c.l.b16 %v199
    %v576 = vunpack.c.l.b16 %v200
    %v577 = vunpack.c.l.b16 %v201
    %v578 = vunpack.c.l.b16 %v202
    %v579 = vunpack.c.l.b16 %v203
    %v580 = vunpack.c.l.b16 %v204
    %v581 = vunpack.c.l.b16 %v205
    %v582 = vunpack.c.l.b16 %v206
    %v583 = vunpack.c.l.b16 %v207
    %v584 = vunpack.c.l.b16 %v208
    %v585 = vunpack.c.l.b16 %v209
    %v586 = vunpack.c.l.b16 %v210
    %v587 = vunpack.c.l.b16 %v211
    %v588 = vunpack.c.l.b16 %v212
    %v589 = vunpack.c.l.b16 %v213
    %v590 = vunpack.c.l.b16 %v214
    %v591 = vunpack.c.l.b16 %v215
    %v592 = vunpack.c.l.b16 %v216
    %v593 = vunpack.c.l.b16 %v217
    %v594 = vunpack.c.l.b16 %v218
    %v595 = vunpack.c.l.b16 %v219
    %v596 = vunpack.c.l.b16 %v220
    %v597 = vunpack.c.l.b16 %v221
    %v598 = vunpack.c.l.b16 %v222
    %v599 = vpack.c.b16 %v472, %v471
    %v600 = vpack.c.b16 %v474, %v473
    %v601 = vpack.c.b16 %v476, %v475
    %v602 = vpack.c.b16 %v478, %v477
    %v603 = vpack.c.b16 %v480, %v479
    %v604 = vpack.c.b16 %v482, %v481
    %v605 = vpack.c.b16 %v484, %v483
    %v606 = vpack.c.b16 %v486, %v485
    %v607 = vpack.c.b16 %v488, %v487
    %v608 = vpack.c.b16 %v490, %v489
    %v609 = vpack.c.b16 %v492, %v491
    %v610 = vpack.c.b16 %v494, %v493
    %v611 = vpack.c.b16 %v496, %v495
    %v612 = vpack.c.b16 %v498, %v497
    %v613 = vpack.c.b16 %v500, %v499
    %v614 = vpack.c.b16 %v502, %v501
    %v615 = vpack.c.b16 %v504, %v503
    %v616 = vpack.c.b16 %v506, %v505
    %v617 = vpack.c.b16 %v508, %v507
    %v618 = vpack.c.b16 %v510, %v509
    %v619 = vpack.c.b16 %v512, %v511
    %v620 = vpack.c.b16 %v514, %v513
    %v621 = vpack.c.b16 %v516, %v515
    %v622 = vpack.c.b16 %v518, %v517
    %v623 = vpack.c.b16 %v520, %v519
    %v624 = vpack.c.b16 %v522, %v521
    %v625 = vpack.c.b16 %v524, %v523
    %v626 = vpack.c.b16 %v526, %v525
    %v627 = vpack.c.b16 %v528, %v527
    %v628 = vpack.c.b16 %v530, %v529
    %v629 = vpack.c.b16 %v532, %v531
    %v630 = vpack.c.b16 %v534, %v533
    %v631 = vpack.c.b16 %v536, %v535
    %v632 = vpack.c.b16 %v538, %v537
    %v633 = vpack.c.b16 %v540, %v539
    %v634 = vpack.c.b16 %v542, %v541
    %v635 = vpack.c.b16 %v544, %v543
    %v636 = vpack.c.b16 %v546, %v545
    %v637 = vpack.c.b16 %v548, %v547
    %v638 = vpack.c.b16 %v550, %v549
    %v639 = vpack.c.b16 %v552, %v551
    %v640 = vpack.c.b16 %v554, %v553
    %v641 = vpack.c.b16 %v556, %v555
    %v642 = vpack.c.b16 %v558, %v557
    %v643 = vpack.c.b16 %v560, %v559
    %v644 = vpack.c.b16 %v562, %v561
    %v645 = vpack.c.b16 %v564, %v563
    %v646 = vpack.c.b16 %v566, %v565
    %v647 = vpack.c.b16 %v568, %v567
    %v648 = vpack.c.b16 %v570, %v569
    %v649 = vpack.c.b16 %v572, %v571
    %v650 = vpack.c.b16 %v574, %v573
    %v651 = vpack.c.b16 %v576, %v575
    %v652 = vpack.c.b16 %v578, %v577
    %v653 = vpack.c.b16 %v580, %v579
    %v654 = vpack.c.b16 %v582, %v581
    %v655 = vpack.c.b16 %v584, %v583
    %v656 = vpack.c.b16 %v586, %v585
    %v657 = vpack.c.b16 %v588, %v587
    %v658 = vpack.c.b16 %v590, %v589
    %v659 = vpack.c.b16 %v592, %v591
    %v660 = vpack.c.b16 %v594, %v593
    %v661 = vpack.c.b16 %v596, %v595
    %v662 = vpack.c.b16 %v598, %v597
    %727 = vmatprep.subr.bf16.mxu0 0
    %728 = vmatpush1.bf16.msra.mxu0 %v599
    %729 = vmatprep.subr.bf16.mxu0 0
    %730 = vmatpush1.bf16.msra.mxu0 %v600
    %731 = vmatprep.subr.bf16.mxu0 0
    %732 = vmatpush1.bf16.msra.mxu0 %v601
    %733 = vmatprep.subr.bf16.mxu0 0
    %734 = vmatpush1.bf16.msra.mxu0 %v602
    %735 = vmatprep.subr.bf16.mxu0 0
    %736 = vmatpush1.bf16.msra.mxu0 %v603
    %737 = vmatprep.subr.bf16.mxu0 0
    %738 = vmatpush1.bf16.msra.mxu0 %v604
    %739 = vmatprep.subr.bf16.mxu0 0
    %740 = vmatpush1.bf16.msra.mxu0 %v605
    %741 = vmatprep.subr.bf16.mxu0 0
    %742 = vmatpush1.bf16.msra.mxu0 %v606
    %743 = vmatprep.subr.bf16.mxu0 0
    %744 = vmatpush1.bf16.msra.mxu0 %v607
    %745 = vmatprep.subr.bf16.mxu0 0
    %746 = vmatpush1.bf16.msra.mxu0 %v608
    %747 = vmatprep.subr.bf16.mxu0 0
    %748 = vmatpush1.bf16.msra.mxu0 %v609
    %749 = vmatprep.subr.bf16.mxu0 0
    %750 = vmatpush1.bf16.msra.mxu0 %v610
    %751 = vmatprep.subr.bf16.mxu0 0
    %752 = vmatpush1.bf16.msra.mxu0 %v611
    %753 = vmatprep.subr.bf16.mxu0 0
    %754 = vmatpush1.bf16.msra.mxu0 %v612
    %755 = vmatprep.subr.bf16.mxu0 0
    %756 = vmatpush1.bf16.msra.mxu0 %v613
    %757 = vmatprep.subr.bf16.mxu0 0
    %758 = vmatpush1.bf16.msra.mxu0 %v614
    %759 = vmatprep.mubr.bf16.mxu0 %v336
    %760 = vmatmul.mubr.bf16.gmra.mrb[0].mxu0 %v335
    %v761 = vpop.f32.mrb[0].mxu0
    %v762 = vadd.f32 %v292, %v761
    %v763 = vpop.f32.mrb[0].mxu0
    %v764 = vpop.f32.mrb[0].mxu0
    %v765 = vpop.f32.mrb[0].mxu0
    %766 = vdwg.mxu0
    %767 = vmatprep.subr.bf16.mxu0 0
    %768 = vmatpush1.bf16.msra.mxu0 %v615
    %769 = vmatprep.subr.bf16.mxu0 0
    %770 = vmatpush1.bf16.msra.mxu0 %v616
    %771 = vmatprep.subr.bf16.mxu0 0
    %772 = vmatpush1.bf16.msra.mxu0 %v617
    %773 = vmatprep.subr.bf16.mxu0 0
    %774 = vmatpush1.bf16.msra.mxu0 %v618
    %775 = vmatprep.subr.bf16.mxu0 0
    %776 = vmatpush1.bf16.msra.mxu0 %v619
    %777 = vmatprep.subr.bf16.mxu0 0
    %778 = vmatpush1.bf16.msra.mxu0 %v620
    %779 = vmatprep.subr.bf16.mxu0 0
    %780 = vmatpush1.bf16.msra.mxu0 %v621
    %781 = vmatprep.subr.bf16.mxu0 0
    %782 = vmatpush1.bf16.msra.mxu0 %v622
    %783 = vmatprep.subr.bf16.mxu0 0
    %784 = vmatpush1.bf16.msra.mxu0 %v623
    %785 = vmatprep.subr.bf16.mxu0 0
    %786 = vmatpush1.bf16.msra.mxu0 %v624
    %787 = vmatprep.subr.bf16.mxu0 0
    %788 = vmatpush1.bf16.msra.mxu0 %v625
    %789 = vmatprep.subr.bf16.mxu0 0
    %790 = vmatpush1.bf16.msra.mxu0 %v626
    %791 = vmatprep.subr.bf16.mxu0 0
    %792 = vmatpush1.bf16.msra.mxu0 %v627
    %793 = vmatprep.subr.bf16.mxu0 0
    %794 = vmatpush1.bf16.msra.mxu0 %v628
    %795 = vmatprep.subr.bf16.mxu0 0
    %796 = vmatpush1.bf16.msra.mxu0 %v629
    %797 = vmatprep.subr.bf16.mxu0 0
    %798 = vmatpush1.bf16.msra.mxu0 %v630
    %799 = vmatprep.mubr.bf16.mxu0 %v338
    %800 = vmatmul.mubr.bf16.gmra.mrb[0].mxu0 %v337
    %v801 = vpop.f32.mrb[0].mxu0
    %v802 = vadd.f32 %v762, %v801
    %v803 = vpop.f32.mrb[0].mxu0
    %v804 = vpop.f32.mrb[0].mxu0
    %v805 = vpop.f32.mrb[0].mxu0
    %806 = vdwg.mxu0
    %807 = vmatprep.subr.bf16.mxu0 0
    %808 = vmatpush1.bf16.msra.mxu0 %v631
    %809 = vmatprep.subr.bf16.mxu0 0
    %810 = vmatpush1.bf16.msra.mxu0 %v632
    %811 = vmatprep.subr.bf16.mxu0 0
    %812 = vmatpush1.bf16.msra.mxu0 %v633
    %813 = vmatprep.subr.bf16.mxu0 0
    %814 = vmatpush1.bf16.msra.mxu0 %v634
    %815 = vmatprep.subr.bf16.mxu0 0
    %816 = vmatpush1.bf16.msra.mxu0 %v635
    %817 = vmatprep.subr.bf16.mxu0 0
    %818 = vmatpush1.bf16.msra.mxu0 %v636
    %819 = vmatprep.subr.bf16.mxu0 0
    %820 = vmatpush1.bf16.msra.mxu0 %v637
    %821 = vmatprep.subr.bf16.mxu0 0
    %822 = vmatpush1.bf16.msra.mxu0 %v638
    %823 = vmatprep.subr.bf16.mxu0 0
    %824 = vmatpush1.bf16.msra.mxu0 %v639
    %825 = vmatprep.subr.bf16.mxu0 0
    %826 = vmatpush1.bf16.msra.mxu0 %v640
    %827 = vmatprep.subr.bf16.mxu0 0
    %828 = vmatpush1.bf16.msra.mxu0 %v641
    %829 = vmatprep.subr.bf16.mxu0 0
    %830 = vmatpush1.bf16.msra.mxu0 %v642
    %831 = vmatprep.subr.bf16.mxu0 0
    %832 = vmatpush1.bf16.msra.mxu0 %v643
    %833 = vmatprep.subr.bf16.mxu0 0
    %834 = vmatpush1.bf16.msra.mxu0 %v644
    %835 = vmatprep.subr.bf16.mxu0 0
    %836 = vmatpush1.bf16.msra.mxu0 %v645
    %837 = vmatprep.subr.bf16.mxu0 0
    %838 = vmatpush1.bf16.msra.mxu0 %v646
    %839 = vmatprep.mubr.bf16.mxu0 %v340
    %840 = vmatmul.mubr.bf16.gmra.mrb[0].mxu0 %v339
    %v841 = vpop.f32.mrb[0].mxu0
    %v842 = vadd.f32 %v802, %v841
    %v843 = vpop.f32.mrb[0].mxu0
    %v844 = vpop.f32.mrb[0].mxu0
    %v845 = vpop.f32.mrb[0].mxu0
    %846 = vdwg.mxu0
    %847 = vmatprep.subr.bf16.mxu0 0
    %848 = vmatpush1.bf16.msra.mxu0 %v647
    %849 = vmatprep.subr.bf16.mxu0 0
    %850 = vmatpush1.bf16.msra.mxu0 %v648
    %851 = vmatprep.subr.bf16.mxu0 0
    %852 = vmatpush1.bf16.msra.mxu0 %v649
    %853 = vmatprep.subr.bf16.mxu0 0
    %854 = vmatpush1.bf16.msra.mxu0 %v650
    %855 = vmatprep.subr.bf16.mxu0 0
    %856 = vmatpush1.bf16.msra.mxu0 %v651
    %857 = vmatprep.subr.bf16.mxu0 0
    %858 = vmatpush1.bf16.msra.mxu0 %v652
    %859 = vmatprep.subr.bf16.mxu0 0
    %860 = vmatpush1.bf16.msra.mxu0 %v653
    %861 = vmatprep.subr.bf16.mxu0 0
    %862 = vmatpush1.bf16.msra.mxu0 %v654
    %863 = vmatprep.subr.bf16.mxu0 0
    %864 = vmatpush1.bf16.msra.mxu0 %v655
    %865 = vmatprep.subr.bf16.mxu0 0
    %866 = vmatpush1.bf16.msra.mxu0 %v656
    %867 = vmatprep.subr.bf16.mxu0 0
    %868 = vmatpush1.bf16.msra.mxu0 %v657
    %869 = vmatprep.subr.bf16.mxu0 0
    %870 = vmatpush1.bf16.msra.mxu0 %v658
    %871 = vmatprep.subr.bf16.mxu0 0
    %872 = vmatpush1.bf16.msra.mxu0 %v659
    %873 = vmatprep.subr.bf16.mxu0 0
    %874 = vmatpush1.bf16.msra.mxu0 %v660
    %875 = vmatprep.subr.bf16.mxu0 0
    %876 = vmatpush1.bf16.msra.mxu0 %v661
    %877 = vmatprep.subr.bf16.mxu0 0
    %878 = vmatpush1.bf16.msra.mxu0 %v662
    %879 = vmatprep.mubr.bf16.mxu0 %v342
    %880 = vmatmul.mubr.bf16.gmra.mrb[0].mxu0 %v341
    %v881 = vpop.f32.mrb[0].mxu0
    %v882 = vadd.f32 %v842, %v881
    %v883 = vpop.f32.mrb[0].mxu0
    %v884 = vpop.f32.mrb[0].mxu0
    %v885 = vpop.f32.mrb[0].mxu0
    %886 = vdwg.mxu0
    %887 = vmax.xlane.f32.xlu0 %v882
    %v888 = vpop.xlane.xlu0 %887
    %v889 = vsub.f32 %v882, %v888
    %v890 = vmul.f32 %v889, 1.442695
    %v891 = vpow.pop %v890
    %892 = vadd.xlane.f32.xlu0 %v891
    %v893 = vpop.xlane.xlu0 %892
    %v894 = vrcp.pop %v893
    %v895 = vmul.f32 1.0, %v894
    %v896 = vmul.f32 %v891, %v895
    %v897 = vsub.f32 %v896, %v302
    %v898 = vpack.c.bf16 %v897, %v897
    %v963 = vunpack.c.l.b16 %v223
    %v964 = vunpack.c.h.b16 %v223
    %v965 = vunpack.c.l.b16 %v224
    %v966 = vunpack.c.h.b16 %v224
    %v967 = vunpack.c.l.b16 %v225
    %v968 = vunpack.c.h.b16 %v225
    %v969 = vunpack.c.l.b16 %v226
    %v970 = vunpack.c.h.b16 %v226
    %v971 = vunpack.c.l.b16 %v227
    %v972 = vunpack.c.h.b16 %v227
    %v973 = vunpack.c.l.b16 %v228
    %v974 = vunpack.c.h.b16 %v228
    %v975 = vunpack.c.l.b16 %v229
    %v976 = vunpack.c.h.b16 %v229
    %v977 = vunpack.c.l.b16 %v230
    %v978 = vunpack.c.h.b16 %v230
    %v979 = vunpack.c.l.b16 %v231
    %v980 = vunpack.c.h.b16 %v231
    %v981 = vunpack.c.l.b16 %v232
    %v982 = vunpack.c.h.b16 %v232
    %v983 = vunpack.c.l.b16 %v233
    %v984 = vunpack.c.h.b16 %v233
    %v985 = vunpack.c.l.b16 %v234
    %v986 = vunpack.c.h.b16 %v234
    %v987 = vunpack.c.l.b16 %v235
    %v988 = vunpack.c.h.b16 %v235
    %v989 = vunpack.c.l.b16 %v236
    %v990 = vunpack.c.h.b16 %v236
    %v991 = vunpack.c.l.b16 %v237
    %v992 = vunpack.c.h.b16 %v237
    %v993 = vunpack.c.l.b16 %v238
    %v994 = vunpack.c.h.b16 %v238
    %v995 = vunpack.c.l.b16 %v239
    %v996 = vunpack.c.h.b16 %v239
    %v997 = vunpack.c.l.b16 %v240
    %v998 = vunpack.c.h.b16 %v240
    %v999 = vunpack.c.l.b16 %v241
    %v1000 = vunpack.c.h.b16 %v241
    %v1001 = vunpack.c.l.b16 %v242
    %v1002 = vunpack.c.h.b16 %v242
    %v1003 = vunpack.c.l.b16 %v243
    %v1004 = vunpack.c.h.b16 %v243
    %v1005 = vunpack.c.l.b16 %v244
    %v1006 = vunpack.c.h.b16 %v244
    %v1007 = vunpack.c.l.b16 %v245
    %v1008 = vunpack.c.h.b16 %v245
    %v1009 = vunpack.c.l.b16 %v246
    %v1010 = vunpack.c.h.b16 %v246
    %v1011 = vunpack.c.l.b16 %v247
    %v1012 = vunpack.c.h.b16 %v247
    %v1013 = vunpack.c.l.b16 %v248
    %v1014 = vunpack.c.h.b16 %v248
    %v1015 = vunpack.c.l.b16 %v249
    %v1016 = vunpack.c.h.b16 %v249
    %v1017 = vunpack.c.l.b16 %v250
    %v1018 = vunpack.c.h.b16 %v250
    %v1019 = vunpack.c.l.b16 %v251
    %v1020 = vunpack.c.h.b16 %v251
    %v1021 = vunpack.c.l.b16 %v252
    %v1022 = vunpack.c.h.b16 %v252
    %v1023 = vunpack.c.l.b16 %v253
    %v1024 = vunpack.c.h.b16 %v253
    %v1025 = vunpack.c.l.b16 %v254
    %v1026 = vunpack.c.h.b16 %v254
    %v1027 = vunpack.c.l.b16 %v255
    %v1028 = vunpack.c.h.b16 %v255
    %v1029 = vunpack.c.l.b16 %v256
    %v1030 = vunpack.c.h.b16 %v256
    %v1031 = vunpack.c.l.b16 %v257
    %v1032 = vunpack.c.h.b16 %v257
    %v1033 = vunpack.c.l.b16 %v258
    %v1034 = vunpack.c.h.b16 %v258
    %v1035 = vunpack.c.l.b16 %v259
    %v1036 = vunpack.c.h.b16 %v259
    %v1037 = vunpack.c.l.b16 %v260
    %v1038 = vunpack.c.h.b16 %v260
    %v1039 = vunpack.c.l.b16 %v261
    %v1040 = vunpack.c.h.b16 %v261
    %v1041 = vunpack.c.l.b16 %v262
    %v1042 = vunpack.c.h.b16 %v262
    %v1043 = vunpack.c.l.b16 %v263
    %v1044 = vunpack.c.h.b16 %v263
    %v1045 = vunpack.c.l.b16 %v264
    %v1046 = vunpack.c.h.b16 %v264
    %v1047 = vunpack.c.l.b16 %v265
    %v1048 = vunpack.c.h.b16 %v265
    %v1049 = vunpack.c.l.b16 %v266
    %v1050 = vunpack.c.h.b16 %v266
    %v1051 = vunpack.c.l.b16 %v267
    %v1052 = vunpack.c.h.b16 %v267
    %v1053 = vunpack.c.l.b16 %v268
    %v1054 = vunpack.c.h.b16 %v268
    %v1055 = vunpack.c.l.b16 %v269
    %v1056 = vunpack.c.h.b16 %v269
    %v1057 = vunpack.c.l.b16 %v270
    %v1058 = vunpack.c.h.b16 %v270
    %v1059 = vunpack.c.l.b16 %v271
    %v1060 = vunpack.c.h.b16 %v271
    %v1061 = vunpack.c.l.b16 %v272
    %v1062 = vunpack.c.h.b16 %v272
    %v1063 = vunpack.c.l.b16 %v273
    %v1064 = vunpack.c.h.b16 %v273
    %v1065 = vunpack.c.l.b16 %v274
    %v1066 = vunpack.c.h.b16 %v274
    %v1067 = vunpack.c.l.b16 %v275
    %v1068 = vunpack.c.h.b16 %v275
    %v1069 = vunpack.c.l.b16 %v276
    %v1070 = vunpack.c.h.b16 %v276
    %v1071 = vunpack.c.l.b16 %v277
    %v1072 = vunpack.c.h.b16 %v277
    %v1073 = vunpack.c.l.b16 %v278
    %v1074 = vunpack.c.h.b16 %v278
    %v1075 = vunpack.c.l.b16 %v279
    %v1076 = vunpack.c.h.b16 %v279
    %v1077 = vunpack.c.l.b16 %v280
    %v1078 = vunpack.c.h.b16 %v280
    %v1079 = vunpack.c.l.b16 %v281
    %v1080 = vunpack.c.h.b16 %v281
    %v1081 = vunpack.c.l.b16 %v282
    %v1082 = vunpack.c.h.b16 %v282
    %v1083 = vunpack.c.l.b16 %v283
    %v1084 = vunpack.c.h.b16 %v283
    %v1085 = vunpack.c.l.b16 %v284
    %v1086 = vunpack.c.h.b16 %v284
    %v1087 = vunpack.c.l.b16 %v285
    %v1088 = vunpack.c.h.b16 %v285
    %v1089 = vunpack.c.l.b16 %v286
    %v1090 = vunpack.c.h.b16 %v286
    %v1091 = vpack.c.b16 %v971, %v963
    %v1092 = vpack.c.b16 %v972, %v964
    %v1093 = vpack.c.b16 %v973, %v965
    %v1094 = vpack.c.b16 %v974, %v966
    %v1095 = vpack.c.b16 %v975, %v967
    %v1096 = vpack.c.b16 %v976, %v968
    %v1097 = vpack.c.b16 %v977, %v969
    %v1098 = vpack.c.b16 %v978, %v970
    %v1099 = vpack.c.b16 %v987, %v979
    %v1100 = vpack.c.b16 %v988, %v980
    %v1101 = vpack.c.b16 %v989, %v981
    %v1102 = vpack.c.b16 %v990, %v982
    %v1103 = vpack.c.b16 %v991, %v983
    %v1104 = vpack.c.b16 %v992, %v984
    %v1105 = vpack.c.b16 %v993, %v985
    %v1106 = vpack.c.b16 %v994, %v986
    %v1107 = vpack.c.b16 %v1003, %v995
    %v1108 = vpack.c.b16 %v1004, %v996
    %v1109 = vpack.c.b16 %v1005, %v997
    %v1110 = vpack.c.b16 %v1006, %v998
    %v1111 = vpack.c.b16 %v1007, %v999
    %v1112 = vpack.c.b16 %v1008, %v1000
    %v1113 = vpack.c.b16 %v1009, %v1001
    %v1114 = vpack.c.b16 %v1010, %v1002
    %v1115 = vpack.c.b16 %v1019, %v1011
    %v1116 = vpack.c.b16 %v1020, %v1012
    %v1117 = vpack.c.b16 %v1021, %v1013
    %v1118 = vpack.c.b16 %v1022, %v1014
    %v1119 = vpack.c.b16 %v1023, %v1015
    %v1120 = vpack.c.b16 %v1024, %v1016
    %v1121 = vpack.c.b16 %v1025, %v1017
    %v1122 = vpack.c.b16 %v1026, %v1018
    %v1123 = vpack.c.b16 %v1035, %v1027
    %v1124 = vpack.c.b16 %v1036, %v1028
    %v1125 = vpack.c.b16 %v1037, %v1029
    %v1126 = vpack.c.b16 %v1038, %v1030
    %v1127 = vpack.c.b16 %v1039, %v1031
    %v1128 = vpack.c.b16 %v1040, %v1032
    %v1129 = vpack.c.b16 %v1041, %v1033
    %v1130 = vpack.c.b16 %v1042, %v1034
    %v1131 = vpack.c.b16 %v1051, %v1043
    %v1132 = vpack.c.b16 %v1052, %v1044
    %v1133 = vpack.c.b16 %v1053, %v1045
    %v1134 = vpack.c.b16 %v1054, %v1046
    %v1135 = vpack.c.b16 %v1055, %v1047
    %v1136 = vpack.c.b16 %v1056, %v1048
    %v1137 = vpack.c.b16 %v1057, %v1049
    %v1138 = vpack.c.b16 %v1058, %v1050
    %v1139 = vpack.c.b16 %v1067, %v1059
    %v1140 = vpack.c.b16 %v1068, %v1060
    %v1141 = vpack.c.b16 %v1069, %v1061
    %v1142 = vpack.c.b16 %v1070, %v1062
    %v1143 = vpack.c.b16 %v1071, %v1063
    %v1144 = vpack.c.b16 %v1072, %v1064
    %v1145 = vpack.c.b16 %v1073, %v1065
    %v1146 = vpack.c.b16 %v1074, %v1066
    %v1147 = vpack.c.b16 %v1083, %v1075
    %v1148 = vpack.c.b16 %v1084, %v1076
    %v1149 = vpack.c.b16 %v1085, %v1077
    %v1150 = vpack.c.b16 %v1086, %v1078
    %v1151 = vpack.c.b16 %v1087, %v1079
    %v1152 = vpack.c.b16 %v1088, %v1080
    %v1153 = vpack.c.b16 %v1089, %v1081
    %v1154 = vpack.c.b16 %v1090, %v1082
    %1219 = vmatprep.subr.bf16.mxu0 %v1092
    %1220 = vmatpush1.bf16.msra.mxu0 %v1091
    %1221 = vmatprep.subr.bf16.mxu0 %v1100
    %1222 = vmatpush1.bf16.msra.mxu0 %v1099
    %1223 = vmatprep.subr.bf16.mxu0 %v1108
    %1224 = vmatpush1.bf16.msra.mxu0 %v1107
    %1225 = vmatprep.subr.bf16.mxu0 %v1116
    %1226 = vmatpush1.bf16.msra.mxu0 %v1115
    %1227 = vmatprep.subr.bf16.mxu0 %v1124
    %1228 = vmatpush1.bf16.msra.mxu0 %v1123
    %1229 = vmatprep.subr.bf16.mxu0 %v1132
    %1230 = vmatpush1.bf16.msra.mxu0 %v1131
    %1231 = vmatprep.subr.bf16.mxu0 %v1140
    %1232 = vmatpush1.bf16.msra.mxu0 %v1139
    %1233 = vmatprep.subr.bf16.mxu0 %v1148
    %1234 = vmatpush1.bf16.msra.mxu0 %v1147
    %1235 = vmatprep.subr.bf16.mxu0 0
    %1236 = vmatpush1.bf16.msra.mxu0 0
    %1237 = vmatprep.subr.bf16.mxu0 0
    %1238 = vmatpush1.bf16.msra.mxu0 0
    %1239 = vmatprep.subr.bf16.mxu0 0
    %1240 = vmatpush1.bf16.msra.mxu0 0
    %1241 = vmatprep.subr.bf16.mxu0 0
    %1242 = vmatpush1.bf16.msra.mxu0 0
    %1243 = vmatprep.subr.bf16.mxu0 0
    %1244 = vmatpush1.bf16.msra.mxu0 0
    %1245 = vmatprep.subr.bf16.mxu0 0
    %1246 = vmatpush1.bf16.msra.mxu0 0
    %1247 = vmatprep.subr.bf16.mxu0 0
    %1248 = vmatpush1.bf16.msra.mxu0 0
    %1249 = vmatprep.subr.bf16.mxu0 0
    %1250 = vmatpush1.bf16.msra.mxu0 0
    %1251 = vmatprep.mubr.bf16.mxu0 0
    %1252 = vmatmul.mubr.bf16.gmra.mrb[0].mxu0 %v898
    %v1253 = vpop.f32.mrb[0].mxu0
    %v1254 = vadd.f32 0.0, %v1253
    %v1255 = vpop.f32.mrb[0].mxu0
    %v1256 = vadd.f32 0.0, %v1255
    %v1257 = vpop.f32.mrb[0].mxu0
    %v1258 = vpop.f32.mrb[0].mxu0
    %1259 = vdwg.mxu0
    %1260 = vmatprep.subr.bf16.mxu0 %v1094
    %1261 = vmatpush1.bf16.msra.mxu0 %v1093
    %1262 = vmatprep.subr.bf16.mxu0 %v1102
    %1263 = vmatpush1.bf16.msra.mxu0 %v1101
    %1264 = vmatprep.subr.bf16.mxu0 %v1110
    %1265 = vmatpush1.bf16.msra.mxu0 %v1109
    %1266 = vmatprep.subr.bf16.mxu0 %v1118
    %1267 = vmatpush1.bf16.msra.mxu0 %v1117
    %1268 = vmatprep.subr.bf16.mxu0 %v1126
    %1269 = vmatpush1.bf16.msra.mxu0 %v1125
    %1270 = vmatprep.subr.bf16.mxu0 %v1134
    %1271 = vmatpush1.bf16.msra.mxu0 %v1133
    %1272 = vmatprep.subr.bf16.mxu0 %v1142
    %1273 = vmatpush1.bf16.msra.mxu0 %v1141
    %1274 = vmatprep.subr.bf16.mxu0 %v1150
    %1275 = vmatpush1.bf16.msra.mxu0 %v1149
    %1276 = vmatprep.subr.bf16.mxu0 0
    %1277 = vmatpush1.bf16.msra.mxu0 0
    %1278 = vmatprep.subr.bf16.mxu0 0
    %1279 = vmatpush1.bf16.msra.mxu0 0
    %1280 = vmatprep.subr.bf16.mxu0 0
    %1281 = vmatpush1.bf16.msra.mxu0 0
    %1282 = vmatprep.subr.bf16.mxu0 0
    %1283 = vmatpush1.bf16.msra.mxu0 0
    %1284 = vmatprep.subr.bf16.mxu0 0
    %1285 = vmatpush1.bf16.msra.mxu0 0
    %1286 = vmatprep.subr.bf16.mxu0 0
    %1287 = vmatpush1.bf16.msra.mxu0 0
    %1288 = vmatprep.subr.bf16.mxu0 0
    %1289 = vmatpush1.bf16.msra.mxu0 0
    %1290 = vmatprep.subr.bf16.mxu0 0
    %1291 = vmatpush1.bf16.msra.mxu0 0
    %1292 = vmatprep.mubr.bf16.mxu0 0
    %1293 = vmatmul.mubr.bf16.gmra.mrb[0].mxu0 %v898
    %v1294 = vpop.f32.mrb[0].mxu0
    %v1295 = vadd.f32 0.0, %v1294
    %v1296 = vpop.f32.mrb[0].mxu0
    %v1297 = vadd.f32 0.0, %v1296
    %v1298 = vpop.f32.mrb[0].mxu0
    %v1299 = vpop.f32.mrb[0].mxu0
    %1300 = vdwg.mxu0
    %1301 = vmatprep.subr.bf16.mxu0 %v1096
    %1302 = vmatpush1.bf16.msra.mxu0 %v1095
    %1303 = vmatprep.subr.bf16.mxu0 %v1104
    %1304 = vmatpush1.bf16.msra.mxu0 %v1103
    %1305 = vmatprep.subr.bf16.mxu0 %v1112
    %1306 = vmatpush1.bf16.msra.mxu0 %v1111
    %1307 = vmatprep.subr.bf16.mxu0 %v1120
    %1308 = vmatpush1.bf16.msra.mxu0 %v1119
    %1309 = vmatprep.subr.bf16.mxu0 %v1128
    %1310 = vmatpush1.bf16.msra.mxu0 %v1127
    %1311 = vmatprep.subr.bf16.mxu0 %v1136
    %1312 = vmatpush1.bf16.msra.mxu0 %v1135
    %1313 = vmatprep.subr.bf16.mxu0 %v1144
    %1314 = vmatpush1.bf16.msra.mxu0 %v1143
    %1315 = vmatprep.subr.bf16.mxu0 %v1152
    %1316 = vmatpush1.bf16.msra.mxu0 %v1151
    %1317 = vmatprep.subr.bf16.mxu0 0
    %1318 = vmatpush1.bf16.msra.mxu0 0
    %1319 = vmatprep.subr.bf16.mxu0 0
    %1320 = vmatpush1.bf16.msra.mxu0 0
    %1321 = vmatprep.subr.bf16.mxu0 0
    %1322 = vmatpush1.bf16.msra.mxu0 0
    %1323 = vmatprep.subr.bf16.mxu0 0
    %1324 = vmatpush1.bf16.msra.mxu0 0
    %1325 = vmatprep.subr.bf16.mxu0 0
    %1326 = vmatpush1.bf16.msra.mxu0 0
    %1327 = vmatprep.subr.bf16.mxu0 0
    %1328 = vmatpush1.bf16.msra.mxu0 0
    %1329 = vmatprep.subr.bf16.mxu0 0
    %1330 = vmatpush1.bf16.msra.mxu0 0
    %1331 = vmatprep.subr.bf16.mxu0 0
    %1332 = vmatpush1.bf16.msra.mxu0 0
    %1333 = vmatprep.mubr.bf16.mxu0 0
    %1334 = vmatmul.mubr.bf16.gmra.mrb[0].mxu0 %v898
    %v1335 = vpop.f32.mrb[0].mxu0
    %v1336 = vadd.f32 0.0, %v1335
    %v1337 = vpop.f32.mrb[0].mxu0
    %v1338 = vadd.f32 0.0, %v1337
    %v1339 = vpop.f32.mrb[0].mxu0
    %v1340 = vpop.f32.mrb[0].mxu0
    %1341 = vdwg.mxu0
    %1342 = vmatprep.subr.bf16.mxu0 %v1098
    %1343 = vmatpush1.bf16.msra.mxu0 %v1097
    %1344 = vmatprep.subr.bf16.mxu0 %v1106
    %1345 = vmatpush1.bf16.msra.mxu0 %v1105
    %1346 = vmatprep.subr.bf16.mxu0 %v1114
    %1347 = vmatpush1.bf16.msra.mxu0 %v1113
    %1348 = vmatprep.subr.bf16.mxu0 %v1122
    %1349 = vmatpush1.bf16.msra.mxu0 %v1121
    %1350 = vmatprep.subr.bf16.mxu0 %v1130
    %1351 = vmatpush1.bf16.msra.mxu0 %v1129
    %1352 = vmatprep.subr.bf16.mxu0 %v1138
    %1353 = vmatpush1.bf16.msra.mxu0 %v1137
    %1354 = vmatprep.subr.bf16.mxu0 %v1146
    %1355 = vmatpush1.bf16.msra.mxu0 %v1145
    %1356 = vmatprep.subr.bf16.mxu0 %v1154
    %1357 = vmatpush1.bf16.msra.mxu0 %v1153
    %1358 = vmatprep.subr.bf16.mxu0 0
    %1359 = vmatpush1.bf16.msra.mxu0 0
    %1360 = vmatprep.subr.bf16.mxu0 0
    %1361 = vmatpush1.bf16.msra.mxu0 0
    %1362 = vmatprep.subr.bf16.mxu0 0
    %1363 = vmatpush1.bf16.msra.mxu0 0
    %1364 = vmatprep.subr.bf16.mxu0 0
    %1365 = vmatpush1.bf16.msra.mxu0 0
    %1366 = vmatprep.subr.bf16.mxu0 0
    %1367 = vmatpush1.bf16.msra.mxu0 0
    %1368 = vmatprep.subr.bf16.mxu0 0
    %1369 = vmatpush1.bf16.msra.mxu0 0
    %1370 = vmatprep.subr.bf16.mxu0 0
    %1371 = vmatpush1.bf16.msra.mxu0 0
    %1372 = vmatprep.subr.bf16.mxu0 0
    %1373 = vmatpush1.bf16.msra.mxu0 0
    %1374 = vmatprep.mubr.bf16.mxu0 0
    %1375 = vmatmul.mubr.bf16.gmra.mrb[0].mxu0 %v898
    %v1376 = vpop.f32.mrb[0].mxu0
    %v1377 = vadd.f32 0.0, %v1376
    %v1378 = vpop.f32.mrb[0].mxu0
    %v1379 = vadd.f32 0.0, %v1378
    %v1380 = vpop.f32.mrb[0].mxu0
    %v1381 = vpop.f32.mrb[0].mxu0
    %1382 = vdwg.mxu0
    %v1391 = vand.u32 %v1254, 2147483648
    %v1392 = vand.u32 %v1256, 2147483648
    %v1393 = vand.u32 %v1295, 2147483648
    %v1394 = vand.u32 %v1297, 2147483648
    %v1395 = vand.u32 %v1336, 2147483648
    %v1396 = vand.u32 %v1338, 2147483648
    %v1397 = vand.u32 %v1377, 2147483648
    %v1398 = vand.u32 %v1379, 2147483648
    %v1399 = vor.u32 %v1391, 1004888130
    %v1400 = vor.u32 %v1392, 1004888130
    %v1401 = vor.u32 %v1393, 1004888130
    %v1402 = vor.u32 %v1394, 1004888130
    %v1403 = vor.u32 %v1395, 1004888130
    %v1404 = vor.u32 %v1396, 1004888130
    %v1405 = vor.u32 %v1397, 1004888130
    %v1406 = vor.u32 %v1398, 1004888130
    %v1415 = vadd.f32 %v87, %v1399
    %v1416 = vadd.f32 %v88, %v1400
    %v1417 = vadd.f32 %v89, %v1401
    %v1418 = vadd.f32 %v90, %v1402
    %v1419 = vadd.f32 %v91, %v1403
    %v1420 = vadd.f32 %v92, %v1404
    %v1421 = vadd.f32 %v93, %v1405
    %v1422 = vadd.f32 %v94, %v1406
    %v1423 = vmax.f32 %v1415, %v311
    %v1424 = vmax.f32 %v1416, %v312
    %v1425 = vmax.f32 %v1417, %v313
    %v1426 = vmax.f32 %v1418, %v314
    %v1427 = vmax.f32 %v1419, %v315
    %v1428 = vmax.f32 %v1420, %v316
    %v1429 = vmax.f32 %v1421, %v317
    %v1430 = vmax.f32 %v1422, %v318
    %v1431 = vmin.f32 %v1423, %v327
    %v1432 = vmin.f32 %v1424, %v328
    %v1433 = vmin.f32 %v1425, %v329
    %v1434 = vmin.f32 %v1426, %v330
    %v1435 = vmin.f32 %v1427, %v331
    %v1436 = vmin.f32 %v1428, %v332
    %v1437 = vmin.f32 %v1429, %v333
    %v1438 = vmin.f32 %v1430, %v334
    %v1439 = vpack.c.bf16 %v1431, %v1431
    %v1440 = vpack.c.bf16 %v1432, %v1432
    %v1441 = vpack.c.bf16 %v1433, %v1433
    %v1442 = vpack.c.bf16 %v1434, %v1434
    %v1443 = vpack.c.bf16 %v1435, %v1435
    %v1444 = vpack.c.bf16 %v1436, %v1436
    %v1445 = vpack.c.bf16 %v1437, %v1437
    %v1446 = vpack.c.bf16 %v1438, %v1438
    %1447 = vmatprep.subr.bf16.mxu0 0
    %1448 = vmatpush1.bf16.msra.mxu0 %v599
    %1449 = vmatprep.subr.bf16.mxu0 0
    %1450 = vmatpush1.bf16.msra.mxu0 %v600
    %1451 = vmatprep.subr.bf16.mxu0 0
    %1452 = vmatpush1.bf16.msra.mxu0 %v601
    %1453 = vmatprep.subr.bf16.mxu0 0
    %1454 = vmatpush1.bf16.msra.mxu0 %v602
    %1455 = vmatprep.subr.bf16.mxu0 0
    %1456 = vmatpush1.bf16.msra.mxu0 %v603
    %1457 = vmatprep.subr.bf16.mxu0 0
    %1458 = vmatpush1.bf16.msra.mxu0 %v604
    %1459 = vmatprep.subr.bf16.mxu0 0
    %1460 = vmatpush1.bf16.msra.mxu0 %v605
    %1461 = vmatprep.subr.bf16.mxu0 0
    %1462 = vmatpush1.bf16.msra.mxu0 %v606
    %1463 = vmatprep.subr.bf16.mxu0 0
    %1464 = vmatpush1.bf16.msra.mxu0 %v607
    %1465 = vmatprep.subr.bf16.mxu0 0
    %1466 = vmatpush1.bf16.msra.mxu0 %v608
    %1467 = vmatprep.subr.bf16.mxu0 0
    %1468 = vmatpush1.bf16.msra.mxu0 %v609
    %1469 = vmatprep.subr.bf16.mxu0 0
    %1470 = vmatpush1.bf16.msra.mxu0 %v610
    %1471 = vmatprep.subr.bf16.mxu0 0
    %1472 = vmatpush1.bf16.msra.mxu0 %v611
    %1473 = vmatprep.subr.bf16.mxu0 0
    %1474 = vmatpush1.bf16.msra.mxu0 %v612
    %1475 = vmatprep.subr.bf16.mxu0 0
    %1476 = vmatpush1.bf16.msra.mxu0 %v613
    %1477 = vmatprep.subr.bf16.mxu0 0
    %1478 = vmatpush1.bf16.msra.mxu0 %v614
    %1479 = vmatprep.mubr.bf16.mxu0 %v1440
    %1480 = vmatmul.mubr.bf16.gmra.mrb[0].mxu0 %v1439
    %v1481 = vpop.f32.mrb[0].mxu0
    %v1482 = vadd.f32 %v292, %v1481
    %v1483 = vpop.f32.mrb[0].mxu0
    %v1484 = vpop.f32.mrb[0].mxu0
    %v1485 = vpop.f32.mrb[0].mxu0
    %1486 = vdwg.mxu0
    %1487 = vmatprep.subr.bf16.mxu0 0
    %1488 = vmatpush1.bf16.msra.mxu0 %v615
    %1489 = vmatprep.subr.bf16.mxu0 0
    %1490 = vmatpush1.bf16.msra.mxu0 %v616
    %1491 = vmatprep.subr.bf16.mxu0 0
    %1492 = vmatpush1.bf16.msra.mxu0 %v617
    %1493 = vmatprep.subr.bf16.mxu0 0
    %1494 = vmatpush1.bf16.msra.mxu0 %v618
    %1495 = vmatprep.subr.bf16.mxu0 0
    %1496 = vmatpush1.bf16.msra.mxu0 %v619
    %1497 = vmatprep.subr.bf16.mxu0 0
    %1498 = vmatpush1.bf16.msra.mxu0 %v620
    %1499 = vmatprep.subr.bf16.mxu0 0
    %1500 = vmatpush1.bf16.msra.mxu0 %v621
    %1501 = vmatprep.subr.bf16.mxu0 0
    %1502 = vmatpush1.bf16.msra.mxu0 %v622
    %1503 = vmatprep.subr.bf16.mxu0 0
    %1504 = vmatpush1.bf16.msra.mxu0 %v623
    %1505 = vmatprep.subr.bf16.mxu0 0
    %1506 = vmatpush1.bf16.msra.mxu0 %v624
    %1507 = vmatprep.subr.bf16.mxu0 0
    %1508 = vmatpush1.bf16.msra.mxu0 %v625
    %1509 = vmatprep.subr.bf16.mxu0 0
    %1510 = vmatpush1.bf16.msra.mxu0 %v626
    %1511 = vmatprep.subr.bf16.mxu0 0
    %1512 = vmatpush1.bf16.msra.mxu0 %v627
    %1513 = vmatprep.subr.bf16.mxu0 0
    %1514 = vmatpush1.bf16.msra.mxu0 %v628
    %1515 = vmatprep.subr.bf16.mxu0 0
    %1516 = vmatpush1.bf16.msra.mxu0 %v629
    %1517 = vmatprep.subr.bf16.mxu0 0
    %1518 = vmatpush1.bf16.msra.mxu0 %v630
    %1519 = vmatprep.mubr.bf16.mxu0 %v1442
    %1520 = vmatmul.mubr.bf16.gmra.mrb[0].mxu0 %v1441
    %v1521 = vpop.f32.mrb[0].mxu0
    %v1522 = vadd.f32 %v1482, %v1521
    %v1523 = vpop.f32.mrb[0].mxu0
    %v1524 = vpop.f32.mrb[0].mxu0
    %v1525 = vpop.f32.mrb[0].mxu0
    %1526 = vdwg.mxu0
    %1527 = vmatprep.subr.bf16.mxu0 0
    %1528 = vmatpush1.bf16.msra.mxu0 %v631
    %1529 = vmatprep.subr.bf16.mxu0 0
    %1530 = vmatpush1.bf16.msra.mxu0 %v632
    %1531 = vmatprep.subr.bf16.mxu0 0
    %1532 = vmatpush1.bf16.msra.mxu0 %v633
    %1533 = vmatprep.subr.bf16.mxu0 0
    %1534 = vmatpush1.bf16.msra.mxu0 %v634
    %1535 = vmatprep.subr.bf16.mxu0 0
    %1536 = vmatpush1.bf16.msra.mxu0 %v635
    %1537 = vmatprep.subr.bf16.mxu0 0
    %1538 = vmatpush1.bf16.msra.mxu0 %v636
    %1539 = vmatprep.subr.bf16.mxu0 0
    %1540 = vmatpush1.bf16.msra.mxu0 %v637
    %1541 = vmatprep.subr.bf16.mxu0 0
    %1542 = vmatpush1.bf16.msra.mxu0 %v638
    %1543 = vmatprep.subr.bf16.mxu0 0
    %1544 = vmatpush1.bf16.msra.mxu0 %v639
    %1545 = vmatprep.subr.bf16.mxu0 0
    %1546 = vmatpush1.bf16.msra.mxu0 %v640
    %1547 = vmatprep.subr.bf16.mxu0 0
    %1548 = vmatpush1.bf16.msra.mxu0 %v641
    %1549 = vmatprep.subr.bf16.mxu0 0
    %1550 = vmatpush1.bf16.msra.mxu0 %v642
    %1551 = vmatprep.subr.bf16.mxu0 0
    %1552 = vmatpush1.bf16.msra.mxu0 %v643
    %1553 = vmatprep.subr.bf16.mxu0 0
    %1554 = vmatpush1.bf16.msra.mxu0 %v644
    %1555 = vmatprep.subr.bf16.mxu0 0
    %1556 = vmatpush1.bf16.msra.mxu0 %v645
    %1557 = vmatprep.subr.bf16.mxu0 0
    %1558 = vmatpush1.bf16.msra.mxu0 %v646
    %1559 = vmatprep.mubr.bf16.mxu0 %v1444
    %1560 = vmatmul.mubr.bf16.gmra.mrb[0].mxu0 %v1443
    %v1561 = vpop.f32.mrb[0].mxu0
    %v1562 = vadd.f32 %v1522, %v1561
    %v1563 = vpop.f32.mrb[0].mxu0
    %v1564 = vpop.f32.mrb[0].mxu0
    %v1565 = vpop.f32.mrb[0].mxu0
    %1566 = vdwg.mxu0
    %1567 = vmatprep.subr.bf16.mxu0 0
    %1568 = vmatpush1.bf16.msra.mxu0 %v647
    %1569 = vmatprep.subr.bf16.mxu0 0
    %1570 = vmatpush1.bf16.msra.mxu0 %v648
    %1571 = vmatprep.subr.bf16.mxu0 0
    %1572 = vmatpush1.bf16.msra.mxu0 %v649
    %1573 = vmatprep.subr.bf16.mxu0 0
    %1574 = vmatpush1.bf16.msra.mxu0 %v650
    %1575 = vmatprep.subr.bf16.mxu0 0
    %1576 = vmatpush1.bf16.msra.mxu0 %v651
    %1577 = vmatprep.subr.bf16.mxu0 0
    %1578 = vmatpush1.bf16.msra.mxu0 %v652
    %1579 = vmatprep.subr.bf16.mxu0 0
    %1580 = vmatpush1.bf16.msra.mxu0 %v653
    %1581 = vmatprep.subr.bf16.mxu0 0
    %1582 = vmatpush1.bf16.msra.mxu0 %v654
    %1583 = vmatprep.subr.bf16.mxu0 0
    %1584 = vmatpush1.bf16.msra.mxu0 %v655
    %1585 = vmatprep.subr.bf16.mxu0 0
    %1586 = vmatpush1.bf16.msra.mxu0 %v656
    %1587 = vmatprep.subr.bf16.mxu0 0
    %1588 = vmatpush1.bf16.msra.mxu0 %v657
    %1589 = vmatprep.subr.bf16.mxu0 0
    %1590 = vmatpush1.bf16.msra.mxu0 %v658
    %1591 = vmatprep.subr.bf16.mxu0 0
    %1592 = vmatpush1.bf16.msra.mxu0 %v659
    %1593 = vmatprep.subr.bf16.mxu0 0
    %1594 = vmatpush1.bf16.msra.mxu0 %v660
    %1595 = vmatprep.subr.bf16.mxu0 0
    %1596 = vmatpush1.bf16.msra.mxu0 %v661
    %1597 = vmatprep.subr.bf16.mxu0 0
    %1598 = vmatpush1.bf16.msra.mxu0 %v662
    %1599 = vmatprep.mubr.bf16.mxu0 %v1446
    %1600 = vmatmul.mubr.bf16.gmra.mrb[0].mxu0 %v1445
    %v1601 = vpop.f32.mrb[0].mxu0
    %v1602 = vadd.f32 %v1562, %v1601
    %v1603 = vpop.f32.mrb[0].mxu0
    %v1604 = vpop.f32.mrb[0].mxu0
    %v1605 = vpop.f32.mrb[0].mxu0
    %1606 = vdwg.mxu0
    %1607 = vmax.xlane.f32.xlu0 %v1602
    %v1608 = vpop.xlane.xlu0 %1607
    %v1609 = vsub.f32 %v1602, %v1608
    %v1610 = vmul.f32 %v1609, 1.442695
    %v1611 = vpow.pop %v1610
    %1612 = vadd.xlane.f32.xlu0 %v1611
    %v1613 = vpop.xlane.xlu0 %1612
    %v1614 = vrcp.pop %v1613
    %v1615 = vmul.f32 1.0, %v1614
    %v1616 = vmul.f32 %v1611, %v1615
    %v1617 = vsub.f32 %v1616, %v302
    %v1618 = vpack.c.bf16 %v1617, %v1617
    %1619 = vmatprep.subr.bf16.mxu0 %v1092
    %1620 = vmatpush1.bf16.msra.mxu0 %v1091
    %1621 = vmatprep.subr.bf16.mxu0 %v1100
    %1622 = vmatpush1.bf16.msra.mxu0 %v1099
    %1623 = vmatprep.subr.bf16.mxu0 %v1108
    %1624 = vmatpush1.bf16.msra.mxu0 %v1107
    %1625 = vmatprep.subr.bf16.mxu0 %v1116
    %1626 = vmatpush1.bf16.msra.mxu0 %v1115
    %1627 = vmatprep.subr.bf16.mxu0 %v1124
    %1628 = vmatpush1.bf16.msra.mxu0 %v1123
    %1629 = vmatprep.subr.bf16.mxu0 %v1132
    %1630 = vmatpush1.bf16.msra.mxu0 %v1131
    %1631 = vmatprep.subr.bf16.mxu0 %v1140
    %1632 = vmatpush1.bf16.msra.mxu0 %v1139
    %1633 = vmatprep.subr.bf16.mxu0 %v1148
    %1634 = vmatpush1.bf16.msra.mxu0 %v1147
    %1635 = vmatprep.subr.bf16.mxu0 0
    %1636 = vmatpush1.bf16.msra.mxu0 0
    %1637 = vmatprep.subr.bf16.mxu0 0
    %1638 = vmatpush1.bf16.msra.mxu0 0
    %1639 = vmatprep.subr.bf16.mxu0 0
    %1640 = vmatpush1.bf16.msra.mxu0 0
    %1641 = vmatprep.subr.bf16.mxu0 0
    %1642 = vmatpush1.bf16.msra.mxu0 0
    %1643 = vmatprep.subr.bf16.mxu0 0
    %1644 = vmatpush1.bf16.msra.mxu0 0
    %1645 = vmatprep.subr.bf16.mxu0 0
    %1646 = vmatpush1.bf16.msra.mxu0 0
    %1647 = vmatprep.subr.bf16.mxu0 0
    %1648 = vmatpush1.bf16.msra.mxu0 0
    %1649 = vmatprep.subr.bf16.mxu0 0
    %1650 = vmatpush1.bf16.msra.mxu0 0
    %1651 = vmatprep.mubr.bf16.mxu0 0
    %1652 = vmatmul.mubr.bf16.gmra.mrb[0].mxu0 %v1618
    %v1653 = vpop.f32.mrb[0].mxu0
    %v1654 = vadd.f32 0.0, %v1653
    %v1655 = vpop.f32.mrb[0].mxu0
    %v1656 = vadd.f32 0.0, %v1655
    %v1657 = vpop.f32.mrb[0].mxu0
    %v1658 = vpop.f32.mrb[0].mxu0
    %1659 = vdwg.mxu0
    %1660 = vmatprep.subr.bf16.mxu0 %v1094
    %1661 = vmatpush1.bf16.msra.mxu0 %v1093
    %1662 = vmatprep.subr.bf16.mxu0 %v1102
    %1663 = vmatpush1.bf16.msra.mxu0 %v1101
    %1664 = vmatprep.subr.bf16.mxu0 %v1110
    %1665 = vmatpush1.bf16.msra.mxu0 %v1109
    %1666 = vmatprep.subr.bf16.mxu0 %v1118
    %1667 = vmatpush1.bf16.msra.mxu0 %v1117
    %1668 = vmatprep.subr.bf16.mxu0 %v1126
    %1669 = vmatpush1.bf16.msra.mxu0 %v1125
    %1670 = vmatprep.subr.bf16.mxu0 %v1134
    %1671 = vmatpush1.bf16.msra.mxu0 %v1133
    %1672 = vmatprep.subr.bf16.mxu0 %v1142
    %1673 = vmatpush1.bf16.msra.mxu0 %v1141
    %1674 = vmatprep.subr.bf16.mxu0 %v1150
    %1675 = vmatpush1.bf16.msra.mxu0 %v1149
    %1676 = vmatprep.subr.bf16.mxu0 0
    %1677 = vmatpush1.bf16.msra.mxu0 0
    %1678 = vmatprep.subr.bf16.mxu0 0
    %1679 = vmatpush1.bf16.msra.mxu0 0
    %1680 = vmatprep.subr.bf16.mxu0 0
    %1681 = vmatpush1.bf16.msra.mxu0 0
    %1682 = vmatprep.subr.bf16.mxu0 0
    %1683 = vmatpush1.bf16.msra.mxu0 0
    %1684 = vmatprep.subr.bf16.mxu0 0
    %1685 = vmatpush1.bf16.msra.mxu0 0
    %1686 = vmatprep.subr.bf16.mxu0 0
    %1687 = vmatpush1.bf16.msra.mxu0 0
    %1688 = vmatprep.subr.bf16.mxu0 0
    %1689 = vmatpush1.bf16.msra.mxu0 0
    %1690 = vmatprep.subr.bf16.mxu0 0
    %1691 = vmatpush1.bf16.msra.mxu0 0
    %1692 = vmatprep.mubr.bf16.mxu0 0
    %1693 = vmatmul.mubr.bf16.gmra.mrb[0].mxu0 %v1618
    %v1694 = vpop.f32.mrb[0].mxu0
    %v1695 = vadd.f32 0.0, %v1694
    %v1696 = vpop.f32.mrb[0].mxu0
    %v1697 = vadd.f32 0.0, %v1696
    %v1698 = vpop.f32.mrb[0].mxu0
    %v1699 = vpop.f32.mrb[0].mxu0
    %1700 = vdwg.mxu0
    %1701 = vmatprep.subr.bf16.mxu0 %v1096
    %1702 = vmatpush1.bf16.msra.mxu0 %v1095
    %1703 = vmatprep.subr.bf16.mxu0 %v1104
    %1704 = vmatpush1.bf16.msra.mxu0 %v1103
    %1705 = vmatprep.subr.bf16.mxu0 %v1112
    %1706 = vmatpush1.bf16.msra.mxu0 %v1111
    %1707 = vmatprep.subr.bf16.mxu0 %v1120
    %1708 = vmatpush1.bf16.msra.mxu0 %v1119
    %1709 = vmatprep.subr.bf16.mxu0 %v1128
    %1710 = vmatpush1.bf16.msra.mxu0 %v1127
    %1711 = vmatprep.subr.bf16.mxu0 %v1136
    %1712 = vmatpush1.bf16.msra.mxu0 %v1135
    %1713 = vmatprep.subr.bf16.mxu0 %v1144
    %1714 = vmatpush1.bf16.msra.mxu0 %v1143
    %1715 = vmatprep.subr.bf16.mxu0 %v1152
    %1716 = vmatpush1.bf16.msra.mxu0 %v1151
    %1717 = vmatprep.subr.bf16.mxu0 0
    %1718 = vmatpush1.bf16.msra.mxu0 0
    %1719 = vmatprep.subr.bf16.mxu0 0
    %1720 = vmatpush1.bf16.msra.mxu0 0
    %1721 = vmatprep.subr.bf16.mxu0 0
    %1722 = vmatpush1.bf16.msra.mxu0 0
    %1723 = vmatprep.subr.bf16.mxu0 0
    %1724 = vmatpush1.bf16.msra.mxu0 0
    %1725 = vmatprep.subr.bf16.mxu0 0
    %1726 = vmatpush1.bf16.msra.mxu0 0
    %1727 = vmatprep.subr.bf16.mxu0 0
    %1728 = vmatpush1.bf16.msra.mxu0 0
    %1729 = vmatprep.subr.bf16.mxu0 0
    %1730 = vmatpush1.bf16.msra.mxu0 0
    %1731 = vmatprep.subr.bf16.mxu0 0
    %1732 = vmatpush1.bf16.msra.mxu0 0
    %1733 = vmatprep.mubr.bf16.mxu0 0
    %1734 = vmatmul.mubr.bf16.gmra.mrb[0].mxu0 %v1618
    %v1735 = vpop.f32.mrb[0].mxu0
    %v1736 = vadd.f32 0.0, %v1735
    %v1737 = vpop.f32.mrb[0].mxu0
    %v1738 = vadd.f32 0.0, %v1737
    %v1739 = vpop.f32.mrb[0].mxu0
    %v1740 = vpop.f32.mrb[0].mxu0
    %1741 = vdwg.mxu0
    %1742 = vmatprep.subr.bf16.mxu0 %v1098
    %1743 = vmatpush1.bf16.msra.mxu0 %v1097
    %1744 = vmatprep.subr.bf16.mxu0 %v1106
    %1745 = vmatpush1.bf16.msra.mxu0 %v1105
    %1746 = vmatprep.subr.bf16.mxu0 %v1114
    %1747 = vmatpush1.bf16.msra.mxu0 %v1113
    %1748 = vmatprep.subr.bf16.mxu0 %v1122
    %1749 = vmatpush1.bf16.msra.mxu0 %v1121
    %1750 = vmatprep.subr.bf16.mxu0 %v1130
    %1751 = vmatpush1.bf16.msra.mxu0 %v1129
    %1752 = vmatprep.subr.bf16.mxu0 %v1138
    %1753 = vmatpush1.bf16.msra.mxu0 %v1137
    %1754 = vmatprep.subr.bf16.mxu0 %v1146
    %1755 = vmatpush1.bf16.msra.mxu0 %v1145
    %1756 = vmatprep.subr.bf16.mxu0 %v1154
    %1757 = vmatpush1.bf16.msra.mxu0 %v1153
    %1758 = vmatprep.subr.bf16.mxu0 0
    %1759 = vmatpush1.bf16.msra.mxu0 0
    %1760 = vmatprep.subr.bf16.mxu0 0
    %1761 = vmatpush1.bf16.msra.mxu0 0
    %1762 = vmatprep.subr.bf16.mxu0 0
    %1763 = vmatpush1.bf16.msra.mxu0 0
    %1764 = vmatprep.subr.bf16.mxu0 0
    %1765 = vmatpush1.bf16.msra.mxu0 0
    %1766 = vmatprep.subr.bf16.mxu0 0
    %1767 = vmatpush1.bf16.msra.mxu0 0
    %1768 = vmatprep.subr.bf16.mxu0 0
    %1769 = vmatpush1.bf16.msra.mxu0 0
    %1770 = vmatprep.subr.bf16.mxu0 0
    %1771 = vmatpush1.bf16.msra.mxu0 0
    %1772 = vmatprep.subr.bf16.mxu0 0
    %1773 = vmatpush1.bf16.msra.mxu0 0
    %1774 = vmatprep.mubr.bf16.mxu0 0
    %1775 = vmatmul.mubr.bf16.gmra.mrb[0].mxu0 %v1618
    %v1776 = vpop.f32.mrb[0].mxu0
    %v1777 = vadd.f32 0.0, %v1776
    %v1778 = vpop.f32.mrb[0].mxu0
    %v1779 = vadd.f32 0.0, %v1778
    %v1780 = vpop.f32.mrb[0].mxu0
    %v1781 = vpop.f32.mrb[0].mxu0
    %1782 = vdwg.mxu0
    %v1791 = vand.u32 %v1654, 2147483648
    %v1792 = vand.u32 %v1656, 2147483648
    %v1793 = vand.u32 %v1695, 2147483648
    %v1794 = vand.u32 %v1697, 2147483648
    %v1795 = vand.u32 %v1736, 2147483648
    %v1796 = vand.u32 %v1738, 2147483648
    %v1797 = vand.u32 %v1777, 2147483648
    %v1798 = vand.u32 %v1779, 2147483648
    %v1799 = vor.u32 %v1791, 1004888130
    %v1800 = vor.u32 %v1792, 1004888130
    %v1801 = vor.u32 %v1793, 1004888130
    %v1802 = vor.u32 %v1794, 1004888130
    %v1803 = vor.u32 %v1795, 1004888130
    %v1804 = vor.u32 %v1796, 1004888130
    %v1805 = vor.u32 %v1797, 1004888130
    %v1806 = vor.u32 %v1798, 1004888130
    %v1815 = vadd.f32 %v1431, %v1799
    %v1816 = vadd.f32 %v1432, %v1800
    %v1817 = vadd.f32 %v1433, %v1801
    %v1818 = vadd.f32 %v1434, %v1802
    %v1819 = vadd.f32 %v1435, %v1803
    %v1820 = vadd.f32 %v1436, %v1804
    %v1821 = vadd.f32 %v1437, %v1805
    %v1822 = vadd.f32 %v1438, %v1806
    %v1823 = vmax.f32 %v1815, %v311
    %v1824 = vmax.f32 %v1816, %v312
    %v1825 = vmax.f32 %v1817, %v313
    %v1826 = vmax.f32 %v1818, %v314
    %v1827 = vmax.f32 %v1819, %v315
    %v1828 = vmax.f32 %v1820, %v316
    %v1829 = vmax.f32 %v1821, %v317
    %v1830 = vmax.f32 %v1822, %v318
    %v1831 = vmin.f32 %v1823, %v327
    %v1832 = vmin.f32 %v1824, %v328
    %v1833 = vmin.f32 %v1825, %v329
    %v1834 = vmin.f32 %v1826, %v330
    %v1835 = vmin.f32 %v1827, %v331
    %v1836 = vmin.f32 %v1828, %v332
    %v1837 = vmin.f32 %v1829, %v333
    %v1838 = vmin.f32 %v1830, %v334
    %v1839 = vpack.c.bf16 %v1831, %v1831
    %v1840 = vpack.c.bf16 %v1832, %v1832
    %v1841 = vpack.c.bf16 %v1833, %v1833
    %v1842 = vpack.c.bf16 %v1834, %v1834
    %v1843 = vpack.c.bf16 %v1835, %v1835
    %v1844 = vpack.c.bf16 %v1836, %v1836
    %v1845 = vpack.c.bf16 %v1837, %v1837
    %v1846 = vpack.c.bf16 %v1838, %v1838
    %1847 = vmatprep.subr.bf16.mxu0 0
    %1848 = vmatpush1.bf16.msra.mxu0 %v599
    %1849 = vmatprep.subr.bf16.mxu0 0
    %1850 = vmatpush1.bf16.msra.mxu0 %v600
    %1851 = vmatprep.subr.bf16.mxu0 0
    %1852 = vmatpush1.bf16.msra.mxu0 %v601
    %1853 = vmatprep.subr.bf16.mxu0 0
    %1854 = vmatpush1.bf16.msra.mxu0 %v602
    %1855 = vmatprep.subr.bf16.mxu0 0
    %1856 = vmatpush1.bf16.msra.mxu0 %v603
    %1857 = vmatprep.subr.bf16.mxu0 0
    %1858 = vmatpush1.bf16.msra.mxu0 %v604
    %1859 = vmatprep.subr.bf16.mxu0 0
    %1860 = vmatpush1.bf16.msra.mxu0 %v605
    %1861 = vmatprep.subr.bf16.mxu0 0
    %1862 = vmatpush1.bf16.msra.mxu0 %v606
    %1863 = vmatprep.subr.bf16.mxu0 0
    %1864 = vmatpush1.bf16.msra.mxu0 %v607
    %1865 = vmatprep.subr.bf16.mxu0 0
    %1866 = vmatpush1.bf16.msra.mxu0 %v608
    %1867 = vmatprep.subr.bf16.mxu0 0
    %1868 = vmatpush1.bf16.msra.mxu0 %v609
    %1869 = vmatprep.subr.bf16.mxu0 0
    %1870 = vmatpush1.bf16.msra.mxu0 %v610
    %1871 = vmatprep.subr.bf16.mxu0 0
    %1872 = vmatpush1.bf16.msra.mxu0 %v611
    %1873 = vmatprep.subr.bf16.mxu0 0
    %1874 = vmatpush1.bf16.msra.mxu0 %v612
    %1875 = vmatprep.subr.bf16.mxu0 0
    %1876 = vmatpush1.bf16.msra.mxu0 %v613
    %1877 = vmatprep.subr.bf16.mxu0 0
    %1878 = vmatpush1.bf16.msra.mxu0 %v614
    %1879 = vmatprep.mubr.bf16.mxu0 %v1840
    %1880 = vmatmul.mubr.bf16.gmra.mrb[0].mxu0 %v1839
    %v1881 = vpop.f32.mrb[0].mxu0
    %v1882 = vadd.f32 %v292, %v1881
    %v1883 = vpop.f32.mrb[0].mxu0
    %v1884 = vpop.f32.mrb[0].mxu0
    %v1885 = vpop.f32.mrb[0].mxu0
    %1886 = vdwg.mxu0
    %1887 = vmatprep.subr.bf16.mxu0 0
    %1888 = vmatpush1.bf16.msra.mxu0 %v615
    %1889 = vmatprep.subr.bf16.mxu0 0
    %1890 = vmatpush1.bf16.msra.mxu0 %v616
    %1891 = vmatprep.subr.bf16.mxu0 0
    %1892 = vmatpush1.bf16.msra.mxu0 %v617
    %1893 = vmatprep.subr.bf16.mxu0 0
    %1894 = vmatpush1.bf16.msra.mxu0 %v618
    %1895 = vmatprep.subr.bf16.mxu0 0
    %1896 = vmatpush1.bf16.msra.mxu0 %v619
    %1897 = vmatprep.subr.bf16.mxu0 0
    %1898 = vmatpush1.bf16.msra.mxu0 %v620
    %1899 = vmatprep.subr.bf16.mxu0 0
    %1900 = vmatpush1.bf16.msra.mxu0 %v621
    %1901 = vmatprep.subr.bf16.mxu0 0
    %1902 = vmatpush1.bf16.msra.mxu0 %v622
    %1903 = vmatprep.subr.bf16.mxu0 0
    %1904 = vmatpush1.bf16.msra.mxu0 %v623
    %1905 = vmatprep.subr.bf16.mxu0 0
    %1906 = vmatpush1.bf16.msra.mxu0 %v624
    %1907 = vmatprep.subr.bf16.mxu0 0
    %1908 = vmatpush1.bf16.msra.mxu0 %v625
    %1909 = vmatprep.subr.bf16.mxu0 0
    %1910 = vmatpush1.bf16.msra.mxu0 %v626
    %1911 = vmatprep.subr.bf16.mxu0 0
    %1912 = vmatpush1.bf16.msra.mxu0 %v627
    %1913 = vmatprep.subr.bf16.mxu0 0
    %1914 = vmatpush1.bf16.msra.mxu0 %v628
    %1915 = vmatprep.subr.bf16.mxu0 0
    %1916 = vmatpush1.bf16.msra.mxu0 %v629
    %1917 = vmatprep.subr.bf16.mxu0 0
    %1918 = vmatpush1.bf16.msra.mxu0 %v630
    %1919 = vmatprep.mubr.bf16.mxu0 %v1842
    %1920 = vmatmul.mubr.bf16.gmra.mrb[0].mxu0 %v1841
    %v1921 = vpop.f32.mrb[0].mxu0
    %v1922 = vadd.f32 %v1882, %v1921
    %v1923 = vpop.f32.mrb[0].mxu0
    %v1924 = vpop.f32.mrb[0].mxu0
    %v1925 = vpop.f32.mrb[0].mxu0
    %1926 = vdwg.mxu0
    %1927 = vmatprep.subr.bf16.mxu0 0
    %1928 = vmatpush1.bf16.msra.mxu0 %v631
    %1929 = vmatprep.subr.bf16.mxu0 0
    %1930 = vmatpush1.bf16.msra.mxu0 %v632
    %1931 = vmatprep.subr.bf16.mxu0 0
    %1932 = vmatpush1.bf16.msra.mxu0 %v633
    %1933 = vmatprep.subr.bf16.mxu0 0
    %1934 = vmatpush1.bf16.msra.mxu0 %v634
    %1935 = vmatprep.subr.bf16.mxu0 0
    %1936 = vmatpush1.bf16.msra.mxu0 %v635
    %1937 = vmatprep.subr.bf16.mxu0 0
    %1938 = vmatpush1.bf16.msra.mxu0 %v636
    %1939 = vmatprep.subr.bf16.mxu0 0
    %1940 = vmatpush1.bf16.msra.mxu0 %v637
    %1941 = vmatprep.subr.bf16.mxu0 0
    %1942 = vmatpush1.bf16.msra.mxu0 %v638
    %1943 = vmatprep.subr.bf16.mxu0 0
    %1944 = vmatpush1.bf16.msra.mxu0 %v639
    %1945 = vmatprep.subr.bf16.mxu0 0
    %1946 = vmatpush1.bf16.msra.mxu0 %v640
    %1947 = vmatprep.subr.bf16.mxu0 0
    %1948 = vmatpush1.bf16.msra.mxu0 %v641
    %1949 = vmatprep.subr.bf16.mxu0 0
    %1950 = vmatpush1.bf16.msra.mxu0 %v642
    %1951 = vmatprep.subr.bf16.mxu0 0
    %1952 = vmatpush1.bf16.msra.mxu0 %v643
    %1953 = vmatprep.subr.bf16.mxu0 0
    %1954 = vmatpush1.bf16.msra.mxu0 %v644
    %1955 = vmatprep.subr.bf16.mxu0 0
    %1956 = vmatpush1.bf16.msra.mxu0 %v645
    %1957 = vmatprep.subr.bf16.mxu0 0
    %1958 = vmatpush1.bf16.msra.mxu0 %v646
    %1959 = vmatprep.mubr.bf16.mxu0 %v1844
    %1960 = vmatmul.mubr.bf16.gmra.mrb[0].mxu0 %v1843
    %v1961 = vpop.f32.mrb[0].mxu0
    %v1962 = vadd.f32 %v1922, %v1961
    %v1963 = vpop.f32.mrb[0].mxu0
    %v1964 = vpop.f32.mrb[0].mxu0
    %v1965 = vpop.f32.mrb[0].mxu0
    %1966 = vdwg.mxu0
    %1967 = vmatprep.subr.bf16.mxu0 0
    %1968 = vmatpush1.bf16.msra.mxu0 %v647
    %1969 = vmatprep.subr.bf16.mxu0 0
    %1970 = vmatpush1.bf16.msra.mxu0 %v648
    %1971 = vmatprep.subr.bf16.mxu0 0
    %1972 = vmatpush1.bf16.msra.mxu0 %v649
    %1973 = vmatprep.subr.bf16.mxu0 0
    %1974 = vmatpush1.bf16.msra.mxu0 %v650
    %1975 = vmatprep.subr.bf16.mxu0 0
    %1976 = vmatpush1.bf16.msra.mxu0 %v651
    %1977 = vmatprep.subr.bf16.mxu0 0
    %1978 = vmatpush1.bf16.msra.mxu0 %v652
    %1979 = vmatprep.subr.bf16.mxu0 0
    %1980 = vmatpush1.bf16.msra.mxu0 %v653
    %1981 = vmatprep.subr.bf16.mxu0 0
    %1982 = vmatpush1.bf16.msra.mxu0 %v654
    %1983 = vmatprep.subr.bf16.mxu0 0
    %1984 = vmatpush1.bf16.msra.mxu0 %v655
    %1985 = vmatprep.subr.bf16.mxu0 0
    %1986 = vmatpush1.bf16.msra.mxu0 %v656
    %1987 = vmatprep.subr.bf16.mxu0 0
    %1988 = vmatpush1.bf16.msra.mxu0 %v657
    %1989 = vmatprep.subr.bf16.mxu0 0
    %1990 = vmatpush1.bf16.msra.mxu0 %v658
    %1991 = vmatprep.subr.bf16.mxu0 0
    %1992 = vmatpush1.bf16.msra.mxu0 %v659
    %1993 = vmatprep.subr.bf16.mxu0 0
    %1994 = vmatpush1.bf16.msra.mxu0 %v660
    %1995 = vmatprep.subr.bf16.mxu0 0
    %1996 = vmatpush1.bf16.msra.mxu0 %v661
    %1997 = vmatprep.subr.bf16.mxu0 0
    %1998 = vmatpush1.bf16.msra.mxu0 %v662
    %1999 = vmatprep.mubr.bf16.mxu0 %v1846
    %2000 = vmatmul.mubr.bf16.gmra.mrb[0].mxu0 %v1845
    %v2001 = vpop.f32.mrb[0].mxu0
    %v2002 = vadd.f32 %v1962, %v2001
    %v2003 = vpop.f32.mrb[0].mxu0
    %v2004 = vpop.f32.mrb[0].mxu0
    %v2005 = vpop.f32.mrb[0].mxu0
    %2006 = vdwg.mxu0
    %2007 = vmax.xlane.f32.xlu0 %v2002
    %v2008 = vpop.xlane.xlu0 %2007
    %v2009 = vsub.f32 %v2002, %v2008
    %v2010 = vmul.f32 %v2009, 1.442695
    %v2011 = vpow.pop %v2010
    %2012 = vadd.xlane.f32.xlu0 %v2011
    %v2013 = vpop.xlane.xlu0 %2012
    %v2014 = vrcp.pop %v2013
    %v2015 = vmul.f32 1.0, %v2014
    %v2016 = vmul.f32 %v2011, %v2015
    %v2017 = vsub.f32 %v2016, %v302
    %v2018 = vpack.c.bf16 %v2017, %v2017
    %2019 = vmatprep.subr.bf16.mxu0 %v1092
    %2020 = vmatpush1.bf16.msra.mxu0 %v1091
    %2021 = vmatprep.subr.bf16.mxu0 %v1100
    %2022 = vmatpush1.bf16.msra.mxu0 %v1099
    %2023 = vmatprep.subr.bf16.mxu0 %v1108
    %2024 = vmatpush1.bf16.msra.mxu0 %v1107
    %2025 = vmatprep.subr.bf16.mxu0 %v1116
    %2026 = vmatpush1.bf16.msra.mxu0 %v1115
    %2027 = vmatprep.subr.bf16.mxu0 %v1124
    %2028 = vmatpush1.bf16.msra.mxu0 %v1123
    %2029 = vmatprep.subr.bf16.mxu0 %v1132
    %2030 = vmatpush1.bf16.msra.mxu0 %v1131
    %2031 = vmatprep.subr.bf16.mxu0 %v1140
    %2032 = vmatpush1.bf16.msra.mxu0 %v1139
    %2033 = vmatprep.subr.bf16.mxu0 %v1148
    %2034 = vmatpush1.bf16.msra.mxu0 %v1147
    %2035 = vmatprep.subr.bf16.mxu0 0
    %2036 = vmatpush1.bf16.msra.mxu0 0
    %2037 = vmatprep.subr.bf16.mxu0 0
    %2038 = vmatpush1.bf16.msra.mxu0 0
    %2039 = vmatprep.subr.bf16.mxu0 0
    %2040 = vmatpush1.bf16.msra.mxu0 0
    %2041 = vmatprep.subr.bf16.mxu0 0
    %2042 = vmatpush1.bf16.msra.mxu0 0
    %2043 = vmatprep.subr.bf16.mxu0 0
    %2044 = vmatpush1.bf16.msra.mxu0 0
    %2045 = vmatprep.subr.bf16.mxu0 0
    %2046 = vmatpush1.bf16.msra.mxu0 0
    %2047 = vmatprep.subr.bf16.mxu0 0
    %2048 = vmatpush1.bf16.msra.mxu0 0
    %2049 = vmatprep.subr.bf16.mxu0 0
    %2050 = vmatpush1.bf16.msra.mxu0 0
    %2051 = vmatprep.mubr.bf16.mxu0 0
    %2052 = vmatmul.mubr.bf16.gmra.mrb[0].mxu0 %v2018
    %v2053 = vpop.f32.mrb[0].mxu0
    %v2054 = vadd.f32 0.0, %v2053
    %v2055 = vpop.f32.mrb[0].mxu0
    %v2056 = vadd.f32 0.0, %v2055
    %v2057 = vpop.f32.mrb[0].mxu0
    %v2058 = vpop.f32.mrb[0].mxu0
    %2059 = vdwg.mxu0
    %2060 = vmatprep.subr.bf16.mxu0 %v1094
    %2061 = vmatpush1.bf16.msra.mxu0 %v1093
    %2062 = vmatprep.subr.bf16.mxu0 %v1102
    %2063 = vmatpush1.bf16.msra.mxu0 %v1101
    %2064 = vmatprep.subr.bf16.mxu0 %v1110
    %2065 = vmatpush1.bf16.msra.mxu0 %v1109
    %2066 = vmatprep.subr.bf16.mxu0 %v1118
    %2067 = vmatpush1.bf16.msra.mxu0 %v1117
    %2068 = vmatprep.subr.bf16.mxu0 %v1126
    %2069 = vmatpush1.bf16.msra.mxu0 %v1125
    %2070 = vmatprep.subr.bf16.mxu0 %v1134
    %2071 = vmatpush1.bf16.msra.mxu0 %v1133
    %2072 = vmatprep.subr.bf16.mxu0 %v1142
    %2073 = vmatpush1.bf16.msra.mxu0 %v1141
    %2074 = vmatprep.subr.bf16.mxu0 %v1150
    %2075 = vmatpush1.bf16.msra.mxu0 %v1149
    %2076 = vmatprep.subr.bf16.mxu0 0
    %2077 = vmatpush1.bf16.msra.mxu0 0
    %2078 = vmatprep.subr.bf16.mxu0 0
    %2079 = vmatpush1.bf16.msra.mxu0 0
    %2080 = vmatprep.subr.bf16.mxu0 0
    %2081 = vmatpush1.bf16.msra.mxu0 0
    %2082 = vmatprep.subr.bf16.mxu0 0
    %2083 = vmatpush1.bf16.msra.mxu0 0
    %2084 = vmatprep.subr.bf16.mxu0 0
    %2085 = vmatpush1.bf16.msra.mxu0 0
    %2086 = vmatprep.subr.bf16.mxu0 0
    %2087 = vmatpush1.bf16.msra.mxu0 0
    %2088 = vmatprep.subr.bf16.mxu0 0
    %2089 = vmatpush1.bf16.msra.mxu0 0
    %2090 = vmatprep.subr.bf16.mxu0 0
    %2091 = vmatpush1.bf16.msra.mxu0 0
    %2092 = vmatprep.mubr.bf16.mxu0 0
    %2093 = vmatmul.mubr.bf16.gmra.mrb[0].mxu0 %v2018
    %v2094 = vpop.f32.mrb[0].mxu0
    %v2095 = vadd.f32 0.0, %v2094
    %v2096 = vpop.f32.mrb[0].mxu0
    %v2097 = vadd.f32 0.0, %v2096
    %v2098 = vpop.f32.mrb[0].mxu0
    %v2099 = vpop.f32.mrb[0].mxu0
    %2100 = vdwg.mxu0
    %2101 = vmatprep.subr.bf16.mxu0 %v1096
    %2102 = vmatpush1.bf16.msra.mxu0 %v1095
    %2103 = vmatprep.subr.bf16.mxu0 %v1104
    %2104 = vmatpush1.bf16.msra.mxu0 %v1103
    %2105 = vmatprep.subr.bf16.mxu0 %v1112
    %2106 = vmatpush1.bf16.msra.mxu0 %v1111
    %2107 = vmatprep.subr.bf16.mxu0 %v1120
    %2108 = vmatpush1.bf16.msra.mxu0 %v1119
    %2109 = vmatprep.subr.bf16.mxu0 %v1128
    %2110 = vmatpush1.bf16.msra.mxu0 %v1127
    %2111 = vmatprep.subr.bf16.mxu0 %v1136
    %2112 = vmatpush1.bf16.msra.mxu0 %v1135
    %2113 = vmatprep.subr.bf16.mxu0 %v1144
    %2114 = vmatpush1.bf16.msra.mxu0 %v1143
    %2115 = vmatprep.subr.bf16.mxu0 %v1152
    %2116 = vmatpush1.bf16.msra.mxu0 %v1151
    %2117 = vmatprep.subr.bf16.mxu0 0
    %2118 = vmatpush1.bf16.msra.mxu0 0
    %2119 = vmatprep.subr.bf16.mxu0 0
    %2120 = vmatpush1.bf16.msra.mxu0 0
    %2121 = vmatprep.subr.bf16.mxu0 0
    %2122 = vmatpush1.bf16.msra.mxu0 0
    %2123 = vmatprep.subr.bf16.mxu0 0
    %2124 = vmatpush1.bf16.msra.mxu0 0
    %2125 = vmatprep.subr.bf16.mxu0 0
    %2126 = vmatpush1.bf16.msra.mxu0 0
    %2127 = vmatprep.subr.bf16.mxu0 0
    %2128 = vmatpush1.bf16.msra.mxu0 0
    %2129 = vmatprep.subr.bf16.mxu0 0
    %2130 = vmatpush1.bf16.msra.mxu0 0
    %2131 = vmatprep.subr.bf16.mxu0 0
    %2132 = vmatpush1.bf16.msra.mxu0 0
    %2133 = vmatprep.mubr.bf16.mxu0 0
    %2134 = vmatmul.mubr.bf16.gmra.mrb[0].mxu0 %v2018
    %v2135 = vpop.f32.mrb[0].mxu0
    %v2136 = vadd.f32 0.0, %v2135
    %v2137 = vpop.f32.mrb[0].mxu0
    %v2138 = vadd.f32 0.0, %v2137
    %v2139 = vpop.f32.mrb[0].mxu0
    %v2140 = vpop.f32.mrb[0].mxu0
    %2141 = vdwg.mxu0
    %2142 = vmatprep.subr.bf16.mxu0 %v1098
    %2143 = vmatpush1.bf16.msra.mxu0 %v1097
    %2144 = vmatprep.subr.bf16.mxu0 %v1106
    %2145 = vmatpush1.bf16.msra.mxu0 %v1105
    %2146 = vmatprep.subr.bf16.mxu0 %v1114
    %2147 = vmatpush1.bf16.msra.mxu0 %v1113
    %2148 = vmatprep.subr.bf16.mxu0 %v1122
    %2149 = vmatpush1.bf16.msra.mxu0 %v1121
    %2150 = vmatprep.subr.bf16.mxu0 %v1130
    %2151 = vmatpush1.bf16.msra.mxu0 %v1129
    %2152 = vmatprep.subr.bf16.mxu0 %v1138
    %2153 = vmatpush1.bf16.msra.mxu0 %v1137
    %2154 = vmatprep.subr.bf16.mxu0 %v1146
    %2155 = vmatpush1.bf16.msra.mxu0 %v1145
    %2156 = vmatprep.subr.bf16.mxu0 %v1154
    %2157 = vmatpush1.bf16.msra.mxu0 %v1153
    %2158 = vmatprep.subr.bf16.mxu0 0
    %2159 = vmatpush1.bf16.msra.mxu0 0
    %2160 = vmatprep.subr.bf16.mxu0 0
    %2161 = vmatpush1.bf16.msra.mxu0 0
    %2162 = vmatprep.subr.bf16.mxu0 0
    %2163 = vmatpush1.bf16.msra.mxu0 0
    %2164 = vmatprep.subr.bf16.mxu0 0
    %2165 = vmatpush1.bf16.msra.mxu0 0
    %2166 = vmatprep.subr.bf16.mxu0 0
    %2167 = vmatpush1.bf16.msra.mxu0 0
    %2168 = vmatprep.subr.bf16.mxu0 0
    %2169 = vmatpush1.bf16.msra.mxu0 0
    %2170 = vmatprep.subr.bf16.mxu0 0
    %2171 = vmatpush1.bf16.msra.mxu0 0
    %2172 = vmatprep.subr.bf16.mxu0 0
    %2173 = vmatpush1.bf16.msra.mxu0 0
    %2174 = vmatprep.mubr.bf16.mxu0 0
    %2175 = vmatmul.mubr.bf16.gmra.mrb[0].mxu0 %v2018
    %v2176 = vpop.f32.mrb[0].mxu0
    %v2177 = vadd.f32 0.0, %v2176
    %v2178 = vpop.f32.mrb[0].mxu0
    %v2179 = vadd.f32 0.0, %v2178
    %v2180 = vpop.f32.mrb[0].mxu0
    %v2181 = vpop.f32.mrb[0].mxu0
    %2182 = vdwg.mxu0
    %v2191 = vand.u32 %v2054, 2147483648
    %v2192 = vand.u32 %v2056, 2147483648
    %v2193 = vand.u32 %v2095, 2147483648
    %v2194 = vand.u32 %v2097, 2147483648
    %v2195 = vand.u32 %v2136, 2147483648
    %v2196 = vand.u32 %v2138, 2147483648
    %v2197 = vand.u32 %v2177, 2147483648
    %v2198 = vand.u32 %v2179, 2147483648
    %v2199 = vor.u32 %v2191, 1004888130
    %v2200 = vor.u32 %v2192, 1004888130
    %v2201 = vor.u32 %v2193, 1004888130
    %v2202 = vor.u32 %v2194, 1004888130
    %v2203 = vor.u32 %v2195, 1004888130
    %v2204 = vor.u32 %v2196, 1004888130
    %v2205 = vor.u32 %v2197, 1004888130
    %v2206 = vor.u32 %v2198, 1004888130
    %v2215 = vadd.f32 %v1831, %v2199
    %v2216 = vadd.f32 %v1832, %v2200
    %v2217 = vadd.f32 %v1833, %v2201
    %v2218 = vadd.f32 %v1834, %v2202
    %v2219 = vadd.f32 %v1835, %v2203
    %v2220 = vadd.f32 %v1836, %v2204
    %v2221 = vadd.f32 %v1837, %v2205
    %v2222 = vadd.f32 %v1838, %v2206
    %v2223 = vmax.f32 %v2215, %v311
    %v2224 = vmax.f32 %v2216, %v312
    %v2225 = vmax.f32 %v2217, %v313
    %v2226 = vmax.f32 %v2218, %v314
    %v2227 = vmax.f32 %v2219, %v315
    %v2228 = vmax.f32 %v2220, %v316
    %v2229 = vmax.f32 %v2221, %v317
    %v2230 = vmax.f32 %v2222, %v318
    %v2231 = vmin.f32 %v2223, %v327
    %v2232 = vmin.f32 %v2224, %v328
    %v2233 = vmin.f32 %v2225, %v329
    %v2234 = vmin.f32 %v2226, %v330
    %v2235 = vmin.f32 %v2227, %v331
    %v2236 = vmin.f32 %v2228, %v332
    %v2237 = vmin.f32 %v2229, %v333
    %v2238 = vmin.f32 %v2230, %v334
    %v2239 = vpack.c.bf16 %v2231, %v2231
    %v2240 = vpack.c.bf16 %v2232, %v2232
    %v2241 = vpack.c.bf16 %v2233, %v2233
    %v2242 = vpack.c.bf16 %v2234, %v2234
    %v2243 = vpack.c.bf16 %v2235, %v2235
    %v2244 = vpack.c.bf16 %v2236, %v2236
    %v2245 = vpack.c.bf16 %v2237, %v2237
    %v2246 = vpack.c.bf16 %v2238, %v2238
    %2247 = vmatprep.subr.bf16.mxu0 0
    %2248 = vmatpush1.bf16.msra.mxu0 %v599
    %2249 = vmatprep.subr.bf16.mxu0 0
    %2250 = vmatpush1.bf16.msra.mxu0 %v600
    %2251 = vmatprep.subr.bf16.mxu0 0
    %2252 = vmatpush1.bf16.msra.mxu0 %v601
    %2253 = vmatprep.subr.bf16.mxu0 0
    %2254 = vmatpush1.bf16.msra.mxu0 %v602
    %2255 = vmatprep.subr.bf16.mxu0 0
    %2256 = vmatpush1.bf16.msra.mxu0 %v603
    %2257 = vmatprep.subr.bf16.mxu0 0
    %2258 = vmatpush1.bf16.msra.mxu0 %v604
    %2259 = vmatprep.subr.bf16.mxu0 0
    %2260 = vmatpush1.bf16.msra.mxu0 %v605
    %2261 = vmatprep.subr.bf16.mxu0 0
    %2262 = vmatpush1.bf16.msra.mxu0 %v606
    %2263 = vmatprep.subr.bf16.mxu0 0
    %2264 = vmatpush1.bf16.msra.mxu0 %v607
    %2265 = vmatprep.subr.bf16.mxu0 0
    %2266 = vmatpush1.bf16.msra.mxu0 %v608
    %2267 = vmatprep.subr.bf16.mxu0 0
    %2268 = vmatpush1.bf16.msra.mxu0 %v609
    %2269 = vmatprep.subr.bf16.mxu0 0
    %2270 = vmatpush1.bf16.msra.mxu0 %v610
    %2271 = vmatprep.subr.bf16.mxu0 0
    %2272 = vmatpush1.bf16.msra.mxu0 %v611
    %2273 = vmatprep.subr.bf16.mxu0 0
    %2274 = vmatpush1.bf16.msra.mxu0 %v612
    %2275 = vmatprep.subr.bf16.mxu0 0
    %2276 = vmatpush1.bf16.msra.mxu0 %v613
    %2277 = vmatprep.subr.bf16.mxu0 0
    %2278 = vmatpush1.bf16.msra.mxu0 %v614
    %2279 = vmatprep.mubr.bf16.mxu0 %v2240
    %2280 = vmatmul.mubr.bf16.gmra.mrb[0].mxu0 %v2239
    %v2281 = vpop.f32.mrb[0].mxu0
    %v2282 = vadd.f32 %v292, %v2281
    %v2283 = vpop.f32.mrb[0].mxu0
    %v2284 = vpop.f32.mrb[0].mxu0
    %v2285 = vpop.f32.mrb[0].mxu0
    %2286 = vdwg.mxu0
    %2287 = vmatprep.subr.bf16.mxu0 0
    %2288 = vmatpush1.bf16.msra.mxu0 %v615
    %2289 = vmatprep.subr.bf16.mxu0 0
    %2290 = vmatpush1.bf16.msra.mxu0 %v616
    %2291 = vmatprep.subr.bf16.mxu0 0
    %2292 = vmatpush1.bf16.msra.mxu0 %v617
    %2293 = vmatprep.subr.bf16.mxu0 0
    %2294 = vmatpush1.bf16.msra.mxu0 %v618
    %2295 = vmatprep.subr.bf16.mxu0 0
    %2296 = vmatpush1.bf16.msra.mxu0 %v619
    %2297 = vmatprep.subr.bf16.mxu0 0
    %2298 = vmatpush1.bf16.msra.mxu0 %v620
    %2299 = vmatprep.subr.bf16.mxu0 0
    %2300 = vmatpush1.bf16.msra.mxu0 %v621
    %2301 = vmatprep.subr.bf16.mxu0 0
    %2302 = vmatpush1.bf16.msra.mxu0 %v622
    %2303 = vmatprep.subr.bf16.mxu0 0
    %2304 = vmatpush1.bf16.msra.mxu0 %v623
    %2305 = vmatprep.subr.bf16.mxu0 0
    %2306 = vmatpush1.bf16.msra.mxu0 %v624
    %2307 = vmatprep.subr.bf16.mxu0 0
    %2308 = vmatpush1.bf16.msra.mxu0 %v625
    %2309 = vmatprep.subr.bf16.mxu0 0
    %2310 = vmatpush1.bf16.msra.mxu0 %v626
    %2311 = vmatprep.subr.bf16.mxu0 0
    %2312 = vmatpush1.bf16.msra.mxu0 %v627
    %2313 = vmatprep.subr.bf16.mxu0 0
    %2314 = vmatpush1.bf16.msra.mxu0 %v628
    %2315 = vmatprep.subr.bf16.mxu0 0
    %2316 = vmatpush1.bf16.msra.mxu0 %v629
    %2317 = vmatprep.subr.bf16.mxu0 0
    %2318 = vmatpush1.bf16.msra.mxu0 %v630
    %2319 = vmatprep.mubr.bf16.mxu0 %v2242
    %2320 = vmatmul.mubr.bf16.gmra.mrb[0].mxu0 %v2241
    %v2321 = vpop.f32.mrb[0].mxu0
    %v2322 = vadd.f32 %v2282, %v2321
    %v2323 = vpop.f32.mrb[0].mxu0
    %v2324 = vpop.f32.mrb[0].mxu0
    %v2325 = vpop.f32.mrb[0].mxu0
    %2326 = vdwg.mxu0
    %2327 = vmatprep.subr.bf16.mxu0 0
    %2328 = vmatpush1.bf16.msra.mxu0 %v631
    %2329 = vmatprep.subr.bf16.mxu0 0
    %2330 = vmatpush1.bf16.msra.mxu0 %v632
    %2331 = vmatprep.subr.bf16.mxu0 0
    %2332 = vmatpush1.bf16.msra.mxu0 %v633
    %2333 = vmatprep.subr.bf16.mxu0 0
    %2334 = vmatpush1.bf16.msra.mxu0 %v634
    %2335 = vmatprep.subr.bf16.mxu0 0
    %2336 = vmatpush1.bf16.msra.mxu0 %v635
    %2337 = vmatprep.subr.bf16.mxu0 0
    %2338 = vmatpush1.bf16.msra.mxu0 %v636
    %2339 = vmatprep.subr.bf16.mxu0 0
    %2340 = vmatpush1.bf16.msra.mxu0 %v637
    %2341 = vmatprep.subr.bf16.mxu0 0
    %2342 = vmatpush1.bf16.msra.mxu0 %v638
    %2343 = vmatprep.subr.bf16.mxu0 0
    %2344 = vmatpush1.bf16.msra.mxu0 %v639
    %2345 = vmatprep.subr.bf16.mxu0 0
    %2346 = vmatpush1.bf16.msra.mxu0 %v640
    %2347 = vmatprep.subr.bf16.mxu0 0
    %2348 = vmatpush1.bf16.msra.mxu0 %v641
    %2349 = vmatprep.subr.bf16.mxu0 0
    %2350 = vmatpush1.bf16.msra.mxu0 %v642
    %2351 = vmatprep.subr.bf16.mxu0 0
    %2352 = vmatpush1.bf16.msra.mxu0 %v643
    %2353 = vmatprep.subr.bf16.mxu0 0
    %2354 = vmatpush1.bf16.msra.mxu0 %v644
    %2355 = vmatprep.subr.bf16.mxu0 0
    %2356 = vmatpush1.bf16.msra.mxu0 %v645
    %2357 = vmatprep.subr.bf16.mxu0 0
    %2358 = vmatpush1.bf16.msra.mxu0 %v646
    %2359 = vmatprep.mubr.bf16.mxu0 %v2244
    %2360 = vmatmul.mubr.bf16.gmra.mrb[0].mxu0 %v2243
    %v2361 = vpop.f32.mrb[0].mxu0
    %v2362 = vadd.f32 %v2322, %v2361
    %v2363 = vpop.f32.mrb[0].mxu0
    %v2364 = vpop.f32.mrb[0].mxu0
    %v2365 = vpop.f32.mrb[0].mxu0
    %2366 = vdwg.mxu0
    %2367 = vmatprep.subr.bf16.mxu0 0
    %2368 = vmatpush1.bf16.msra.mxu0 %v647
    %2369 = vmatprep.subr.bf16.mxu0 0
    %2370 = vmatpush1.bf16.msra.mxu0 %v648
    %2371 = vmatprep.subr.bf16.mxu0 0
    %2372 = vmatpush1.bf16.msra.mxu0 %v649
    %2373 = vmatprep.subr.bf16.mxu0 0
    %2374 = vmatpush1.bf16.msra.mxu0 %v650
    %2375 = vmatprep.subr.bf16.mxu0 0
    %2376 = vmatpush1.bf16.msra.mxu0 %v651
    %2377 = vmatprep.subr.bf16.mxu0 0
    %2378 = vmatpush1.bf16.msra.mxu0 %v652
    %2379 = vmatprep.subr.bf16.mxu0 0
    %2380 = vmatpush1.bf16.msra.mxu0 %v653
    %2381 = vmatprep.subr.bf16.mxu0 0
    %2382 = vmatpush1.bf16.msra.mxu0 %v654
    %2383 = vmatprep.subr.bf16.mxu0 0
    %2384 = vmatpush1.bf16.msra.mxu0 %v655
    %2385 = vmatprep.subr.bf16.mxu0 0
    %2386 = vmatpush1.bf16.msra.mxu0 %v656
    %2387 = vmatprep.subr.bf16.mxu0 0
    %2388 = vmatpush1.bf16.msra.mxu0 %v657
    %2389 = vmatprep.subr.bf16.mxu0 0
    %2390 = vmatpush1.bf16.msra.mxu0 %v658
    %2391 = vmatprep.subr.bf16.mxu0 0
    %2392 = vmatpush1.bf16.msra.mxu0 %v659
    %2393 = vmatprep.subr.bf16.mxu0 0
    %2394 = vmatpush1.bf16.msra.mxu0 %v660
    %2395 = vmatprep.subr.bf16.mxu0 0
    %2396 = vmatpush1.bf16.msra.mxu0 %v661
    %2397 = vmatprep.subr.bf16.mxu0 0
    %2398 = vmatpush1.bf16.msra.mxu0 %v662
    %2399 = vmatprep.mubr.bf16.mxu0 %v2246
    %2400 = vmatmul.mubr.bf16.gmra.mrb[0].mxu0 %v2245
    %v2401 = vpop.f32.mrb[0].mxu0
    %v2402 = vadd.f32 %v2362, %v2401
    %v2403 = vpop.f32.mrb[0].mxu0
    %v2404 = vpop.f32.mrb[0].mxu0
    %v2405 = vpop.f32.mrb[0].mxu0
    %2406 = vdwg.mxu0
    %2407 = vmax.xlane.f32.xlu0 %v2402
    %v2408 = vpop.xlane.xlu0 %2407
    %v2409 = vsub.f32 %v2402, %v2408
    %v2410 = vmul.f32 %v2409, 1.442695
    %v2411 = vpow.pop %v2410
    %2412 = vadd.xlane.f32.xlu0 %v2411
    %v2413 = vpop.xlane.xlu0 %2412
    %v2414 = vrcp.pop %v2413
    %v2415 = vmul.f32 1.0, %v2414
    %v2416 = vmul.f32 %v2411, %v2415
    %v2417 = vsub.f32 %v2416, %v302
    %v2418 = vpack.c.bf16 %v2417, %v2417
    %2419 = vmatprep.subr.bf16.mxu0 %v1092
    %2420 = vmatpush1.bf16.msra.mxu0 %v1091
    %2421 = vmatprep.subr.bf16.mxu0 %v1100
    %2422 = vmatpush1.bf16.msra.mxu0 %v1099
    %2423 = vmatprep.subr.bf16.mxu0 %v1108
    %2424 = vmatpush1.bf16.msra.mxu0 %v1107
    %2425 = vmatprep.subr.bf16.mxu0 %v1116
    %2426 = vmatpush1.bf16.msra.mxu0 %v1115
    %2427 = vmatprep.subr.bf16.mxu0 %v1124
    %2428 = vmatpush1.bf16.msra.mxu0 %v1123
    %2429 = vmatprep.subr.bf16.mxu0 %v1132
    %2430 = vmatpush1.bf16.msra.mxu0 %v1131
    %2431 = vmatprep.subr.bf16.mxu0 %v1140
    %2432 = vmatpush1.bf16.msra.mxu0 %v1139
    %2433 = vmatprep.subr.bf16.mxu0 %v1148
    %2434 = vmatpush1.bf16.msra.mxu0 %v1147
    %2435 = vmatprep.subr.bf16.mxu0 0
    %2436 = vmatpush1.bf16.msra.mxu0 0
    %2437 = vmatprep.subr.bf16.mxu0 0
    %2438 = vmatpush1.bf16.msra.mxu0 0
    %2439 = vmatprep.subr.bf16.mxu0 0
    %2440 = vmatpush1.bf16.msra.mxu0 0
    %2441 = vmatprep.subr.bf16.mxu0 0
    %2442 = vmatpush1.bf16.msra.mxu0 0
    %2443 = vmatprep.subr.bf16.mxu0 0
    %2444 = vmatpush1.bf16.msra.mxu0 0
    %2445 = vmatprep.subr.bf16.mxu0 0
    %2446 = vmatpush1.bf16.msra.mxu0 0
    %2447 = vmatprep.subr.bf16.mxu0 0
    %2448 = vmatpush1.bf16.msra.mxu0 0
    %2449 = vmatprep.subr.bf16.mxu0 0
    %2450 = vmatpush1.bf16.msra.mxu0 0
    %2451 = vmatprep.mubr.bf16.mxu0 0
    %2452 = vmatmul.mubr.bf16.gmra.mrb[0].mxu0 %v2418
    %v2453 = vpop.f32.mrb[0].mxu0
    %v2454 = vadd.f32 0.0, %v2453
    %v2455 = vpop.f32.mrb[0].mxu0
    %v2456 = vadd.f32 0.0, %v2455
    %v2457 = vpop.f32.mrb[0].mxu0
    %v2458 = vpop.f32.mrb[0].mxu0
    %2459 = vdwg.mxu0
    %2460 = vmatprep.subr.bf16.mxu0 %v1094
    %2461 = vmatpush1.bf16.msra.mxu0 %v1093
    %2462 = vmatprep.subr.bf16.mxu0 %v1102
    %2463 = vmatpush1.bf16.msra.mxu0 %v1101
    %2464 = vmatprep.subr.bf16.mxu0 %v1110
    %2465 = vmatpush1.bf16.msra.mxu0 %v1109
    %2466 = vmatprep.subr.bf16.mxu0 %v1118
    %2467 = vmatpush1.bf16.msra.mxu0 %v1117
    %2468 = vmatprep.subr.bf16.mxu0 %v1126
    %2469 = vmatpush1.bf16.msra.mxu0 %v1125
    %2470 = vmatprep.subr.bf16.mxu0 %v1134
    %2471 = vmatpush1.bf16.msra.mxu0 %v1133
    %2472 = vmatprep.subr.bf16.mxu0 %v1142
    %2473 = vmatpush1.bf16.msra.mxu0 %v1141
    %2474 = vmatprep.subr.bf16.mxu0 %v1150
    %2475 = vmatpush1.bf16.msra.mxu0 %v1149
    %2476 = vmatprep.subr.bf16.mxu0 0
    %2477 = vmatpush1.bf16.msra.mxu0 0
    %2478 = vmatprep.subr.bf16.mxu0 0
    %2479 = vmatpush1.bf16.msra.mxu0 0
    %2480 = vmatprep.subr.bf16.mxu0 0
    %2481 = vmatpush1.bf16.msra.mxu0 0
    %2482 = vmatprep.subr.bf16.mxu0 0
    %2483 = vmatpush1.bf16.msra.mxu0 0
    %2484 = vmatprep.subr.bf16.mxu0 0
    %2485 = vmatpush1.bf16.msra.mxu0 0
    %2486 = vmatprep.subr.bf16.mxu0 0
    %2487 = vmatpush1.bf16.msra.mxu0 0
    %2488 = vmatprep.subr.bf16.mxu0 0
    %2489 = vmatpush1.bf16.msra.mxu0 0
    %2490 = vmatprep.subr.bf16.mxu0 0
    %2491 = vmatpush1.bf16.msra.mxu0 0
    %2492 = vmatprep.mubr.bf16.mxu0 0
    %2493 = vmatmul.mubr.bf16.gmra.mrb[0].mxu0 %v2418
    %v2494 = vpop.f32.mrb[0].mxu0
    %v2495 = vadd.f32 0.0, %v2494
    %v2496 = vpop.f32.mrb[0].mxu0
    %v2497 = vadd.f32 0.0, %v2496
    %v2498 = vpop.f32.mrb[0].mxu0
    %v2499 = vpop.f32.mrb[0].mxu0
    %2500 = vdwg.mxu0
    %2501 = vmatprep.subr.bf16.mxu0 %v1096
    %2502 = vmatpush1.bf16.msra.mxu0 %v1095
    %2503 = vmatprep.subr.bf16.mxu0 %v1104
    %2504 = vmatpush1.bf16.msra.mxu0 %v1103
    %2505 = vmatprep.subr.bf16.mxu0 %v1112
    %2506 = vmatpush1.bf16.msra.mxu0 %v1111
    %2507 = vmatprep.subr.bf16.mxu0 %v1120
    %2508 = vmatpush1.bf16.msra.mxu0 %v1119
    %2509 = vmatprep.subr.bf16.mxu0 %v1128
    %2510 = vmatpush1.bf16.msra.mxu0 %v1127
    %2511 = vmatprep.subr.bf16.mxu0 %v1136
    %2512 = vmatpush1.bf16.msra.mxu0 %v1135
    %2513 = vmatprep.subr.bf16.mxu0 %v1144
    %2514 = vmatpush1.bf16.msra.mxu0 %v1143
    %2515 = vmatprep.subr.bf16.mxu0 %v1152
    %2516 = vmatpush1.bf16.msra.mxu0 %v1151
    %2517 = vmatprep.subr.bf16.mxu0 0
    %2518 = vmatpush1.bf16.msra.mxu0 0
    %2519 = vmatprep.subr.bf16.mxu0 0
    %2520 = vmatpush1.bf16.msra.mxu0 0
    %2521 = vmatprep.subr.bf16.mxu0 0
    %2522 = vmatpush1.bf16.msra.mxu0 0
    %2523 = vmatprep.subr.bf16.mxu0 0
    %2524 = vmatpush1.bf16.msra.mxu0 0
    %2525 = vmatprep.subr.bf16.mxu0 0
    %2526 = vmatpush1.bf16.msra.mxu0 0
    %2527 = vmatprep.subr.bf16.mxu0 0
    %2528 = vmatpush1.bf16.msra.mxu0 0
    %2529 = vmatprep.subr.bf16.mxu0 0
    %2530 = vmatpush1.bf16.msra.mxu0 0
    %2531 = vmatprep.subr.bf16.mxu0 0
    %2532 = vmatpush1.bf16.msra.mxu0 0
    %2533 = vmatprep.mubr.bf16.mxu0 0
    %2534 = vmatmul.mubr.bf16.gmra.mrb[0].mxu0 %v2418
    %v2535 = vpop.f32.mrb[0].mxu0
    %v2536 = vadd.f32 0.0, %v2535
    %v2537 = vpop.f32.mrb[0].mxu0
    %v2538 = vadd.f32 0.0, %v2537
    %v2539 = vpop.f32.mrb[0].mxu0
    %v2540 = vpop.f32.mrb[0].mxu0
    %2541 = vdwg.mxu0
    %2542 = vmatprep.subr.bf16.mxu0 %v1098
    %2543 = vmatpush1.bf16.msra.mxu0 %v1097
    %2544 = vmatprep.subr.bf16.mxu0 %v1106
    %2545 = vmatpush1.bf16.msra.mxu0 %v1105
    %2546 = vmatprep.subr.bf16.mxu0 %v1114
    %2547 = vmatpush1.bf16.msra.mxu0 %v1113
    %2548 = vmatprep.subr.bf16.mxu0 %v1122
    %2549 = vmatpush1.bf16.msra.mxu0 %v1121
    %2550 = vmatprep.subr.bf16.mxu0 %v1130
    %2551 = vmatpush1.bf16.msra.mxu0 %v1129
    %2552 = vmatprep.subr.bf16.mxu0 %v1138
    %2553 = vmatpush1.bf16.msra.mxu0 %v1137
    %2554 = vmatprep.subr.bf16.mxu0 %v1146
    %2555 = vmatpush1.bf16.msra.mxu0 %v1145
    %2556 = vmatprep.subr.bf16.mxu0 %v1154
    %2557 = vmatpush1.bf16.msra.mxu0 %v1153
    %2558 = vmatprep.subr.bf16.mxu0 0
    %2559 = vmatpush1.bf16.msra.mxu0 0
    %2560 = vmatprep.subr.bf16.mxu0 0
    %2561 = vmatpush1.bf16.msra.mxu0 0
    %2562 = vmatprep.subr.bf16.mxu0 0
    %2563 = vmatpush1.bf16.msra.mxu0 0
    %2564 = vmatprep.subr.bf16.mxu0 0
    %2565 = vmatpush1.bf16.msra.mxu0 0
    %2566 = vmatprep.subr.bf16.mxu0 0
    %2567 = vmatpush1.bf16.msra.mxu0 0
    %2568 = vmatprep.subr.bf16.mxu0 0
    %2569 = vmatpush1.bf16.msra.mxu0 0
    %2570 = vmatprep.subr.bf16.mxu0 0
    %2571 = vmatpush1.bf16.msra.mxu0 0
    %2572 = vmatprep.subr.bf16.mxu0 0
    %2573 = vmatpush1.bf16.msra.mxu0 0
    %2574 = vmatprep.mubr.bf16.mxu0 0
    %2575 = vmatmul.mubr.bf16.gmra.mrb[0].mxu0 %v2418
    %v2576 = vpop.f32.mrb[0].mxu0
    %v2577 = vadd.f32 0.0, %v2576
    %v2578 = vpop.f32.mrb[0].mxu0
    %v2579 = vadd.f32 0.0, %v2578
    %v2580 = vpop.f32.mrb[0].mxu0
    %v2581 = vpop.f32.mrb[0].mxu0
    %2582 = vdwg.mxu0
    %v2591 = vand.u32 %v2454, 2147483648
    %v2592 = vand.u32 %v2456, 2147483648
    %v2593 = vand.u32 %v2495, 2147483648
    %v2594 = vand.u32 %v2497, 2147483648
    %v2595 = vand.u32 %v2536, 2147483648
    %v2596 = vand.u32 %v2538, 2147483648
    %v2597 = vand.u32 %v2577, 2147483648
    %v2598 = vand.u32 %v2579, 2147483648
    %v2599 = vor.u32 %v2591, 1004888130
    %v2600 = vor.u32 %v2592, 1004888130
    %v2601 = vor.u32 %v2593, 1004888130
    %v2602 = vor.u32 %v2594, 1004888130
    %v2603 = vor.u32 %v2595, 1004888130
    %v2604 = vor.u32 %v2596, 1004888130
    %v2605 = vor.u32 %v2597, 1004888130
    %v2606 = vor.u32 %v2598, 1004888130
    %v2615 = vadd.f32 %v2231, %v2599
    %v2616 = vadd.f32 %v2232, %v2600
    %v2617 = vadd.f32 %v2233, %v2601
    %v2618 = vadd.f32 %v2234, %v2602
    %v2619 = vadd.f32 %v2235, %v2603
    %v2620 = vadd.f32 %v2236, %v2604
    %v2621 = vadd.f32 %v2237, %v2605
    %v2622 = vadd.f32 %v2238, %v2606
    %v2623 = vmax.f32 %v2615, %v311
    %v2624 = vmax.f32 %v2616, %v312
    %v2625 = vmax.f32 %v2617, %v313
    %v2626 = vmax.f32 %v2618, %v314
    %v2627 = vmax.f32 %v2619, %v315
    %v2628 = vmax.f32 %v2620, %v316
    %v2629 = vmax.f32 %v2621, %v317
    %v2630 = vmax.f32 %v2622, %v318
    %v2631 = vmin.f32 %v2623, %v327
    %v2632 = vmin.f32 %v2624, %v328
    %v2633 = vmin.f32 %v2625, %v329
    %v2634 = vmin.f32 %v2626, %v330
    %v2635 = vmin.f32 %v2627, %v331
    %v2636 = vmin.f32 %v2628, %v332
    %v2637 = vmin.f32 %v2629, %v333
    %v2638 = vmin.f32 %v2630, %v334
    %v2639 = vpack.c.bf16 %v2631, %v2631
    %v2640 = vpack.c.bf16 %v2632, %v2632
    %v2641 = vpack.c.bf16 %v2633, %v2633
    %v2642 = vpack.c.bf16 %v2634, %v2634
    %v2643 = vpack.c.bf16 %v2635, %v2635
    %v2644 = vpack.c.bf16 %v2636, %v2636
    %v2645 = vpack.c.bf16 %v2637, %v2637
    %v2646 = vpack.c.bf16 %v2638, %v2638
    %2647 = vmatprep.subr.bf16.mxu0 0
    %2648 = vmatpush1.bf16.msra.mxu0 %v599
    %2649 = vmatprep.subr.bf16.mxu0 0
    %2650 = vmatpush1.bf16.msra.mxu0 %v600
    %2651 = vmatprep.subr.bf16.mxu0 0
    %2652 = vmatpush1.bf16.msra.mxu0 %v601
    %2653 = vmatprep.subr.bf16.mxu0 0
    %2654 = vmatpush1.bf16.msra.mxu0 %v602
    %2655 = vmatprep.subr.bf16.mxu0 0
    %2656 = vmatpush1.bf16.msra.mxu0 %v603
    %2657 = vmatprep.subr.bf16.mxu0 0
    %2658 = vmatpush1.bf16.msra.mxu0 %v604
    %2659 = vmatprep.subr.bf16.mxu0 0
    %2660 = vmatpush1.bf16.msra.mxu0 %v605
    %2661 = vmatprep.subr.bf16.mxu0 0
    %2662 = vmatpush1.bf16.msra.mxu0 %v606
    %2663 = vmatprep.subr.bf16.mxu0 0
    %2664 = vmatpush1.bf16.msra.mxu0 %v607
    %2665 = vmatprep.subr.bf16.mxu0 0
    %2666 = vmatpush1.bf16.msra.mxu0 %v608
    %2667 = vmatprep.subr.bf16.mxu0 0
    %2668 = vmatpush1.bf16.msra.mxu0 %v609
    %2669 = vmatprep.subr.bf16.mxu0 0
    %2670 = vmatpush1.bf16.msra.mxu0 %v610
    %2671 = vmatprep.subr.bf16.mxu0 0
    %2672 = vmatpush1.bf16.msra.mxu0 %v611
    %2673 = vmatprep.subr.bf16.mxu0 0
    %2674 = vmatpush1.bf16.msra.mxu0 %v612
    %2675 = vmatprep.subr.bf16.mxu0 0
    %2676 = vmatpush1.bf16.msra.mxu0 %v613
    %2677 = vmatprep.subr.bf16.mxu0 0
    %2678 = vmatpush1.bf16.msra.mxu0 %v614
    %2679 = vmatprep.mubr.bf16.mxu0 %v2640
    %2680 = vmatmul.mubr.bf16.gmra.mrb[0].mxu0 %v2639
    %v2681 = vpop.f32.mrb[0].mxu0
    %v2682 = vadd.f32 %v292, %v2681
    %v2683 = vpop.f32.mrb[0].mxu0
    %v2684 = vpop.f32.mrb[0].mxu0
    %v2685 = vpop.f32.mrb[0].mxu0
    %2686 = vdwg.mxu0
    %2687 = vmatprep.subr.bf16.mxu0 0
    %2688 = vmatpush1.bf16.msra.mxu0 %v615
    %2689 = vmatprep.subr.bf16.mxu0 0
    %2690 = vmatpush1.bf16.msra.mxu0 %v616
    %2691 = vmatprep.subr.bf16.mxu0 0
    %2692 = vmatpush1.bf16.msra.mxu0 %v617
    %2693 = vmatprep.subr.bf16.mxu0 0
    %2694 = vmatpush1.bf16.msra.mxu0 %v618
    %2695 = vmatprep.subr.bf16.mxu0 0
    %2696 = vmatpush1.bf16.msra.mxu0 %v619
    %2697 = vmatprep.subr.bf16.mxu0 0
    %2698 = vmatpush1.bf16.msra.mxu0 %v620
    %2699 = vmatprep.subr.bf16.mxu0 0
    %2700 = vmatpush1.bf16.msra.mxu0 %v621
    %2701 = vmatprep.subr.bf16.mxu0 0
    %2702 = vmatpush1.bf16.msra.mxu0 %v622
    %2703 = vmatprep.subr.bf16.mxu0 0
    %2704 = vmatpush1.bf16.msra.mxu0 %v623
    %2705 = vmatprep.subr.bf16.mxu0 0
    %2706 = vmatpush1.bf16.msra.mxu0 %v624
    %2707 = vmatprep.subr.bf16.mxu0 0
    %2708 = vmatpush1.bf16.msra.mxu0 %v625
    %2709 = vmatprep.subr.bf16.mxu0 0
    %2710 = vmatpush1.bf16.msra.mxu0 %v626
    %2711 = vmatprep.subr.bf16.mxu0 0
    %2712 = vmatpush1.bf16.msra.mxu0 %v627
    %2713 = vmatprep.subr.bf16.mxu0 0
    %2714 = vmatpush1.bf16.msra.mxu0 %v628
    %2715 = vmatprep.subr.bf16.mxu0 0
    %2716 = vmatpush1.bf16.msra.mxu0 %v629
    %2717 = vmatprep.subr.bf16.mxu0 0
    %2718 = vmatpush1.bf16.msra.mxu0 %v630
    %2719 = vmatprep.mubr.bf16.mxu0 %v2642
    %2720 = vmatmul.mubr.bf16.gmra.mrb[0].mxu0 %v2641
    %v2721 = vpop.f32.mrb[0].mxu0
    %v2722 = vadd.f32 %v2682, %v2721
    %v2723 = vpop.f32.mrb[0].mxu0
    %v2724 = vpop.f32.mrb[0].mxu0
    %v2725 = vpop.f32.mrb[0].mxu0
    %2726 = vdwg.mxu0
    %2727 = vmatprep.subr.bf16.mxu0 0
    %2728 = vmatpush1.bf16.msra.mxu0 %v631
    %2729 = vmatprep.subr.bf16.mxu0 0
    %2730 = vmatpush1.bf16.msra.mxu0 %v632
    %2731 = vmatprep.subr.bf16.mxu0 0
    %2732 = vmatpush1.bf16.msra.mxu0 %v633
    %2733 = vmatprep.subr.bf16.mxu0 0
    %2734 = vmatpush1.bf16.msra.mxu0 %v634
    %2735 = vmatprep.subr.bf16.mxu0 0
    %2736 = vmatpush1.bf16.msra.mxu0 %v635
    %2737 = vmatprep.subr.bf16.mxu0 0
    %2738 = vmatpush1.bf16.msra.mxu0 %v636
    %2739 = vmatprep.subr.bf16.mxu0 0
    %2740 = vmatpush1.bf16.msra.mxu0 %v637
    %2741 = vmatprep.subr.bf16.mxu0 0
    %2742 = vmatpush1.bf16.msra.mxu0 %v638
    %2743 = vmatprep.subr.bf16.mxu0 0
    %2744 = vmatpush1.bf16.msra.mxu0 %v639
    %2745 = vmatprep.subr.bf16.mxu0 0
    %2746 = vmatpush1.bf16.msra.mxu0 %v640
    %2747 = vmatprep.subr.bf16.mxu0 0
    %2748 = vmatpush1.bf16.msra.mxu0 %v641
    %2749 = vmatprep.subr.bf16.mxu0 0
    %2750 = vmatpush1.bf16.msra.mxu0 %v642
    %2751 = vmatprep.subr.bf16.mxu0 0
    %2752 = vmatpush1.bf16.msra.mxu0 %v643
    %2753 = vmatprep.subr.bf16.mxu0 0
    %2754 = vmatpush1.bf16.msra.mxu0 %v644
    %2755 = vmatprep.subr.bf16.mxu0 0
    %2756 = vmatpush1.bf16.msra.mxu0 %v645
    %2757 = vmatprep.subr.bf16.mxu0 0
    %2758 = vmatpush1.bf16.msra.mxu0 %v646
    %2759 = vmatprep.mubr.bf16.mxu0 %v2644
    %2760 = vmatmul.mubr.bf16.gmra.mrb[0].mxu0 %v2643
    %v2761 = vpop.f32.mrb[0].mxu0
    %v2762 = vadd.f32 %v2722, %v2761
    %v2763 = vpop.f32.mrb[0].mxu0
    %v2764 = vpop.f32.mrb[0].mxu0
    %v2765 = vpop.f32.mrb[0].mxu0
    %2766 = vdwg.mxu0
    %2767 = vmatprep.subr.bf16.mxu0 0
    %2768 = vmatpush1.bf16.msra.mxu0 %v647
    %2769 = vmatprep.subr.bf16.mxu0 0
    %2770 = vmatpush1.bf16.msra.mxu0 %v648
    %2771 = vmatprep.subr.bf16.mxu0 0
    %2772 = vmatpush1.bf16.msra.mxu0 %v649
    %2773 = vmatprep.subr.bf16.mxu0 0
    %2774 = vmatpush1.bf16.msra.mxu0 %v650
    %2775 = vmatprep.subr.bf16.mxu0 0
    %2776 = vmatpush1.bf16.msra.mxu0 %v651
    %2777 = vmatprep.subr.bf16.mxu0 0
    %2778 = vmatpush1.bf16.msra.mxu0 %v652
    %2779 = vmatprep.subr.bf16.mxu0 0
    %2780 = vmatpush1.bf16.msra.mxu0 %v653
    %2781 = vmatprep.subr.bf16.mxu0 0
    %2782 = vmatpush1.bf16.msra.mxu0 %v654
    %2783 = vmatprep.subr.bf16.mxu0 0
    %2784 = vmatpush1.bf16.msra.mxu0 %v655
    %2785 = vmatprep.subr.bf16.mxu0 0
    %2786 = vmatpush1.bf16.msra.mxu0 %v656
    %2787 = vmatprep.subr.bf16.mxu0 0
    %2788 = vmatpush1.bf16.msra.mxu0 %v657
    %2789 = vmatprep.subr.bf16.mxu0 0
    %2790 = vmatpush1.bf16.msra.mxu0 %v658
    %2791 = vmatprep.subr.bf16.mxu0 0
    %2792 = vmatpush1.bf16.msra.mxu0 %v659
    %2793 = vmatprep.subr.bf16.mxu0 0
    %2794 = vmatpush1.bf16.msra.mxu0 %v660
    %2795 = vmatprep.subr.bf16.mxu0 0
    %2796 = vmatpush1.bf16.msra.mxu0 %v661
    %2797 = vmatprep.subr.bf16.mxu0 0
    %2798 = vmatpush1.bf16.msra.mxu0 %v662
    %2799 = vmatprep.mubr.bf16.mxu0 %v2646
    %2800 = vmatmul.mubr.bf16.gmra.mrb[0].mxu0 %v2645
    %v2801 = vpop.f32.mrb[0].mxu0
    %v2802 = vadd.f32 %v2762, %v2801
    %v2803 = vpop.f32.mrb[0].mxu0
    %v2804 = vpop.f32.mrb[0].mxu0
    %v2805 = vpop.f32.mrb[0].mxu0
    %2806 = vdwg.mxu0
    %2807 = vmax.xlane.f32.xlu0 %v2802
    %v2808 = vpop.xlane.xlu0 %2807
    %v2809 = vsub.f32 %v2802, %v2808
    %v2810 = vmul.f32 %v2809, 1.442695
    %v2811 = vpow.pop %v2810
    %2812 = vadd.xlane.f32.xlu0 %v2811
    %v2813 = vpop.xlane.xlu0 %2812
    %v2814 = vrcp.pop %v2813
    %v2815 = vmul.f32 1.0, %v2814
    %v2816 = vmul.f32 %v2811, %v2815
    %v2817 = vsub.f32 %v2816, %v302
    %v2818 = vpack.c.bf16 %v2817, %v2817
    %2819 = vmatprep.subr.bf16.mxu0 %v1092
    %2820 = vmatpush1.bf16.msra.mxu0 %v1091
    %2821 = vmatprep.subr.bf16.mxu0 %v1100
    %2822 = vmatpush1.bf16.msra.mxu0 %v1099
    %2823 = vmatprep.subr.bf16.mxu0 %v1108
    %2824 = vmatpush1.bf16.msra.mxu0 %v1107
    %2825 = vmatprep.subr.bf16.mxu0 %v1116
    %2826 = vmatpush1.bf16.msra.mxu0 %v1115
    %2827 = vmatprep.subr.bf16.mxu0 %v1124
    %2828 = vmatpush1.bf16.msra.mxu0 %v1123
    %2829 = vmatprep.subr.bf16.mxu0 %v1132
    %2830 = vmatpush1.bf16.msra.mxu0 %v1131
    %2831 = vmatprep.subr.bf16.mxu0 %v1140
    %2832 = vmatpush1.bf16.msra.mxu0 %v1139
    %2833 = vmatprep.subr.bf16.mxu0 %v1148
    %2834 = vmatpush1.bf16.msra.mxu0 %v1147
    %2835 = vmatprep.subr.bf16.mxu0 0
    %2836 = vmatpush1.bf16.msra.mxu0 0
    %2837 = vmatprep.subr.bf16.mxu0 0
    %2838 = vmatpush1.bf16.msra.mxu0 0
    %2839 = vmatprep.subr.bf16.mxu0 0
    %2840 = vmatpush1.bf16.msra.mxu0 0
    %2841 = vmatprep.subr.bf16.mxu0 0
    %2842 = vmatpush1.bf16.msra.mxu0 0
    %2843 = vmatprep.subr.bf16.mxu0 0
    %2844 = vmatpush1.bf16.msra.mxu0 0
    %2845 = vmatprep.subr.bf16.mxu0 0
    %2846 = vmatpush1.bf16.msra.mxu0 0
    %2847 = vmatprep.subr.bf16.mxu0 0
    %2848 = vmatpush1.bf16.msra.mxu0 0
    %2849 = vmatprep.subr.bf16.mxu0 0
    %2850 = vmatpush1.bf16.msra.mxu0 0
    %2851 = vmatprep.mubr.bf16.mxu0 0
    %2852 = vmatmul.mubr.bf16.gmra.mrb[0].mxu0 %v2818
    %v2853 = vpop.f32.mrb[0].mxu0
    %v2854 = vadd.f32 0.0, %v2853
    %v2855 = vpop.f32.mrb[0].mxu0
    %v2856 = vadd.f32 0.0, %v2855
    %v2857 = vpop.f32.mrb[0].mxu0
    %v2858 = vpop.f32.mrb[0].mxu0
    %2859 = vdwg.mxu0
    %2860 = vmatprep.subr.bf16.mxu0 %v1094
    %2861 = vmatpush1.bf16.msra.mxu0 %v1093
    %2862 = vmatprep.subr.bf16.mxu0 %v1102
    %2863 = vmatpush1.bf16.msra.mxu0 %v1101
    %2864 = vmatprep.subr.bf16.mxu0 %v1110
    %2865 = vmatpush1.bf16.msra.mxu0 %v1109
    %2866 = vmatprep.subr.bf16.mxu0 %v1118
    %2867 = vmatpush1.bf16.msra.mxu0 %v1117
    %2868 = vmatprep.subr.bf16.mxu0 %v1126
    %2869 = vmatpush1.bf16.msra.mxu0 %v1125
    %2870 = vmatprep.subr.bf16.mxu0 %v1134
    %2871 = vmatpush1.bf16.msra.mxu0 %v1133
    %2872 = vmatprep.subr.bf16.mxu0 %v1142
    %2873 = vmatpush1.bf16.msra.mxu0 %v1141
    %2874 = vmatprep.subr.bf16.mxu0 %v1150
    %2875 = vmatpush1.bf16.msra.mxu0 %v1149
    %2876 = vmatprep.subr.bf16.mxu0 0
    %2877 = vmatpush1.bf16.msra.mxu0 0
    %2878 = vmatprep.subr.bf16.mxu0 0
    %2879 = vmatpush1.bf16.msra.mxu0 0
    %2880 = vmatprep.subr.bf16.mxu0 0
    %2881 = vmatpush1.bf16.msra.mxu0 0
    %2882 = vmatprep.subr.bf16.mxu0 0
    %2883 = vmatpush1.bf16.msra.mxu0 0
    %2884 = vmatprep.subr.bf16.mxu0 0
    %2885 = vmatpush1.bf16.msra.mxu0 0
    %2886 = vmatprep.subr.bf16.mxu0 0
    %2887 = vmatpush1.bf16.msra.mxu0 0
    %2888 = vmatprep.subr.bf16.mxu0 0
    %2889 = vmatpush1.bf16.msra.mxu0 0
    %2890 = vmatprep.subr.bf16.mxu0 0
    %2891 = vmatpush1.bf16.msra.mxu0 0
    %2892 = vmatprep.mubr.bf16.mxu0 0
    %2893 = vmatmul.mubr.bf16.gmra.mrb[0].mxu0 %v2818
    %v2894 = vpop.f32.mrb[0].mxu0
    %v2895 = vadd.f32 0.0, %v2894
    %v2896 = vpop.f32.mrb[0].mxu0
    %v2897 = vadd.f32 0.0, %v2896
    %v2898 = vpop.f32.mrb[0].mxu0
    %v2899 = vpop.f32.mrb[0].mxu0
    %2900 = vdwg.mxu0
    %2901 = vmatprep.subr.bf16.mxu0 %v1096
    %2902 = vmatpush1.bf16.msra.mxu0 %v1095
    %2903 = vmatprep.subr.bf16.mxu0 %v1104
    %2904 = vmatpush1.bf16.msra.mxu0 %v1103
    %2905 = vmatprep.subr.bf16.mxu0 %v1112
    %2906 = vmatpush1.bf16.msra.mxu0 %v1111
    %2907 = vmatprep.subr.bf16.mxu0 %v1120
    %2908 = vmatpush1.bf16.msra.mxu0 %v1119
    %2909 = vmatprep.subr.bf16.mxu0 %v1128
    %2910 = vmatpush1.bf16.msra.mxu0 %v1127
    %2911 = vmatprep.subr.bf16.mxu0 %v1136
    %2912 = vmatpush1.bf16.msra.mxu0 %v1135
    %2913 = vmatprep.subr.bf16.mxu0 %v1144
    %2914 = vmatpush1.bf16.msra.mxu0 %v1143
    %2915 = vmatprep.subr.bf16.mxu0 %v1152
    %2916 = vmatpush1.bf16.msra.mxu0 %v1151
    %2917 = vmatprep.subr.bf16.mxu0 0
    %2918 = vmatpush1.bf16.msra.mxu0 0
    %2919 = vmatprep.subr.bf16.mxu0 0
    %2920 = vmatpush1.bf16.msra.mxu0 0
    %2921 = vmatprep.subr.bf16.mxu0 0
    %2922 = vmatpush1.bf16.msra.mxu0 0
    %2923 = vmatprep.subr.bf16.mxu0 0
    %2924 = vmatpush1.bf16.msra.mxu0 0
    %2925 = vmatprep.subr.bf16.mxu0 0
    %2926 = vmatpush1.bf16.msra.mxu0 0
    %2927 = vmatprep.subr.bf16.mxu0 0
    %2928 = vmatpush1.bf16.msra.mxu0 0
    %2929 = vmatprep.subr.bf16.mxu0 0
    %2930 = vmatpush1.bf16.msra.mxu0 0
    %2931 = vmatprep.subr.bf16.mxu0 0
    %2932 = vmatpush1.bf16.msra.mxu0 0
    %2933 = vmatprep.mubr.bf16.mxu0 0
    %2934 = vmatmul.mubr.bf16.gmra.mrb[0].mxu0 %v2818
    %v2935 = vpop.f32.mrb[0].mxu0
    %v2936 = vadd.f32 0.0, %v2935
    %v2937 = vpop.f32.mrb[0].mxu0
    %v2938 = vadd.f32 0.0, %v2937
    %v2939 = vpop.f32.mrb[0].mxu0
    %v2940 = vpop.f32.mrb[0].mxu0
    %2941 = vdwg.mxu0
    %2942 = vmatprep.subr.bf16.mxu0 %v1098
    %2943 = vmatpush1.bf16.msra.mxu0 %v1097
    %2944 = vmatprep.subr.bf16.mxu0 %v1106
    %2945 = vmatpush1.bf16.msra.mxu0 %v1105
    %2946 = vmatprep.subr.bf16.mxu0 %v1114
    %2947 = vmatpush1.bf16.msra.mxu0 %v1113
    %2948 = vmatprep.subr.bf16.mxu0 %v1122
    %2949 = vmatpush1.bf16.msra.mxu0 %v1121
    %2950 = vmatprep.subr.bf16.mxu0 %v1130
    %2951 = vmatpush1.bf16.msra.mxu0 %v1129
    %2952 = vmatprep.subr.bf16.mxu0 %v1138
    %2953 = vmatpush1.bf16.msra.mxu0 %v1137
    %2954 = vmatprep.subr.bf16.mxu0 %v1146
    %2955 = vmatpush1.bf16.msra.mxu0 %v1145
    %2956 = vmatprep.subr.bf16.mxu0 %v1154
    %2957 = vmatpush1.bf16.msra.mxu0 %v1153
    %2958 = vmatprep.subr.bf16.mxu0 0
    %2959 = vmatpush1.bf16.msra.mxu0 0
    %2960 = vmatprep.subr.bf16.mxu0 0
    %2961 = vmatpush1.bf16.msra.mxu0 0
    %2962 = vmatprep.subr.bf16.mxu0 0
    %2963 = vmatpush1.bf16.msra.mxu0 0
    %2964 = vmatprep.subr.bf16.mxu0 0
    %2965 = vmatpush1.bf16.msra.mxu0 0
    %2966 = vmatprep.subr.bf16.mxu0 0
    %2967 = vmatpush1.bf16.msra.mxu0 0
    %2968 = vmatprep.subr.bf16.mxu0 0
    %2969 = vmatpush1.bf16.msra.mxu0 0
    %2970 = vmatprep.subr.bf16.mxu0 0
    %2971 = vmatpush1.bf16.msra.mxu0 0
    %2972 = vmatprep.subr.bf16.mxu0 0
    %2973 = vmatpush1.bf16.msra.mxu0 0
    %2974 = vmatprep.mubr.bf16.mxu0 0
    %2975 = vmatmul.mubr.bf16.gmra.mrb[0].mxu0 %v2818
    %v2976 = vpop.f32.mrb[0].mxu0
    %v2977 = vadd.f32 0.0, %v2976
    %v2978 = vpop.f32.mrb[0].mxu0
    %v2979 = vadd.f32 0.0, %v2978
    %v2980 = vpop.f32.mrb[0].mxu0
    %v2981 = vpop.f32.mrb[0].mxu0
    %2982 = vdwg.mxu0
    %v2991 = vand.u32 %v2854, 2147483648
    %v2992 = vand.u32 %v2856, 2147483648
    %v2993 = vand.u32 %v2895, 2147483648
    %v2994 = vand.u32 %v2897, 2147483648
    %v2995 = vand.u32 %v2936, 2147483648
    %v2996 = vand.u32 %v2938, 2147483648
    %v2997 = vand.u32 %v2977, 2147483648
    %v2998 = vand.u32 %v2979, 2147483648
    %v2999 = vor.u32 %v2991, 1004888130
    %v3000 = vor.u32 %v2992, 1004888130
    %v3001 = vor.u32 %v2993, 1004888130
    %v3002 = vor.u32 %v2994, 1004888130
    %v3003 = vor.u32 %v2995, 1004888130
    %v3004 = vor.u32 %v2996, 1004888130
    %v3005 = vor.u32 %v2997, 1004888130
    %v3006 = vor.u32 %v2998, 1004888130
    %v3015 = vadd.f32 %v2631, %v2999
    %v3016 = vadd.f32 %v2632, %v3000
    %v3017 = vadd.f32 %v2633, %v3001
    %v3018 = vadd.f32 %v2634, %v3002
    %v3019 = vadd.f32 %v2635, %v3003
    %v3020 = vadd.f32 %v2636, %v3004
    %v3021 = vadd.f32 %v2637, %v3005
    %v3022 = vadd.f32 %v2638, %v3006
    %v3023 = vmax.f32 %v3015, %v311
    %v3024 = vmax.f32 %v3016, %v312
    %v3025 = vmax.f32 %v3017, %v313
    %v3026 = vmax.f32 %v3018, %v314
    %v3027 = vmax.f32 %v3019, %v315
    %v3028 = vmax.f32 %v3020, %v316
    %v3029 = vmax.f32 %v3021, %v317
    %v3030 = vmax.f32 %v3022, %v318
    %v3031 = vmin.f32 %v3023, %v327
    %v3032 = vmin.f32 %v3024, %v328
    %v3033 = vmin.f32 %v3025, %v329
    %v3034 = vmin.f32 %v3026, %v330
    %v3035 = vmin.f32 %v3027, %v331
    %v3036 = vmin.f32 %v3028, %v332
    %v3037 = vmin.f32 %v3029, %v333
    %v3038 = vmin.f32 %v3030, %v334
    %v3039 = vpack.c.bf16 %v3031, %v3031
    %v3040 = vpack.c.bf16 %v3032, %v3032
    %v3041 = vpack.c.bf16 %v3033, %v3033
    %v3042 = vpack.c.bf16 %v3034, %v3034
    %v3043 = vpack.c.bf16 %v3035, %v3035
    %v3044 = vpack.c.bf16 %v3036, %v3036
    %v3045 = vpack.c.bf16 %v3037, %v3037
    %v3046 = vpack.c.bf16 %v3038, %v3038
    %3047 = vmatprep.subr.bf16.mxu0 0
    %3048 = vmatpush1.bf16.msra.mxu0 %v599
    %3049 = vmatprep.subr.bf16.mxu0 0
    %3050 = vmatpush1.bf16.msra.mxu0 %v600
    %3051 = vmatprep.subr.bf16.mxu0 0
    %3052 = vmatpush1.bf16.msra.mxu0 %v601
    %3053 = vmatprep.subr.bf16.mxu0 0
    %3054 = vmatpush1.bf16.msra.mxu0 %v602
    %3055 = vmatprep.subr.bf16.mxu0 0
    %3056 = vmatpush1.bf16.msra.mxu0 %v603
    %3057 = vmatprep.subr.bf16.mxu0 0
    %3058 = vmatpush1.bf16.msra.mxu0 %v604
    %3059 = vmatprep.subr.bf16.mxu0 0
    %3060 = vmatpush1.bf16.msra.mxu0 %v605
    %3061 = vmatprep.subr.bf16.mxu0 0
    %3062 = vmatpush1.bf16.msra.mxu0 %v606
    %3063 = vmatprep.subr.bf16.mxu0 0
    %3064 = vmatpush1.bf16.msra.mxu0 %v607
    %3065 = vmatprep.subr.bf16.mxu0 0
    %3066 = vmatpush1.bf16.msra.mxu0 %v608
    %3067 = vmatprep.subr.bf16.mxu0 0
    %3068 = vmatpush1.bf16.msra.mxu0 %v609
    %3069 = vmatprep.subr.bf16.mxu0 0
    %3070 = vmatpush1.bf16.msra.mxu0 %v610
    %3071 = vmatprep.subr.bf16.mxu0 0
    %3072 = vmatpush1.bf16.msra.mxu0 %v611
    %3073 = vmatprep.subr.bf16.mxu0 0
    %3074 = vmatpush1.bf16.msra.mxu0 %v612
    %3075 = vmatprep.subr.bf16.mxu0 0
    %3076 = vmatpush1.bf16.msra.mxu0 %v613
    %3077 = vmatprep.subr.bf16.mxu0 0
    %3078 = vmatpush1.bf16.msra.mxu0 %v614
    %3079 = vmatprep.mubr.bf16.mxu0 %v3040
    %3080 = vmatmul.mubr.bf16.gmra.mrb[0].mxu0 %v3039
    %v3081 = vpop.f32.mrb[0].mxu0
    %v3082 = vadd.f32 %v292, %v3081
    %v3083 = vpop.f32.mrb[0].mxu0
    %v3084 = vpop.f32.mrb[0].mxu0
    %v3085 = vpop.f32.mrb[0].mxu0
    %3086 = vdwg.mxu0
    %3087 = vmatprep.subr.bf16.mxu0 0
    %3088 = vmatpush1.bf16.msra.mxu0 %v615
    %3089 = vmatprep.subr.bf16.mxu0 0
    %3090 = vmatpush1.bf16.msra.mxu0 %v616
    %3091 = vmatprep.subr.bf16.mxu0 0
    %3092 = vmatpush1.bf16.msra.mxu0 %v617
    %3093 = vmatprep.subr.bf16.mxu0 0
    %3094 = vmatpush1.bf16.msra.mxu0 %v618
    %3095 = vmatprep.subr.bf16.mxu0 0
    %3096 = vmatpush1.bf16.msra.mxu0 %v619
    %3097 = vmatprep.subr.bf16.mxu0 0
    %3098 = vmatpush1.bf16.msra.mxu0 %v620
    %3099 = vmatprep.subr.bf16.mxu0 0
    %3100 = vmatpush1.bf16.msra.mxu0 %v621
    %3101 = vmatprep.subr.bf16.mxu0 0
    %3102 = vmatpush1.bf16.msra.mxu0 %v622
    %3103 = vmatprep.subr.bf16.mxu0 0
    %3104 = vmatpush1.bf16.msra.mxu0 %v623
    %3105 = vmatprep.subr.bf16.mxu0 0
    %3106 = vmatpush1.bf16.msra.mxu0 %v624
    %3107 = vmatprep.subr.bf16.mxu0 0
    %3108 = vmatpush1.bf16.msra.mxu0 %v625
    %3109 = vmatprep.subr.bf16.mxu0 0
    %3110 = vmatpush1.bf16.msra.mxu0 %v626
    %3111 = vmatprep.subr.bf16.mxu0 0
    %3112 = vmatpush1.bf16.msra.mxu0 %v627
    %3113 = vmatprep.subr.bf16.mxu0 0
    %3114 = vmatpush1.bf16.msra.mxu0 %v628
    %3115 = vmatprep.subr.bf16.mxu0 0
    %3116 = vmatpush1.bf16.msra.mxu0 %v629
    %3117 = vmatprep.subr.bf16.mxu0 0
    %3118 = vmatpush1.bf16.msra.mxu0 %v630
    %3119 = vmatprep.mubr.bf16.mxu0 %v3042
    %3120 = vmatmul.mubr.bf16.gmra.mrb[0].mxu0 %v3041
    %v3121 = vpop.f32.mrb[0].mxu0
    %v3122 = vadd.f32 %v3082, %v3121
    %v3123 = vpop.f32.mrb[0].mxu0
    %v3124 = vpop.f32.mrb[0].mxu0
    %v3125 = vpop.f32.mrb[0].mxu0
    %3126 = vdwg.mxu0
    %3127 = vmatprep.subr.bf16.mxu0 0
    %3128 = vmatpush1.bf16.msra.mxu0 %v631
    %3129 = vmatprep.subr.bf16.mxu0 0
    %3130 = vmatpush1.bf16.msra.mxu0 %v632
    %3131 = vmatprep.subr.bf16.mxu0 0
    %3132 = vmatpush1.bf16.msra.mxu0 %v633
    %3133 = vmatprep.subr.bf16.mxu0 0
    %3134 = vmatpush1.bf16.msra.mxu0 %v634
    %3135 = vmatprep.subr.bf16.mxu0 0
    %3136 = vmatpush1.bf16.msra.mxu0 %v635
    %3137 = vmatprep.subr.bf16.mxu0 0
    %3138 = vmatpush1.bf16.msra.mxu0 %v636
    %3139 = vmatprep.subr.bf16.mxu0 0
    %3140 = vmatpush1.bf16.msra.mxu0 %v637
    %3141 = vmatprep.subr.bf16.mxu0 0
    %3142 = vmatpush1.bf16.msra.mxu0 %v638
    %3143 = vmatprep.subr.bf16.mxu0 0
    %3144 = vmatpush1.bf16.msra.mxu0 %v639
    %3145 = vmatprep.subr.bf16.mxu0 0
    %3146 = vmatpush1.bf16.msra.mxu0 %v640
    %3147 = vmatprep.subr.bf16.mxu0 0
    %3148 = vmatpush1.bf16.msra.mxu0 %v641
    %3149 = vmatprep.subr.bf16.mxu0 0
    %3150 = vmatpush1.bf16.msra.mxu0 %v642
    %3151 = vmatprep.subr.bf16.mxu0 0
    %3152 = vmatpush1.bf16.msra.mxu0 %v643
    %3153 = vmatprep.subr.bf16.mxu0 0
    %3154 = vmatpush1.bf16.msra.mxu0 %v644
    %3155 = vmatprep.subr.bf16.mxu0 0
    %3156 = vmatpush1.bf16.msra.mxu0 %v645
    %3157 = vmatprep.subr.bf16.mxu0 0
    %3158 = vmatpush1.bf16.msra.mxu0 %v646
    %3159 = vmatprep.mubr.bf16.mxu0 %v3044
    %3160 = vmatmul.mubr.bf16.gmra.mrb[0].mxu0 %v3043
    %v3161 = vpop.f32.mrb[0].mxu0
    %v3162 = vadd.f32 %v3122, %v3161
    %v3163 = vpop.f32.mrb[0].mxu0
    %v3164 = vpop.f32.mrb[0].mxu0
    %v3165 = vpop.f32.mrb[0].mxu0
    %3166 = vdwg.mxu0
    %3167 = vmatprep.subr.bf16.mxu0 0
    %3168 = vmatpush1.bf16.msra.mxu0 %v647
    %3169 = vmatprep.subr.bf16.mxu0 0
    %3170 = vmatpush1.bf16.msra.mxu0 %v648
    %3171 = vmatprep.subr.bf16.mxu0 0
    %3172 = vmatpush1.bf16.msra.mxu0 %v649
    %3173 = vmatprep.subr.bf16.mxu0 0
    %3174 = vmatpush1.bf16.msra.mxu0 %v650
    %3175 = vmatprep.subr.bf16.mxu0 0
    %3176 = vmatpush1.bf16.msra.mxu0 %v651
    %3177 = vmatprep.subr.bf16.mxu0 0
    %3178 = vmatpush1.bf16.msra.mxu0 %v652
    %3179 = vmatprep.subr.bf16.mxu0 0
    %3180 = vmatpush1.bf16.msra.mxu0 %v653
    %3181 = vmatprep.subr.bf16.mxu0 0
    %3182 = vmatpush1.bf16.msra.mxu0 %v654
    %3183 = vmatprep.subr.bf16.mxu0 0
    %3184 = vmatpush1.bf16.msra.mxu0 %v655
    %3185 = vmatprep.subr.bf16.mxu0 0
    %3186 = vmatpush1.bf16.msra.mxu0 %v656
    %3187 = vmatprep.subr.bf16.mxu0 0
    %3188 = vmatpush1.bf16.msra.mxu0 %v657
    %3189 = vmatprep.subr.bf16.mxu0 0
    %3190 = vmatpush1.bf16.msra.mxu0 %v658
    %3191 = vmatprep.subr.bf16.mxu0 0
    %3192 = vmatpush1.bf16.msra.mxu0 %v659
    %3193 = vmatprep.subr.bf16.mxu0 0
    %3194 = vmatpush1.bf16.msra.mxu0 %v660
    %3195 = vmatprep.subr.bf16.mxu0 0
    %3196 = vmatpush1.bf16.msra.mxu0 %v661
    %3197 = vmatprep.subr.bf16.mxu0 0
    %3198 = vmatpush1.bf16.msra.mxu0 %v662
    %3199 = vmatprep.mubr.bf16.mxu0 %v3046
    %3200 = vmatmul.mubr.bf16.gmra.mrb[0].mxu0 %v3045
    %v3201 = vpop.f32.mrb[0].mxu0
    %v3202 = vadd.f32 %v3162, %v3201
    %v3203 = vpop.f32.mrb[0].mxu0
    %v3204 = vpop.f32.mrb[0].mxu0
    %v3205 = vpop.f32.mrb[0].mxu0
    %3206 = vdwg.mxu0
    %3207 = vmax.xlane.f32.xlu0 %v3202
    %v3208 = vpop.xlane.xlu0 %3207
    %v3209 = vsub.f32 %v3202, %v3208
    %v3210 = vmul.f32 %v3209, 1.442695
    %v3211 = vpow.pop %v3210
    %3212 = vadd.xlane.f32.xlu0 %v3211
    %v3213 = vpop.xlane.xlu0 %3212
    %v3214 = vrcp.pop %v3213
    %v3215 = vmul.f32 1.0, %v3214
    %v3216 = vmul.f32 %v3211, %v3215
    %v3217 = vsub.f32 %v3216, %v302
    %v3218 = vpack.c.bf16 %v3217, %v3217
    %3219 = vmatprep.subr.bf16.mxu0 %v1092
    %3220 = vmatpush1.bf16.msra.mxu0 %v1091
    %3221 = vmatprep.subr.bf16.mxu0 %v1100
    %3222 = vmatpush1.bf16.msra.mxu0 %v1099
    %3223 = vmatprep.subr.bf16.mxu0 %v1108
    %3224 = vmatpush1.bf16.msra.mxu0 %v1107
    %3225 = vmatprep.subr.bf16.mxu0 %v1116
    %3226 = vmatpush1.bf16.msra.mxu0 %v1115
    %3227 = vmatprep.subr.bf16.mxu0 %v1124
    %3228 = vmatpush1.bf16.msra.mxu0 %v1123
    %3229 = vmatprep.subr.bf16.mxu0 %v1132
    %3230 = vmatpush1.bf16.msra.mxu0 %v1131
    %3231 = vmatprep.subr.bf16.mxu0 %v1140
    %3232 = vmatpush1.bf16.msra.mxu0 %v1139
    %3233 = vmatprep.subr.bf16.mxu0 %v1148
    %3234 = vmatpush1.bf16.msra.mxu0 %v1147
    %3235 = vmatprep.subr.bf16.mxu0 0
    %3236 = vmatpush1.bf16.msra.mxu0 0
    %3237 = vmatprep.subr.bf16.mxu0 0
    %3238 = vmatpush1.bf16.msra.mxu0 0
    %3239 = vmatprep.subr.bf16.mxu0 0
    %3240 = vmatpush1.bf16.msra.mxu0 0
    %3241 = vmatprep.subr.bf16.mxu0 0
    %3242 = vmatpush1.bf16.msra.mxu0 0
    %3243 = vmatprep.subr.bf16.mxu0 0
    %3244 = vmatpush1.bf16.msra.mxu0 0
    %3245 = vmatprep.subr.bf16.mxu0 0
    %3246 = vmatpush1.bf16.msra.mxu0 0
    %3247 = vmatprep.subr.bf16.mxu0 0
    %3248 = vmatpush1.bf16.msra.mxu0 0
    %3249 = vmatprep.subr.bf16.mxu0 0
    %3250 = vmatpush1.bf16.msra.mxu0 0
    %3251 = vmatprep.mubr.bf16.mxu0 0
    %3252 = vmatmul.mubr.bf16.gmra.mrb[0].mxu0 %v3218
    %v3253 = vpop.f32.mrb[0].mxu0
    %v3254 = vadd.f32 0.0, %v3253
    %v3255 = vpop.f32.mrb[0].mxu0
    %v3256 = vadd.f32 0.0, %v3255
    %v3257 = vpop.f32.mrb[0].mxu0
    %v3258 = vpop.f32.mrb[0].mxu0
    %3259 = vdwg.mxu0
    %3260 = vmatprep.subr.bf16.mxu0 %v1094
    %3261 = vmatpush1.bf16.msra.mxu0 %v1093
    %3262 = vmatprep.subr.bf16.mxu0 %v1102
    %3263 = vmatpush1.bf16.msra.mxu0 %v1101
    %3264 = vmatprep.subr.bf16.mxu0 %v1110
    %3265 = vmatpush1.bf16.msra.mxu0 %v1109
    %3266 = vmatprep.subr.bf16.mxu0 %v1118
    %3267 = vmatpush1.bf16.msra.mxu0 %v1117
    %3268 = vmatprep.subr.bf16.mxu0 %v1126
    %3269 = vmatpush1.bf16.msra.mxu0 %v1125
    %3270 = vmatprep.subr.bf16.mxu0 %v1134
    %3271 = vmatpush1.bf16.msra.mxu0 %v1133
    %3272 = vmatprep.subr.bf16.mxu0 %v1142
    %3273 = vmatpush1.bf16.msra.mxu0 %v1141
    %3274 = vmatprep.subr.bf16.mxu0 %v1150
    %3275 = vmatpush1.bf16.msra.mxu0 %v1149
    %3276 = vmatprep.subr.bf16.mxu0 0
    %3277 = vmatpush1.bf16.msra.mxu0 0
    %3278 = vmatprep.subr.bf16.mxu0 0
    %3279 = vmatpush1.bf16.msra.mxu0 0
    %3280 = vmatprep.subr.bf16.mxu0 0
    %3281 = vmatpush1.bf16.msra.mxu0 0
    %3282 = vmatprep.subr.bf16.mxu0 0
    %3283 = vmatpush1.bf16.msra.mxu0 0
    %3284 = vmatprep.subr.bf16.mxu0 0
    %3285 = vmatpush1.bf16.msra.mxu0 0
    %3286 = vmatprep.subr.bf16.mxu0 0
    %3287 = vmatpush1.bf16.msra.mxu0 0
    %3288 = vmatprep.subr.bf16.mxu0 0
    %3289 = vmatpush1.bf16.msra.mxu0 0
    %3290 = vmatprep.subr.bf16.mxu0 0
    %3291 = vmatpush1.bf16.msra.mxu0 0
    %3292 = vmatprep.mubr.bf16.mxu0 0
    %3293 = vmatmul.mubr.bf16.gmra.mrb[0].mxu0 %v3218
    %v3294 = vpop.f32.mrb[0].mxu0
    %v3295 = vadd.f32 0.0, %v3294
    %v3296 = vpop.f32.mrb[0].mxu0
    %v3297 = vadd.f32 0.0, %v3296
    %v3298 = vpop.f32.mrb[0].mxu0
    %v3299 = vpop.f32.mrb[0].mxu0
    %3300 = vdwg.mxu0
    %3301 = vmatprep.subr.bf16.mxu0 %v1096
    %3302 = vmatpush1.bf16.msra.mxu0 %v1095
    %3303 = vmatprep.subr.bf16.mxu0 %v1104
    %3304 = vmatpush1.bf16.msra.mxu0 %v1103
    %3305 = vmatprep.subr.bf16.mxu0 %v1112
    %3306 = vmatpush1.bf16.msra.mxu0 %v1111
    %3307 = vmatprep.subr.bf16.mxu0 %v1120
    %3308 = vmatpush1.bf16.msra.mxu0 %v1119
    %3309 = vmatprep.subr.bf16.mxu0 %v1128
    %3310 = vmatpush1.bf16.msra.mxu0 %v1127
    %3311 = vmatprep.subr.bf16.mxu0 %v1136
    %3312 = vmatpush1.bf16.msra.mxu0 %v1135
    %3313 = vmatprep.subr.bf16.mxu0 %v1144
    %3314 = vmatpush1.bf16.msra.mxu0 %v1143
    %3315 = vmatprep.subr.bf16.mxu0 %v1152
    %3316 = vmatpush1.bf16.msra.mxu0 %v1151
    %3317 = vmatprep.subr.bf16.mxu0 0
    %3318 = vmatpush1.bf16.msra.mxu0 0
    %3319 = vmatprep.subr.bf16.mxu0 0
    %3320 = vmatpush1.bf16.msra.mxu0 0
    %3321 = vmatprep.subr.bf16.mxu0 0
    %3322 = vmatpush1.bf16.msra.mxu0 0
    %3323 = vmatprep.subr.bf16.mxu0 0
    %3324 = vmatpush1.bf16.msra.mxu0 0
    %3325 = vmatprep.subr.bf16.mxu0 0
    %3326 = vmatpush1.bf16.msra.mxu0 0
    %3327 = vmatprep.subr.bf16.mxu0 0
    %3328 = vmatpush1.bf16.msra.mxu0 0
    %3329 = vmatprep.subr.bf16.mxu0 0
    %3330 = vmatpush1.bf16.msra.mxu0 0
    %3331 = vmatprep.subr.bf16.mxu0 0
    %3332 = vmatpush1.bf16.msra.mxu0 0
    %3333 = vmatprep.mubr.bf16.mxu0 0
    %3334 = vmatmul.mubr.bf16.gmra.mrb[0].mxu0 %v3218
    %v3335 = vpop.f32.mrb[0].mxu0
    %v3336 = vadd.f32 0.0, %v3335
    %v3337 = vpop.f32.mrb[0].mxu0
    %v3338 = vadd.f32 0.0, %v3337
    %v3339 = vpop.f32.mrb[0].mxu0
    %v3340 = vpop.f32.mrb[0].mxu0
    %3341 = vdwg.mxu0
    %3342 = vmatprep.subr.bf16.mxu0 %v1098
    %3343 = vmatpush1.bf16.msra.mxu0 %v1097
    %3344 = vmatprep.subr.bf16.mxu0 %v1106
    %3345 = vmatpush1.bf16.msra.mxu0 %v1105
    %3346 = vmatprep.subr.bf16.mxu0 %v1114
    %3347 = vmatpush1.bf16.msra.mxu0 %v1113
    %3348 = vmatprep.subr.bf16.mxu0 %v1122
    %3349 = vmatpush1.bf16.msra.mxu0 %v1121
    %3350 = vmatprep.subr.bf16.mxu0 %v1130
    %3351 = vmatpush1.bf16.msra.mxu0 %v1129
    %3352 = vmatprep.subr.bf16.mxu0 %v1138
    %3353 = vmatpush1.bf16.msra.mxu0 %v1137
    %3354 = vmatprep.subr.bf16.mxu0 %v1146
    %3355 = vmatpush1.bf16.msra.mxu0 %v1145
    %3356 = vmatprep.subr.bf16.mxu0 %v1154
    %3357 = vmatpush1.bf16.msra.mxu0 %v1153
    %3358 = vmatprep.subr.bf16.mxu0 0
    %3359 = vmatpush1.bf16.msra.mxu0 0
    %3360 = vmatprep.subr.bf16.mxu0 0
    %3361 = vmatpush1.bf16.msra.mxu0 0
    %3362 = vmatprep.subr.bf16.mxu0 0
    %3363 = vmatpush1.bf16.msra.mxu0 0
    %3364 = vmatprep.subr.bf16.mxu0 0
    %3365 = vmatpush1.bf16.msra.mxu0 0
    %3366 = vmatprep.subr.bf16.mxu0 0
    %3367 = vmatpush1.bf16.msra.mxu0 0
    %3368 = vmatprep.subr.bf16.mxu0 0
    %3369 = vmatpush1.bf16.msra.mxu0 0
    %3370 = vmatprep.subr.bf16.mxu0 0
    %3371 = vmatpush1.bf16.msra.mxu0 0
    %3372 = vmatprep.subr.bf16.mxu0 0
    %3373 = vmatpush1.bf16.msra.mxu0 0
    %3374 = vmatprep.mubr.bf16.mxu0 0
    %3375 = vmatmul.mubr.bf16.gmra.mrb[0].mxu0 %v3218
    %v3376 = vpop.f32.mrb[0].mxu0
    %v3377 = vadd.f32 0.0, %v3376
    %v3378 = vpop.f32.mrb[0].mxu0
    %v3379 = vadd.f32 0.0, %v3378
    %v3380 = vpop.f32.mrb[0].mxu0
    %v3381 = vpop.f32.mrb[0].mxu0
    %3382 = vdwg.mxu0
    %v3391 = vand.u32 %v3254, 2147483648
    %v3392 = vand.u32 %v3256, 2147483648
    %v3393 = vand.u32 %v3295, 2147483648
    %v3394 = vand.u32 %v3297, 2147483648
    %v3395 = vand.u32 %v3336, 2147483648
    %v3396 = vand.u32 %v3338, 2147483648
    %v3397 = vand.u32 %v3377, 2147483648
    %v3398 = vand.u32 %v3379, 2147483648
    %v3399 = vor.u32 %v3391, 1004888130
    %v3400 = vor.u32 %v3392, 1004888130
    %v3401 = vor.u32 %v3393, 1004888130
    %v3402 = vor.u32 %v3394, 1004888130
    %v3403 = vor.u32 %v3395, 1004888130
    %v3404 = vor.u32 %v3396, 1004888130
    %v3405 = vor.u32 %v3397, 1004888130
    %v3406 = vor.u32 %v3398, 1004888130
    %v3415 = vadd.f32 %v3031, %v3399
    %v3416 = vadd.f32 %v3032, %v3400
    %v3417 = vadd.f32 %v3033, %v3401
    %v3418 = vadd.f32 %v3034, %v3402
    %v3419 = vadd.f32 %v3035, %v3403
    %v3420 = vadd.f32 %v3036, %v3404
    %v3421 = vadd.f32 %v3037, %v3405
    %v3422 = vadd.f32 %v3038, %v3406
    %v3423 = vmax.f32 %v3415, %v311
    %v3424 = vmax.f32 %v3416, %v312
    %v3425 = vmax.f32 %v3417, %v313
    %v3426 = vmax.f32 %v3418, %v314
    %v3427 = vmax.f32 %v3419, %v315
    %v3428 = vmax.f32 %v3420, %v316
    %v3429 = vmax.f32 %v3421, %v317
    %v3430 = vmax.f32 %v3422, %v318
    %v3431 = vmin.f32 %v3423, %v327
    %v3432 = vmin.f32 %v3424, %v328
    %v3433 = vmin.f32 %v3425, %v329
    %v3434 = vmin.f32 %v3426, %v330
    %v3435 = vmin.f32 %v3427, %v331
    %v3436 = vmin.f32 %v3428, %v332
    %v3437 = vmin.f32 %v3429, %v333
    %v3438 = vmin.f32 %v3430, %v334
    %v3439 = vpack.c.bf16 %v3431, %v3431
    %v3440 = vpack.c.bf16 %v3432, %v3432
    %v3441 = vpack.c.bf16 %v3433, %v3433
    %v3442 = vpack.c.bf16 %v3434, %v3434
    %v3443 = vpack.c.bf16 %v3435, %v3435
    %v3444 = vpack.c.bf16 %v3436, %v3436
    %v3445 = vpack.c.bf16 %v3437, %v3437
    %v3446 = vpack.c.bf16 %v3438, %v3438
    %3447 = vmatprep.subr.bf16.mxu0 0
    %3448 = vmatpush1.bf16.msra.mxu0 %v599
    %3449 = vmatprep.subr.bf16.mxu0 0
    %3450 = vmatpush1.bf16.msra.mxu0 %v600
    %3451 = vmatprep.subr.bf16.mxu0 0
    %3452 = vmatpush1.bf16.msra.mxu0 %v601
    %3453 = vmatprep.subr.bf16.mxu0 0
    %3454 = vmatpush1.bf16.msra.mxu0 %v602
    %3455 = vmatprep.subr.bf16.mxu0 0
    %3456 = vmatpush1.bf16.msra.mxu0 %v603
    %3457 = vmatprep.subr.bf16.mxu0 0
    %3458 = vmatpush1.bf16.msra.mxu0 %v604
    %3459 = vmatprep.subr.bf16.mxu0 0
    %3460 = vmatpush1.bf16.msra.mxu0 %v605
    %3461 = vmatprep.subr.bf16.mxu0 0
    %3462 = vmatpush1.bf16.msra.mxu0 %v606
    %3463 = vmatprep.subr.bf16.mxu0 0
    %3464 = vmatpush1.bf16.msra.mxu0 %v607
    %3465 = vmatprep.subr.bf16.mxu0 0
    %3466 = vmatpush1.bf16.msra.mxu0 %v608
    %3467 = vmatprep.subr.bf16.mxu0 0
    %3468 = vmatpush1.bf16.msra.mxu0 %v609
    %3469 = vmatprep.subr.bf16.mxu0 0
    %3470 = vmatpush1.bf16.msra.mxu0 %v610
    %3471 = vmatprep.subr.bf16.mxu0 0
    %3472 = vmatpush1.bf16.msra.mxu0 %v611
    %3473 = vmatprep.subr.bf16.mxu0 0
    %3474 = vmatpush1.bf16.msra.mxu0 %v612
    %3475 = vmatprep.subr.bf16.mxu0 0
    %3476 = vmatpush1.bf16.msra.mxu0 %v613
    %3477 = vmatprep.subr.bf16.mxu0 0
    %3478 = vmatpush1.bf16.msra.mxu0 %v614
    %3479 = vmatprep.mubr.bf16.mxu0 %v3440
    %3480 = vmatmul.mubr.bf16.gmra.mrb[0].mxu0 %v3439
    %v3481 = vpop.f32.mrb[0].mxu0
    %v3482 = vadd.f32 %v292, %v3481
    %v3483 = vpop.f32.mrb[0].mxu0
    %v3484 = vpop.f32.mrb[0].mxu0
    %v3485 = vpop.f32.mrb[0].mxu0
    %3486 = vdwg.mxu0
    %3487 = vmatprep.subr.bf16.mxu0 0
    %3488 = vmatpush1.bf16.msra.mxu0 %v615
    %3489 = vmatprep.subr.bf16.mxu0 0
    %3490 = vmatpush1.bf16.msra.mxu0 %v616
    %3491 = vmatprep.subr.bf16.mxu0 0
    %3492 = vmatpush1.bf16.msra.mxu0 %v617
    %3493 = vmatprep.subr.bf16.mxu0 0
    %3494 = vmatpush1.bf16.msra.mxu0 %v618
    %3495 = vmatprep.subr.bf16.mxu0 0
    %3496 = vmatpush1.bf16.msra.mxu0 %v619
    %3497 = vmatprep.subr.bf16.mxu0 0
    %3498 = vmatpush1.bf16.msra.mxu0 %v620
    %3499 = vmatprep.subr.bf16.mxu0 0
    %3500 = vmatpush1.bf16.msra.mxu0 %v621
    %3501 = vmatprep.subr.bf16.mxu0 0
    %3502 = vmatpush1.bf16.msra.mxu0 %v622
    %3503 = vmatprep.subr.bf16.mxu0 0
    %3504 = vmatpush1.bf16.msra.mxu0 %v623
    %3505 = vmatprep.subr.bf16.mxu0 0
    %3506 = vmatpush1.bf16.msra.mxu0 %v624
    %3507 = vmatprep.subr.bf16.mxu0 0
    %3508 = vmatpush1.bf16.msra.mxu0 %v625
    %3509 = vmatprep.subr.bf16.mxu0 0
    %3510 = vmatpush1.bf16.msra.mxu0 %v626
    %3511 = vmatprep.subr.bf16.mxu0 0
    %3512 = vmatpush1.bf16.msra.mxu0 %v627
    %3513 = vmatprep.subr.bf16.mxu0 0
    %3514 = vmatpush1.bf16.msra.mxu0 %v628
    %3515 = vmatprep.subr.bf16.mxu0 0
    %3516 = vmatpush1.bf16.msra.mxu0 %v629
    %3517 = vmatprep.subr.bf16.mxu0 0
    %3518 = vmatpush1.bf16.msra.mxu0 %v630
    %3519 = vmatprep.mubr.bf16.mxu0 %v3442
    %3520 = vmatmul.mubr.bf16.gmra.mrb[0].mxu0 %v3441
    %v3521 = vpop.f32.mrb[0].mxu0
    %v3522 = vadd.f32 %v3482, %v3521
    %v3523 = vpop.f32.mrb[0].mxu0
    %v3524 = vpop.f32.mrb[0].mxu0
    %v3525 = vpop.f32.mrb[0].mxu0
    %3526 = vdwg.mxu0
    %3527 = vmatprep.subr.bf16.mxu0 0
    %3528 = vmatpush1.bf16.msra.mxu0 %v631
    %3529 = vmatprep.subr.bf16.mxu0 0
    %3530 = vmatpush1.bf16.msra.mxu0 %v632
    %3531 = vmatprep.subr.bf16.mxu0 0
    %3532 = vmatpush1.bf16.msra.mxu0 %v633
    %3533 = vmatprep.subr.bf16.mxu0 0
    %3534 = vmatpush1.bf16.msra.mxu0 %v634
    %3535 = vmatprep.subr.bf16.mxu0 0
    %3536 = vmatpush1.bf16.msra.mxu0 %v635
    %3537 = vmatprep.subr.bf16.mxu0 0
    %3538 = vmatpush1.bf16.msra.mxu0 %v636
    %3539 = vmatprep.subr.bf16.mxu0 0
    %3540 = vmatpush1.bf16.msra.mxu0 %v637
    %3541 = vmatprep.subr.bf16.mxu0 0
    %3542 = vmatpush1.bf16.msra.mxu0 %v638
    %3543 = vmatprep.subr.bf16.mxu0 0
    %3544 = vmatpush1.bf16.msra.mxu0 %v639
    %3545 = vmatprep.subr.bf16.mxu0 0
    %3546 = vmatpush1.bf16.msra.mxu0 %v640
    %3547 = vmatprep.subr.bf16.mxu0 0
    %3548 = vmatpush1.bf16.msra.mxu0 %v641
    %3549 = vmatprep.subr.bf16.mxu0 0
    %3550 = vmatpush1.bf16.msra.mxu0 %v642
    %3551 = vmatprep.subr.bf16.mxu0 0
    %3552 = vmatpush1.bf16.msra.mxu0 %v643
    %3553 = vmatprep.subr.bf16.mxu0 0
    %3554 = vmatpush1.bf16.msra.mxu0 %v644
    %3555 = vmatprep.subr.bf16.mxu0 0
    %3556 = vmatpush1.bf16.msra.mxu0 %v645
    %3557 = vmatprep.subr.bf16.mxu0 0
    %3558 = vmatpush1.bf16.msra.mxu0 %v646
    %3559 = vmatprep.mubr.bf16.mxu0 %v3444
    %3560 = vmatmul.mubr.bf16.gmra.mrb[0].mxu0 %v3443
    %v3561 = vpop.f32.mrb[0].mxu0
    %v3562 = vadd.f32 %v3522, %v3561
    %v3563 = vpop.f32.mrb[0].mxu0
    %v3564 = vpop.f32.mrb[0].mxu0
    %v3565 = vpop.f32.mrb[0].mxu0
    %3566 = vdwg.mxu0
    %3567 = vmatprep.subr.bf16.mxu0 0
    %3568 = vmatpush1.bf16.msra.mxu0 %v647
    %3569 = vmatprep.subr.bf16.mxu0 0
    %3570 = vmatpush1.bf16.msra.mxu0 %v648
    %3571 = vmatprep.subr.bf16.mxu0 0
    %3572 = vmatpush1.bf16.msra.mxu0 %v649
    %3573 = vmatprep.subr.bf16.mxu0 0
    %3574 = vmatpush1.bf16.msra.mxu0 %v650
    %3575 = vmatprep.subr.bf16.mxu0 0
    %3576 = vmatpush1.bf16.msra.mxu0 %v651
    %3577 = vmatprep.subr.bf16.mxu0 0
    %3578 = vmatpush1.bf16.msra.mxu0 %v652
    %3579 = vmatprep.subr.bf16.mxu0 0
    %3580 = vmatpush1.bf16.msra.mxu0 %v653
    %3581 = vmatprep.subr.bf16.mxu0 0
    %3582 = vmatpush1.bf16.msra.mxu0 %v654
    %3583 = vmatprep.subr.bf16.mxu0 0
    %3584 = vmatpush1.bf16.msra.mxu0 %v655
    %3585 = vmatprep.subr.bf16.mxu0 0
    %3586 = vmatpush1.bf16.msra.mxu0 %v656
    %3587 = vmatprep.subr.bf16.mxu0 0
    %3588 = vmatpush1.bf16.msra.mxu0 %v657
    %3589 = vmatprep.subr.bf16.mxu0 0
    %3590 = vmatpush1.bf16.msra.mxu0 %v658
    %3591 = vmatprep.subr.bf16.mxu0 0
    %3592 = vmatpush1.bf16.msra.mxu0 %v659
    %3593 = vmatprep.subr.bf16.mxu0 0
    %3594 = vmatpush1.bf16.msra.mxu0 %v660
    %3595 = vmatprep.subr.bf16.mxu0 0
    %3596 = vmatpush1.bf16.msra.mxu0 %v661
    %3597 = vmatprep.subr.bf16.mxu0 0
    %3598 = vmatpush1.bf16.msra.mxu0 %v662
    %3599 = vmatprep.mubr.bf16.mxu0 %v3446
    %3600 = vmatmul.mubr.bf16.gmra.mrb[0].mxu0 %v3445
    %v3601 = vpop.f32.mrb[0].mxu0
    %v3602 = vadd.f32 %v3562, %v3601
    %v3603 = vpop.f32.mrb[0].mxu0
    %v3604 = vpop.f32.mrb[0].mxu0
    %v3605 = vpop.f32.mrb[0].mxu0
    %3606 = vdwg.mxu0
    %3607 = vmax.xlane.f32.xlu0 %v3602
    %v3608 = vpop.xlane.xlu0 %3607
    %v3609 = vsub.f32 %v3602, %v3608
    %v3610 = vmul.f32 %v3609, 1.442695
    %v3611 = vpow.pop %v3610
    %3612 = vadd.xlane.f32.xlu0 %v3611
    %v3613 = vpop.xlane.xlu0 %3612
    %v3614 = vrcp.pop %v3613
    %v3615 = vmul.f32 1.0, %v3614
    %v3616 = vmul.f32 %v3611, %v3615
    %v3617 = vsub.f32 %v3616, %v302
    %v3618 = vpack.c.bf16 %v3617, %v3617
    %3619 = vmatprep.subr.bf16.mxu0 %v1092
    %3620 = vmatpush1.bf16.msra.mxu0 %v1091
    %3621 = vmatprep.subr.bf16.mxu0 %v1100
    %3622 = vmatpush1.bf16.msra.mxu0 %v1099
    %3623 = vmatprep.subr.bf16.mxu0 %v1108
    %3624 = vmatpush1.bf16.msra.mxu0 %v1107
    %3625 = vmatprep.subr.bf16.mxu0 %v1116
    %3626 = vmatpush1.bf16.msra.mxu0 %v1115
    %3627 = vmatprep.subr.bf16.mxu0 %v1124
    %3628 = vmatpush1.bf16.msra.mxu0 %v1123
    %3629 = vmatprep.subr.bf16.mxu0 %v1132
    %3630 = vmatpush1.bf16.msra.mxu0 %v1131
    %3631 = vmatprep.subr.bf16.mxu0 %v1140
    %3632 = vmatpush1.bf16.msra.mxu0 %v1139
    %3633 = vmatprep.subr.bf16.mxu0 %v1148
    %3634 = vmatpush1.bf16.msra.mxu0 %v1147
    %3635 = vmatprep.subr.bf16.mxu0 0
    %3636 = vmatpush1.bf16.msra.mxu0 0
    %3637 = vmatprep.subr.bf16.mxu0 0
    %3638 = vmatpush1.bf16.msra.mxu0 0
    %3639 = vmatprep.subr.bf16.mxu0 0
    %3640 = vmatpush1.bf16.msra.mxu0 0
    %3641 = vmatprep.subr.bf16.mxu0 0
    %3642 = vmatpush1.bf16.msra.mxu0 0
    %3643 = vmatprep.subr.bf16.mxu0 0
    %3644 = vmatpush1.bf16.msra.mxu0 0
    %3645 = vmatprep.subr.bf16.mxu0 0
    %3646 = vmatpush1.bf16.msra.mxu0 0
    %3647 = vmatprep.subr.bf16.mxu0 0
    %3648 = vmatpush1.bf16.msra.mxu0 0
    %3649 = vmatprep.subr.bf16.mxu0 0
    %3650 = vmatpush1.bf16.msra.mxu0 0
    %3651 = vmatprep.mubr.bf16.mxu0 0
    %3652 = vmatmul.mubr.bf16.gmra.mrb[0].mxu0 %v3618
    %v3653 = vpop.f32.mrb[0].mxu0
    %v3654 = vadd.f32 0.0, %v3653
    %v3655 = vpop.f32.mrb[0].mxu0
    %v3656 = vadd.f32 0.0, %v3655
    %v3657 = vpop.f32.mrb[0].mxu0
    %v3658 = vpop.f32.mrb[0].mxu0
    %3659 = vdwg.mxu0
    %3660 = vmatprep.subr.bf16.mxu0 %v1094
    %3661 = vmatpush1.bf16.msra.mxu0 %v1093
    %3662 = vmatprep.subr.bf16.mxu0 %v1102
    %3663 = vmatpush1.bf16.msra.mxu0 %v1101
    %3664 = vmatprep.subr.bf16.mxu0 %v1110
    %3665 = vmatpush1.bf16.msra.mxu0 %v1109
    %3666 = vmatprep.subr.bf16.mxu0 %v1118
    %3667 = vmatpush1.bf16.msra.mxu0 %v1117
    %3668 = vmatprep.subr.bf16.mxu0 %v1126
    %3669 = vmatpush1.bf16.msra.mxu0 %v1125
    %3670 = vmatprep.subr.bf16.mxu0 %v1134
    %3671 = vmatpush1.bf16.msra.mxu0 %v1133
    %3672 = vmatprep.subr.bf16.mxu0 %v1142
    %3673 = vmatpush1.bf16.msra.mxu0 %v1141
    %3674 = vmatprep.subr.bf16.mxu0 %v1150
    %3675 = vmatpush1.bf16.msra.mxu0 %v1149
    %3676 = vmatprep.subr.bf16.mxu0 0
    %3677 = vmatpush1.bf16.msra.mxu0 0
    %3678 = vmatprep.subr.bf16.mxu0 0
    %3679 = vmatpush1.bf16.msra.mxu0 0
    %3680 = vmatprep.subr.bf16.mxu0 0
    %3681 = vmatpush1.bf16.msra.mxu0 0
    %3682 = vmatprep.subr.bf16.mxu0 0
    %3683 = vmatpush1.bf16.msra.mxu0 0
    %3684 = vmatprep.subr.bf16.mxu0 0
    %3685 = vmatpush1.bf16.msra.mxu0 0
    %3686 = vmatprep.subr.bf16.mxu0 0
    %3687 = vmatpush1.bf16.msra.mxu0 0
    %3688 = vmatprep.subr.bf16.mxu0 0
    %3689 = vmatpush1.bf16.msra.mxu0 0
    %3690 = vmatprep.subr.bf16.mxu0 0
    %3691 = vmatpush1.bf16.msra.mxu0 0
    %3692 = vmatprep.mubr.bf16.mxu0 0
    %3693 = vmatmul.mubr.bf16.gmra.mrb[0].mxu0 %v3618
    %v3694 = vpop.f32.mrb[0].mxu0
    %v3695 = vadd.f32 0.0, %v3694
    %v3696 = vpop.f32.mrb[0].mxu0
    %v3697 = vadd.f32 0.0, %v3696
    %v3698 = vpop.f32.mrb[0].mxu0
    %v3699 = vpop.f32.mrb[0].mxu0
    %3700 = vdwg.mxu0
    %3701 = vmatprep.subr.bf16.mxu0 %v1096
    %3702 = vmatpush1.bf16.msra.mxu0 %v1095
    %3703 = vmatprep.subr.bf16.mxu0 %v1104
    %3704 = vmatpush1.bf16.msra.mxu0 %v1103
    %3705 = vmatprep.subr.bf16.mxu0 %v1112
    %3706 = vmatpush1.bf16.msra.mxu0 %v1111
    %3707 = vmatprep.subr.bf16.mxu0 %v1120
    %3708 = vmatpush1.bf16.msra.mxu0 %v1119
    %3709 = vmatprep.subr.bf16.mxu0 %v1128
    %3710 = vmatpush1.bf16.msra.mxu0 %v1127
    %3711 = vmatprep.subr.bf16.mxu0 %v1136
    %3712 = vmatpush1.bf16.msra.mxu0 %v1135
    %3713 = vmatprep.subr.bf16.mxu0 %v1144
    %3714 = vmatpush1.bf16.msra.mxu0 %v1143
    %3715 = vmatprep.subr.bf16.mxu0 %v1152
    %3716 = vmatpush1.bf16.msra.mxu0 %v1151
    %3717 = vmatprep.subr.bf16.mxu0 0
    %3718 = vmatpush1.bf16.msra.mxu0 0
    %3719 = vmatprep.subr.bf16.mxu0 0
    %3720 = vmatpush1.bf16.msra.mxu0 0
    %3721 = vmatprep.subr.bf16.mxu0 0
    %3722 = vmatpush1.bf16.msra.mxu0 0
    %3723 = vmatprep.subr.bf16.mxu0 0
    %3724 = vmatpush1.bf16.msra.mxu0 0
    %3725 = vmatprep.subr.bf16.mxu0 0
    %3726 = vmatpush1.bf16.msra.mxu0 0
    %3727 = vmatprep.subr.bf16.mxu0 0
    %3728 = vmatpush1.bf16.msra.mxu0 0
    %3729 = vmatprep.subr.bf16.mxu0 0
    %3730 = vmatpush1.bf16.msra.mxu0 0
    %3731 = vmatprep.subr.bf16.mxu0 0
    %3732 = vmatpush1.bf16.msra.mxu0 0
    %3733 = vmatprep.mubr.bf16.mxu0 0
    %3734 = vmatmul.mubr.bf16.gmra.mrb[0].mxu0 %v3618
    %v3735 = vpop.f32.mrb[0].mxu0
    %v3736 = vadd.f32 0.0, %v3735
    %v3737 = vpop.f32.mrb[0].mxu0
    %v3738 = vadd.f32 0.0, %v3737
    %v3739 = vpop.f32.mrb[0].mxu0
    %v3740 = vpop.f32.mrb[0].mxu0
    %3741 = vdwg.mxu0
    %3742 = vmatprep.subr.bf16.mxu0 %v1098
    %3743 = vmatpush1.bf16.msra.mxu0 %v1097
    %3744 = vmatprep.subr.bf16.mxu0 %v1106
    %3745 = vmatpush1.bf16.msra.mxu0 %v1105
    %3746 = vmatprep.subr.bf16.mxu0 %v1114
    %3747 = vmatpush1.bf16.msra.mxu0 %v1113
    %3748 = vmatprep.subr.bf16.mxu0 %v1122
    %3749 = vmatpush1.bf16.msra.mxu0 %v1121
    %3750 = vmatprep.subr.bf16.mxu0 %v1130
    %3751 = vmatpush1.bf16.msra.mxu0 %v1129
    %3752 = vmatprep.subr.bf16.mxu0 %v1138
    %3753 = vmatpush1.bf16.msra.mxu0 %v1137
    %3754 = vmatprep.subr.bf16.mxu0 %v1146
    %3755 = vmatpush1.bf16.msra.mxu0 %v1145
    %3756 = vmatprep.subr.bf16.mxu0 %v1154
    %3757 = vmatpush1.bf16.msra.mxu0 %v1153
    %3758 = vmatprep.subr.bf16.mxu0 0
    %3759 = vmatpush1.bf16.msra.mxu0 0
    %3760 = vmatprep.subr.bf16.mxu0 0
    %3761 = vmatpush1.bf16.msra.mxu0 0
    %3762 = vmatprep.subr.bf16.mxu0 0
    %3763 = vmatpush1.bf16.msra.mxu0 0
    %3764 = vmatprep.subr.bf16.mxu0 0
    %3765 = vmatpush1.bf16.msra.mxu0 0
    %3766 = vmatprep.subr.bf16.mxu0 0
    %3767 = vmatpush1.bf16.msra.mxu0 0
    %3768 = vmatprep.subr.bf16.mxu0 0
    %3769 = vmatpush1.bf16.msra.mxu0 0
    %3770 = vmatprep.subr.bf16.mxu0 0
    %3771 = vmatpush1.bf16.msra.mxu0 0
    %3772 = vmatprep.subr.bf16.mxu0 0
    %3773 = vmatpush1.bf16.msra.mxu0 0
    %3774 = vmatprep.mubr.bf16.mxu0 0
    %3775 = vmatmul.mubr.bf16.gmra.mrb[0].mxu0 %v3618
    %v3776 = vpop.f32.mrb[0].mxu0
    %v3777 = vadd.f32 0.0, %v3776
    %v3778 = vpop.f32.mrb[0].mxu0
    %v3779 = vadd.f32 0.0, %v3778
    %v3780 = vpop.f32.mrb[0].mxu0
    %v3781 = vpop.f32.mrb[0].mxu0
    %3782 = vdwg.mxu0
    %v3791 = vand.u32 %v3654, 2147483648
    %v3792 = vand.u32 %v3656, 2147483648
    %v3793 = vand.u32 %v3695, 2147483648
    %v3794 = vand.u32 %v3697, 2147483648
    %v3795 = vand.u32 %v3736, 2147483648
    %v3796 = vand.u32 %v3738, 2147483648
    %v3797 = vand.u32 %v3777, 2147483648
    %v3798 = vand.u32 %v3779, 2147483648
    %v3799 = vor.u32 %v3791, 1004888130
    %v3800 = vor.u32 %v3792, 1004888130
    %v3801 = vor.u32 %v3793, 1004888130
    %v3802 = vor.u32 %v3794, 1004888130
    %v3803 = vor.u32 %v3795, 1004888130
    %v3804 = vor.u32 %v3796, 1004888130
    %v3805 = vor.u32 %v3797, 1004888130
    %v3806 = vor.u32 %v3798, 1004888130
    %v3815 = vadd.f32 %v3431, %v3799
    %v3816 = vadd.f32 %v3432, %v3800
    %v3817 = vadd.f32 %v3433, %v3801
    %v3818 = vadd.f32 %v3434, %v3802
    %v3819 = vadd.f32 %v3435, %v3803
    %v3820 = vadd.f32 %v3436, %v3804
    %v3821 = vadd.f32 %v3437, %v3805
    %v3822 = vadd.f32 %v3438, %v3806
    %v3823 = vmax.f32 %v3815, %v311
    %v3824 = vmax.f32 %v3816, %v312
    %v3825 = vmax.f32 %v3817, %v313
    %v3826 = vmax.f32 %v3818, %v314
    %v3827 = vmax.f32 %v3819, %v315
    %v3828 = vmax.f32 %v3820, %v316
    %v3829 = vmax.f32 %v3821, %v317
    %v3830 = vmax.f32 %v3822, %v318
    %v3831 = vmin.f32 %v3823, %v327
    %v3832 = vmin.f32 %v3824, %v328
    %v3833 = vmin.f32 %v3825, %v329
    %v3834 = vmin.f32 %v3826, %v330
    %v3835 = vmin.f32 %v3827, %v331
    %v3836 = vmin.f32 %v3828, %v332
    %v3837 = vmin.f32 %v3829, %v333
    %v3838 = vmin.f32 %v3830, %v334
    %v3839 = vpack.c.bf16 %v3831, %v3831
    %v3840 = vpack.c.bf16 %v3832, %v3832
    %v3841 = vpack.c.bf16 %v3833, %v3833
    %v3842 = vpack.c.bf16 %v3834, %v3834
    %v3843 = vpack.c.bf16 %v3835, %v3835
    %v3844 = vpack.c.bf16 %v3836, %v3836
    %v3845 = vpack.c.bf16 %v3837, %v3837
    %v3846 = vpack.c.bf16 %v3838, %v3838
    %3847 = vmatprep.subr.bf16.mxu0 0
    %3848 = vmatpush1.bf16.msra.mxu0 %v599
    %3849 = vmatprep.subr.bf16.mxu0 0
    %3850 = vmatpush1.bf16.msra.mxu0 %v600
    %3851 = vmatprep.subr.bf16.mxu0 0
    %3852 = vmatpush1.bf16.msra.mxu0 %v601
    %3853 = vmatprep.subr.bf16.mxu0 0
    %3854 = vmatpush1.bf16.msra.mxu0 %v602
    %3855 = vmatprep.subr.bf16.mxu0 0
    %3856 = vmatpush1.bf16.msra.mxu0 %v603
    %3857 = vmatprep.subr.bf16.mxu0 0
    %3858 = vmatpush1.bf16.msra.mxu0 %v604
    %3859 = vmatprep.subr.bf16.mxu0 0
    %3860 = vmatpush1.bf16.msra.mxu0 %v605
    %3861 = vmatprep.subr.bf16.mxu0 0
    %3862 = vmatpush1.bf16.msra.mxu0 %v606
    %3863 = vmatprep.subr.bf16.mxu0 0
    %3864 = vmatpush1.bf16.msra.mxu0 %v607
    %3865 = vmatprep.subr.bf16.mxu0 0
    %3866 = vmatpush1.bf16.msra.mxu0 %v608
    %3867 = vmatprep.subr.bf16.mxu0 0
    %3868 = vmatpush1.bf16.msra.mxu0 %v609
    %3869 = vmatprep.subr.bf16.mxu0 0
    %3870 = vmatpush1.bf16.msra.mxu0 %v610
    %3871 = vmatprep.subr.bf16.mxu0 0
    %3872 = vmatpush1.bf16.msra.mxu0 %v611
    %3873 = vmatprep.subr.bf16.mxu0 0
    %3874 = vmatpush1.bf16.msra.mxu0 %v612
    %3875 = vmatprep.subr.bf16.mxu0 0
    %3876 = vmatpush1.bf16.msra.mxu0 %v613
    %3877 = vmatprep.subr.bf16.mxu0 0
    %3878 = vmatpush1.bf16.msra.mxu0 %v614
    %3879 = vmatprep.mubr.bf16.mxu0 %v3840
    %3880 = vmatmul.mubr.bf16.gmra.mrb[0].mxu0 %v3839
    %v3881 = vpop.f32.mrb[0].mxu0
    %v3882 = vadd.f32 %v292, %v3881
    %v3883 = vpop.f32.mrb[0].mxu0
    %v3884 = vpop.f32.mrb[0].mxu0
    %v3885 = vpop.f32.mrb[0].mxu0
    %3886 = vdwg.mxu0
    %3887 = vmatprep.subr.bf16.mxu0 0
    %3888 = vmatpush1.bf16.msra.mxu0 %v615
    %3889 = vmatprep.subr.bf16.mxu0 0
    %3890 = vmatpush1.bf16.msra.mxu0 %v616
    %3891 = vmatprep.subr.bf16.mxu0 0
    %3892 = vmatpush1.bf16.msra.mxu0 %v617
    %3893 = vmatprep.subr.bf16.mxu0 0
    %3894 = vmatpush1.bf16.msra.mxu0 %v618
    %3895 = vmatprep.subr.bf16.mxu0 0
    %3896 = vmatpush1.bf16.msra.mxu0 %v619
    %3897 = vmatprep.subr.bf16.mxu0 0
    %3898 = vmatpush1.bf16.msra.mxu0 %v620
    %3899 = vmatprep.subr.bf16.mxu0 0
    %3900 = vmatpush1.bf16.msra.mxu0 %v621
    %3901 = vmatprep.subr.bf16.mxu0 0
    %3902 = vmatpush1.bf16.msra.mxu0 %v622
    %3903 = vmatprep.subr.bf16.mxu0 0
    %3904 = vmatpush1.bf16.msra.mxu0 %v623
    %3905 = vmatprep.subr.bf16.mxu0 0
    %3906 = vmatpush1.bf16.msra.mxu0 %v624
    %3907 = vmatprep.subr.bf16.mxu0 0
    %3908 = vmatpush1.bf16.msra.mxu0 %v625
    %3909 = vmatprep.subr.bf16.mxu0 0
    %3910 = vmatpush1.bf16.msra.mxu0 %v626
    %3911 = vmatprep.subr.bf16.mxu0 0
    %3912 = vmatpush1.bf16.msra.mxu0 %v627
    %3913 = vmatprep.subr.bf16.mxu0 0
    %3914 = vmatpush1.bf16.msra.mxu0 %v628
    %3915 = vmatprep.subr.bf16.mxu0 0
    %3916 = vmatpush1.bf16.msra.mxu0 %v629
    %3917 = vmatprep.subr.bf16.mxu0 0
    %3918 = vmatpush1.bf16.msra.mxu0 %v630
    %3919 = vmatprep.mubr.bf16.mxu0 %v3842
    %3920 = vmatmul.mubr.bf16.gmra.mrb[0].mxu0 %v3841
    %v3921 = vpop.f32.mrb[0].mxu0
    %v3922 = vadd.f32 %v3882, %v3921
    %v3923 = vpop.f32.mrb[0].mxu0
    %v3924 = vpop.f32.mrb[0].mxu0
    %v3925 = vpop.f32.mrb[0].mxu0
    %3926 = vdwg.mxu0
    %3927 = vmatprep.subr.bf16.mxu0 0
    %3928 = vmatpush1.bf16.msra.mxu0 %v631
    %3929 = vmatprep.subr.bf16.mxu0 0
    %3930 = vmatpush1.bf16.msra.mxu0 %v632
    %3931 = vmatprep.subr.bf16.mxu0 0
    %3932 = vmatpush1.bf16.msra.mxu0 %v633
    %3933 = vmatprep.subr.bf16.mxu0 0
    %3934 = vmatpush1.bf16.msra.mxu0 %v634
    %3935 = vmatprep.subr.bf16.mxu0 0
    %3936 = vmatpush1.bf16.msra.mxu0 %v635
    %3937 = vmatprep.subr.bf16.mxu0 0
    %3938 = vmatpush1.bf16.msra.mxu0 %v636
    %3939 = vmatprep.subr.bf16.mxu0 0
    %3940 = vmatpush1.bf16.msra.mxu0 %v637
    %3941 = vmatprep.subr.bf16.mxu0 0
    %3942 = vmatpush1.bf16.msra.mxu0 %v638
    %3943 = vmatprep.subr.bf16.mxu0 0
    %3944 = vmatpush1.bf16.msra.mxu0 %v639
    %3945 = vmatprep.subr.bf16.mxu0 0
    %3946 = vmatpush1.bf16.msra.mxu0 %v640
    %3947 = vmatprep.subr.bf16.mxu0 0
    %3948 = vmatpush1.bf16.msra.mxu0 %v641
    %3949 = vmatprep.subr.bf16.mxu0 0
    %3950 = vmatpush1.bf16.msra.mxu0 %v642
    %3951 = vmatprep.subr.bf16.mxu0 0
    %3952 = vmatpush1.bf16.msra.mxu0 %v643
    %3953 = vmatprep.subr.bf16.mxu0 0
    %3954 = vmatpush1.bf16.msra.mxu0 %v644
    %3955 = vmatprep.subr.bf16.mxu0 0
    %3956 = vmatpush1.bf16.msra.mxu0 %v645
    %3957 = vmatprep.subr.bf16.mxu0 0
    %3958 = vmatpush1.bf16.msra.mxu0 %v646
    %3959 = vmatprep.mubr.bf16.mxu0 %v3844
    %3960 = vmatmul.mubr.bf16.gmra.mrb[0].mxu0 %v3843
    %v3961 = vpop.f32.mrb[0].mxu0
    %v3962 = vadd.f32 %v3922, %v3961
    %v3963 = vpop.f32.mrb[0].mxu0
    %v3964 = vpop.f32.mrb[0].mxu0
    %v3965 = vpop.f32.mrb[0].mxu0
    %3966 = vdwg.mxu0
    %3967 = vmatprep.subr.bf16.mxu0 0
    %3968 = vmatpush1.bf16.msra.mxu0 %v647
    %3969 = vmatprep.subr.bf16.mxu0 0
    %3970 = vmatpush1.bf16.msra.mxu0 %v648
    %3971 = vmatprep.subr.bf16.mxu0 0
    %3972 = vmatpush1.bf16.msra.mxu0 %v649
    %3973 = vmatprep.subr.bf16.mxu0 0
    %3974 = vmatpush1.bf16.msra.mxu0 %v650
    %3975 = vmatprep.subr.bf16.mxu0 0
    %3976 = vmatpush1.bf16.msra.mxu0 %v651
    %3977 = vmatprep.subr.bf16.mxu0 0
    %3978 = vmatpush1.bf16.msra.mxu0 %v652
    %3979 = vmatprep.subr.bf16.mxu0 0
    %3980 = vmatpush1.bf16.msra.mxu0 %v653
    %3981 = vmatprep.subr.bf16.mxu0 0
    %3982 = vmatpush1.bf16.msra.mxu0 %v654
    %3983 = vmatprep.subr.bf16.mxu0 0
    %3984 = vmatpush1.bf16.msra.mxu0 %v655
    %3985 = vmatprep.subr.bf16.mxu0 0
    %3986 = vmatpush1.bf16.msra.mxu0 %v656
    %3987 = vmatprep.subr.bf16.mxu0 0
    %3988 = vmatpush1.bf16.msra.mxu0 %v657
    %3989 = vmatprep.subr.bf16.mxu0 0
    %3990 = vmatpush1.bf16.msra.mxu0 %v658
    %3991 = vmatprep.subr.bf16.mxu0 0
    %3992 = vmatpush1.bf16.msra.mxu0 %v659
    %3993 = vmatprep.subr.bf16.mxu0 0
    %3994 = vmatpush1.bf16.msra.mxu0 %v660
    %3995 = vmatprep.subr.bf16.mxu0 0
    %3996 = vmatpush1.bf16.msra.mxu0 %v661
    %3997 = vmatprep.subr.bf16.mxu0 0
    %3998 = vmatpush1.bf16.msra.mxu0 %v662
    %3999 = vmatprep.mubr.bf16.mxu0 %v3846
    %4000 = vmatmul.mubr.bf16.gmra.mrb[0].mxu0 %v3845
    %v4001 = vpop.f32.mrb[0].mxu0
    %v4002 = vadd.f32 %v3962, %v4001
    %v4003 = vpop.f32.mrb[0].mxu0
    %v4004 = vpop.f32.mrb[0].mxu0
    %v4005 = vpop.f32.mrb[0].mxu0
    %4006 = vdwg.mxu0
    %4007 = vmax.xlane.f32.xlu0 %v4002
    %v4008 = vpop.xlane.xlu0 %4007
    %v4009 = vsub.f32 %v4002, %v4008
    %v4010 = vmul.f32 %v4009, 1.442695
    %v4011 = vpow.pop %v4010
    %4012 = vadd.xlane.f32.xlu0 %v4011
    %v4013 = vpop.xlane.xlu0 %4012
    %v4014 = vrcp.pop %v4013
    %v4015 = vmul.f32 1.0, %v4014
    %v4016 = vmul.f32 %v4011, %v4015
    %v4017 = vsub.f32 %v4016, %v302
    %v4018 = vpack.c.bf16 %v4017, %v4017
    %4019 = vmatprep.subr.bf16.mxu0 %v1092
    %4020 = vmatpush1.bf16.msra.mxu0 %v1091
    %4021 = vmatprep.subr.bf16.mxu0 %v1100
    %4022 = vmatpush1.bf16.msra.mxu0 %v1099
    %4023 = vmatprep.subr.bf16.mxu0 %v1108
    %4024 = vmatpush1.bf16.msra.mxu0 %v1107
    %4025 = vmatprep.subr.bf16.mxu0 %v1116
    %4026 = vmatpush1.bf16.msra.mxu0 %v1115
    %4027 = vmatprep.subr.bf16.mxu0 %v1124
    %4028 = vmatpush1.bf16.msra.mxu0 %v1123
    %4029 = vmatprep.subr.bf16.mxu0 %v1132
    %4030 = vmatpush1.bf16.msra.mxu0 %v1131
    %4031 = vmatprep.subr.bf16.mxu0 %v1140
    %4032 = vmatpush1.bf16.msra.mxu0 %v1139
    %4033 = vmatprep.subr.bf16.mxu0 %v1148
    %4034 = vmatpush1.bf16.msra.mxu0 %v1147
    %4035 = vmatprep.subr.bf16.mxu0 0
    %4036 = vmatpush1.bf16.msra.mxu0 0
    %4037 = vmatprep.subr.bf16.mxu0 0
    %4038 = vmatpush1.bf16.msra.mxu0 0
    %4039 = vmatprep.subr.bf16.mxu0 0
    %4040 = vmatpush1.bf16.msra.mxu0 0
    %4041 = vmatprep.subr.bf16.mxu0 0
    %4042 = vmatpush1.bf16.msra.mxu0 0
    %4043 = vmatprep.subr.bf16.mxu0 0
    %4044 = vmatpush1.bf16.msra.mxu0 0
    %4045 = vmatprep.subr.bf16.mxu0 0
    %4046 = vmatpush1.bf16.msra.mxu0 0
    %4047 = vmatprep.subr.bf16.mxu0 0
    %4048 = vmatpush1.bf16.msra.mxu0 0
    %4049 = vmatprep.subr.bf16.mxu0 0
    %4050 = vmatpush1.bf16.msra.mxu0 0
    %4051 = vmatprep.mubr.bf16.mxu0 0
    %4052 = vmatmul.mubr.bf16.gmra.mrb[0].mxu0 %v4018
    %v4053 = vpop.f32.mrb[0].mxu0
    %v4054 = vadd.f32 0.0, %v4053
    %v4055 = vpop.f32.mrb[0].mxu0
    %v4056 = vadd.f32 0.0, %v4055
    %v4057 = vpop.f32.mrb[0].mxu0
    %v4058 = vpop.f32.mrb[0].mxu0
    %4059 = vdwg.mxu0
    %4060 = vmatprep.subr.bf16.mxu0 %v1094
    %4061 = vmatpush1.bf16.msra.mxu0 %v1093
    %4062 = vmatprep.subr.bf16.mxu0 %v1102
    %4063 = vmatpush1.bf16.msra.mxu0 %v1101
    %4064 = vmatprep.subr.bf16.mxu0 %v1110
    %4065 = vmatpush1.bf16.msra.mxu0 %v1109
    %4066 = vmatprep.subr.bf16.mxu0 %v1118
    %4067 = vmatpush1.bf16.msra.mxu0 %v1117
    %4068 = vmatprep.subr.bf16.mxu0 %v1126
    %4069 = vmatpush1.bf16.msra.mxu0 %v1125
    %4070 = vmatprep.subr.bf16.mxu0 %v1134
    %4071 = vmatpush1.bf16.msra.mxu0 %v1133
    %4072 = vmatprep.subr.bf16.mxu0 %v1142
    %4073 = vmatpush1.bf16.msra.mxu0 %v1141
    %4074 = vmatprep.subr.bf16.mxu0 %v1150
    %4075 = vmatpush1.bf16.msra.mxu0 %v1149
    %4076 = vmatprep.subr.bf16.mxu0 0
    %4077 = vmatpush1.bf16.msra.mxu0 0
    %4078 = vmatprep.subr.bf16.mxu0 0
    %4079 = vmatpush1.bf16.msra.mxu0 0
    %4080 = vmatprep.subr.bf16.mxu0 0
    %4081 = vmatpush1.bf16.msra.mxu0 0
    %4082 = vmatprep.subr.bf16.mxu0 0
    %4083 = vmatpush1.bf16.msra.mxu0 0
    %4084 = vmatprep.subr.bf16.mxu0 0
    %4085 = vmatpush1.bf16.msra.mxu0 0
    %4086 = vmatprep.subr.bf16.mxu0 0
    %4087 = vmatpush1.bf16.msra.mxu0 0
    %4088 = vmatprep.subr.bf16.mxu0 0
    %4089 = vmatpush1.bf16.msra.mxu0 0
    %4090 = vmatprep.subr.bf16.mxu0 0
    %4091 = vmatpush1.bf16.msra.mxu0 0
    %4092 = vmatprep.mubr.bf16.mxu0 0
    %4093 = vmatmul.mubr.bf16.gmra.mrb[0].mxu0 %v4018
    %v4094 = vpop.f32.mrb[0].mxu0
    %v4095 = vadd.f32 0.0, %v4094
    %v4096 = vpop.f32.mrb[0].mxu0
    %v4097 = vadd.f32 0.0, %v4096
    %v4098 = vpop.f32.mrb[0].mxu0
    %v4099 = vpop.f32.mrb[0].mxu0
    %4100 = vdwg.mxu0
    %4101 = vmatprep.subr.bf16.mxu0 %v1096
    %4102 = vmatpush1.bf16.msra.mxu0 %v1095
    %4103 = vmatprep.subr.bf16.mxu0 %v1104
    %4104 = vmatpush1.bf16.msra.mxu0 %v1103
    %4105 = vmatprep.subr.bf16.mxu0 %v1112
    %4106 = vmatpush1.bf16.msra.mxu0 %v1111
    %4107 = vmatprep.subr.bf16.mxu0 %v1120
    %4108 = vmatpush1.bf16.msra.mxu0 %v1119
    %4109 = vmatprep.subr.bf16.mxu0 %v1128
    %4110 = vmatpush1.bf16.msra.mxu0 %v1127
    %4111 = vmatprep.subr.bf16.mxu0 %v1136
    %4112 = vmatpush1.bf16.msra.mxu0 %v1135
    %4113 = vmatprep.subr.bf16.mxu0 %v1144
    %4114 = vmatpush1.bf16.msra.mxu0 %v1143
    %4115 = vmatprep.subr.bf16.mxu0 %v1152
    %4116 = vmatpush1.bf16.msra.mxu0 %v1151
    %4117 = vmatprep.subr.bf16.mxu0 0
    %4118 = vmatpush1.bf16.msra.mxu0 0
    %4119 = vmatprep.subr.bf16.mxu0 0
    %4120 = vmatpush1.bf16.msra.mxu0 0
    %4121 = vmatprep.subr.bf16.mxu0 0
    %4122 = vmatpush1.bf16.msra.mxu0 0
    %4123 = vmatprep.subr.bf16.mxu0 0
    %4124 = vmatpush1.bf16.msra.mxu0 0
    %4125 = vmatprep.subr.bf16.mxu0 0
    %4126 = vmatpush1.bf16.msra.mxu0 0
    %4127 = vmatprep.subr.bf16.mxu0 0
    %4128 = vmatpush1.bf16.msra.mxu0 0
    %4129 = vmatprep.subr.bf16.mxu0 0
    %4130 = vmatpush1.bf16.msra.mxu0 0
    %4131 = vmatprep.subr.bf16.mxu0 0
    %4132 = vmatpush1.bf16.msra.mxu0 0
    %4133 = vmatprep.mubr.bf16.mxu0 0
    %4134 = vmatmul.mubr.bf16.gmra.mrb[0].mxu0 %v4018
    %v4135 = vpop.f32.mrb[0].mxu0
    %v4136 = vadd.f32 0.0, %v4135
    %v4137 = vpop.f32.mrb[0].mxu0
    %v4138 = vadd.f32 0.0, %v4137
    %v4139 = vpop.f32.mrb[0].mxu0
    %v4140 = vpop.f32.mrb[0].mxu0
    %4141 = vdwg.mxu0
    %4142 = vmatprep.subr.bf16.mxu0 %v1098
    %4143 = vmatpush1.bf16.msra.mxu0 %v1097
    %4144 = vmatprep.subr.bf16.mxu0 %v1106
    %4145 = vmatpush1.bf16.msra.mxu0 %v1105
    %4146 = vmatprep.subr.bf16.mxu0 %v1114
    %4147 = vmatpush1.bf16.msra.mxu0 %v1113
    %4148 = vmatprep.subr.bf16.mxu0 %v1122
    %4149 = vmatpush1.bf16.msra.mxu0 %v1121
    %4150 = vmatprep.subr.bf16.mxu0 %v1130
    %4151 = vmatpush1.bf16.msra.mxu0 %v1129
    %4152 = vmatprep.subr.bf16.mxu0 %v1138
    %4153 = vmatpush1.bf16.msra.mxu0 %v1137
    %4154 = vmatprep.subr.bf16.mxu0 %v1146
    %4155 = vmatpush1.bf16.msra.mxu0 %v1145
    %4156 = vmatprep.subr.bf16.mxu0 %v1154
    %4157 = vmatpush1.bf16.msra.mxu0 %v1153
    %4158 = vmatprep.subr.bf16.mxu0 0
    %4159 = vmatpush1.bf16.msra.mxu0 0
    %4160 = vmatprep.subr.bf16.mxu0 0
    %4161 = vmatpush1.bf16.msra.mxu0 0
    %4162 = vmatprep.subr.bf16.mxu0 0
    %4163 = vmatpush1.bf16.msra.mxu0 0
    %4164 = vmatprep.subr.bf16.mxu0 0
    %4165 = vmatpush1.bf16.msra.mxu0 0
    %4166 = vmatprep.subr.bf16.mxu0 0
    %4167 = vmatpush1.bf16.msra.mxu0 0
    %4168 = vmatprep.subr.bf16.mxu0 0
    %4169 = vmatpush1.bf16.msra.mxu0 0
    %4170 = vmatprep.subr.bf16.mxu0 0
    %4171 = vmatpush1.bf16.msra.mxu0 0
    %4172 = vmatprep.subr.bf16.mxu0 0
    %4173 = vmatpush1.bf16.msra.mxu0 0
    %4174 = vmatprep.mubr.bf16.mxu0 0
    %4175 = vmatmul.mubr.bf16.gmra.mrb[0].mxu0 %v4018
    %v4176 = vpop.f32.mrb[0].mxu0
    %v4177 = vadd.f32 0.0, %v4176
    %v4178 = vpop.f32.mrb[0].mxu0
    %v4179 = vadd.f32 0.0, %v4178
    %v4180 = vpop.f32.mrb[0].mxu0
    %v4181 = vpop.f32.mrb[0].mxu0
    %4182 = vdwg.mxu0
    %v4191 = vand.u32 %v4054, 2147483648
    %v4192 = vand.u32 %v4056, 2147483648
    %v4193 = vand.u32 %v4095, 2147483648
    %v4194 = vand.u32 %v4097, 2147483648
    %v4195 = vand.u32 %v4136, 2147483648
    %v4196 = vand.u32 %v4138, 2147483648
    %v4197 = vand.u32 %v4177, 2147483648
    %v4198 = vand.u32 %v4179, 2147483648
    %v4199 = vor.u32 %v4191, 1004888130
    %v4200 = vor.u32 %v4192, 1004888130
    %v4201 = vor.u32 %v4193, 1004888130
    %v4202 = vor.u32 %v4194, 1004888130
    %v4203 = vor.u32 %v4195, 1004888130
    %v4204 = vor.u32 %v4196, 1004888130
    %v4205 = vor.u32 %v4197, 1004888130
    %v4206 = vor.u32 %v4198, 1004888130
    %v4215 = vadd.f32 %v3831, %v4199
    %v4216 = vadd.f32 %v3832, %v4200
    %v4217 = vadd.f32 %v3833, %v4201
    %v4218 = vadd.f32 %v3834, %v4202
    %v4219 = vadd.f32 %v3835, %v4203
    %v4220 = vadd.f32 %v3836, %v4204
    %v4221 = vadd.f32 %v3837, %v4205
    %v4222 = vadd.f32 %v3838, %v4206
    %v4223 = vmax.f32 %v4215, %v311
    %v4224 = vmax.f32 %v4216, %v312
    %v4225 = vmax.f32 %v4217, %v313
    %v4226 = vmax.f32 %v4218, %v314
    %v4227 = vmax.f32 %v4219, %v315
    %v4228 = vmax.f32 %v4220, %v316
    %v4229 = vmax.f32 %v4221, %v317
    %v4230 = vmax.f32 %v4222, %v318
    %v4231 = vmin.f32 %v4223, %v327
    %v4232 = vmin.f32 %v4224, %v328
    %v4233 = vmin.f32 %v4225, %v329
    %v4234 = vmin.f32 %v4226, %v330
    %v4235 = vmin.f32 %v4227, %v331
    %v4236 = vmin.f32 %v4228, %v332
    %v4237 = vmin.f32 %v4229, %v333
    %v4238 = vmin.f32 %v4230, %v334
    %v4239 = vpack.c.bf16 %v4231, %v4231
    %v4240 = vpack.c.bf16 %v4232, %v4232
    %v4241 = vpack.c.bf16 %v4233, %v4233
    %v4242 = vpack.c.bf16 %v4234, %v4234
    %v4243 = vpack.c.bf16 %v4235, %v4235
    %v4244 = vpack.c.bf16 %v4236, %v4236
    %v4245 = vpack.c.bf16 %v4237, %v4237
    %v4246 = vpack.c.bf16 %v4238, %v4238
    %4247 = vmatprep.subr.bf16.mxu0 0
    %4248 = vmatpush1.bf16.msra.mxu0 %v599
    %4249 = vmatprep.subr.bf16.mxu0 0
    %4250 = vmatpush1.bf16.msra.mxu0 %v600
    %4251 = vmatprep.subr.bf16.mxu0 0
    %4252 = vmatpush1.bf16.msra.mxu0 %v601
    %4253 = vmatprep.subr.bf16.mxu0 0
    %4254 = vmatpush1.bf16.msra.mxu0 %v602
    %4255 = vmatprep.subr.bf16.mxu0 0
    %4256 = vmatpush1.bf16.msra.mxu0 %v603
    %4257 = vmatprep.subr.bf16.mxu0 0
    %4258 = vmatpush1.bf16.msra.mxu0 %v604
    %4259 = vmatprep.subr.bf16.mxu0 0
    %4260 = vmatpush1.bf16.msra.mxu0 %v605
    %4261 = vmatprep.subr.bf16.mxu0 0
    %4262 = vmatpush1.bf16.msra.mxu0 %v606
    %4263 = vmatprep.subr.bf16.mxu0 0
    %4264 = vmatpush1.bf16.msra.mxu0 %v607
    %4265 = vmatprep.subr.bf16.mxu0 0
    %4266 = vmatpush1.bf16.msra.mxu0 %v608
    %4267 = vmatprep.subr.bf16.mxu0 0
    %4268 = vmatpush1.bf16.msra.mxu0 %v609
    %4269 = vmatprep.subr.bf16.mxu0 0
    %4270 = vmatpush1.bf16.msra.mxu0 %v610
    %4271 = vmatprep.subr.bf16.mxu0 0
    %4272 = vmatpush1.bf16.msra.mxu0 %v611
    %4273 = vmatprep.subr.bf16.mxu0 0
    %4274 = vmatpush1.bf16.msra.mxu0 %v612
    %4275 = vmatprep.subr.bf16.mxu0 0
    %4276 = vmatpush1.bf16.msra.mxu0 %v613
    %4277 = vmatprep.subr.bf16.mxu0 0
    %4278 = vmatpush1.bf16.msra.mxu0 %v614
    %4279 = vmatprep.mubr.bf16.mxu0 %v4240
    %4280 = vmatmul.mubr.bf16.gmra.mrb[0].mxu0 %v4239
    %v4281 = vpop.f32.mrb[0].mxu0
    %v4282 = vadd.f32 %v292, %v4281
    %v4283 = vpop.f32.mrb[0].mxu0
    %v4284 = vpop.f32.mrb[0].mxu0
    %v4285 = vpop.f32.mrb[0].mxu0
    %4286 = vdwg.mxu0
    %4287 = vmatprep.subr.bf16.mxu0 0
    %4288 = vmatpush1.bf16.msra.mxu0 %v615
    %4289 = vmatprep.subr.bf16.mxu0 0
    %4290 = vmatpush1.bf16.msra.mxu0 %v616
    %4291 = vmatprep.subr.bf16.mxu0 0
    %4292 = vmatpush1.bf16.msra.mxu0 %v617
    %4293 = vmatprep.subr.bf16.mxu0 0
    %4294 = vmatpush1.bf16.msra.mxu0 %v618
    %4295 = vmatprep.subr.bf16.mxu0 0
    %4296 = vmatpush1.bf16.msra.mxu0 %v619
    %4297 = vmatprep.subr.bf16.mxu0 0
    %4298 = vmatpush1.bf16.msra.mxu0 %v620
    %4299 = vmatprep.subr.bf16.mxu0 0
    %4300 = vmatpush1.bf16.msra.mxu0 %v621
    %4301 = vmatprep.subr.bf16.mxu0 0
    %4302 = vmatpush1.bf16.msra.mxu0 %v622
    %4303 = vmatprep.subr.bf16.mxu0 0
    %4304 = vmatpush1.bf16.msra.mxu0 %v623
    %4305 = vmatprep.subr.bf16.mxu0 0
    %4306 = vmatpush1.bf16.msra.mxu0 %v624
    %4307 = vmatprep.subr.bf16.mxu0 0
    %4308 = vmatpush1.bf16.msra.mxu0 %v625
    %4309 = vmatprep.subr.bf16.mxu0 0
    %4310 = vmatpush1.bf16.msra.mxu0 %v626
    %4311 = vmatprep.subr.bf16.mxu0 0
    %4312 = vmatpush1.bf16.msra.mxu0 %v627
    %4313 = vmatprep.subr.bf16.mxu0 0
    %4314 = vmatpush1.bf16.msra.mxu0 %v628
    %4315 = vmatprep.subr.bf16.mxu0 0
    %4316 = vmatpush1.bf16.msra.mxu0 %v629
    %4317 = vmatprep.subr.bf16.mxu0 0
    %4318 = vmatpush1.bf16.msra.mxu0 %v630
    %4319 = vmatprep.mubr.bf16.mxu0 %v4242
    %4320 = vmatmul.mubr.bf16.gmra.mrb[0].mxu0 %v4241
    %v4321 = vpop.f32.mrb[0].mxu0
    %v4322 = vadd.f32 %v4282, %v4321
    %v4323 = vpop.f32.mrb[0].mxu0
    %v4324 = vpop.f32.mrb[0].mxu0
    %v4325 = vpop.f32.mrb[0].mxu0
    %4326 = vdwg.mxu0
    %4327 = vmatprep.subr.bf16.mxu0 0
    %4328 = vmatpush1.bf16.msra.mxu0 %v631
    %4329 = vmatprep.subr.bf16.mxu0 0
    %4330 = vmatpush1.bf16.msra.mxu0 %v632
    %4331 = vmatprep.subr.bf16.mxu0 0
    %4332 = vmatpush1.bf16.msra.mxu0 %v633
    %4333 = vmatprep.subr.bf16.mxu0 0
    %4334 = vmatpush1.bf16.msra.mxu0 %v634
    %4335 = vmatprep.subr.bf16.mxu0 0
    %4336 = vmatpush1.bf16.msra.mxu0 %v635
    %4337 = vmatprep.subr.bf16.mxu0 0
    %4338 = vmatpush1.bf16.msra.mxu0 %v636
    %4339 = vmatprep.subr.bf16.mxu0 0
    %4340 = vmatpush1.bf16.msra.mxu0 %v637
    %4341 = vmatprep.subr.bf16.mxu0 0
    %4342 = vmatpush1.bf16.msra.mxu0 %v638
    %4343 = vmatprep.subr.bf16.mxu0 0
    %4344 = vmatpush1.bf16.msra.mxu0 %v639
    %4345 = vmatprep.subr.bf16.mxu0 0
    %4346 = vmatpush1.bf16.msra.mxu0 %v640
    %4347 = vmatprep.subr.bf16.mxu0 0
    %4348 = vmatpush1.bf16.msra.mxu0 %v641
    %4349 = vmatprep.subr.bf16.mxu0 0
    %4350 = vmatpush1.bf16.msra.mxu0 %v642
    %4351 = vmatprep.subr.bf16.mxu0 0
    %4352 = vmatpush1.bf16.msra.mxu0 %v643
    %4353 = vmatprep.subr.bf16.mxu0 0
    %4354 = vmatpush1.bf16.msra.mxu0 %v644
    %4355 = vmatprep.subr.bf16.mxu0 0
    %4356 = vmatpush1.bf16.msra.mxu0 %v645
    %4357 = vmatprep.subr.bf16.mxu0 0
    %4358 = vmatpush1.bf16.msra.mxu0 %v646
    %4359 = vmatprep.mubr.bf16.mxu0 %v4244
    %4360 = vmatmul.mubr.bf16.gmra.mrb[0].mxu0 %v4243
    %v4361 = vpop.f32.mrb[0].mxu0
    %v4362 = vadd.f32 %v4322, %v4361
    %v4363 = vpop.f32.mrb[0].mxu0
    %v4364 = vpop.f32.mrb[0].mxu0
    %v4365 = vpop.f32.mrb[0].mxu0
    %4366 = vdwg.mxu0
    %4367 = vmatprep.subr.bf16.mxu0 0
    %4368 = vmatpush1.bf16.msra.mxu0 %v647
    %4369 = vmatprep.subr.bf16.mxu0 0
    %4370 = vmatpush1.bf16.msra.mxu0 %v648
    %4371 = vmatprep.subr.bf16.mxu0 0
    %4372 = vmatpush1.bf16.msra.mxu0 %v649
    %4373 = vmatprep.subr.bf16.mxu0 0
    %4374 = vmatpush1.bf16.msra.mxu0 %v650
    %4375 = vmatprep.subr.bf16.mxu0 0
    %4376 = vmatpush1.bf16.msra.mxu0 %v651
    %4377 = vmatprep.subr.bf16.mxu0 0
    %4378 = vmatpush1.bf16.msra.mxu0 %v652
    %4379 = vmatprep.subr.bf16.mxu0 0
    %4380 = vmatpush1.bf16.msra.mxu0 %v653
    %4381 = vmatprep.subr.bf16.mxu0 0
    %4382 = vmatpush1.bf16.msra.mxu0 %v654
    %4383 = vmatprep.subr.bf16.mxu0 0
    %4384 = vmatpush1.bf16.msra.mxu0 %v655
    %4385 = vmatprep.subr.bf16.mxu0 0
    %4386 = vmatpush1.bf16.msra.mxu0 %v656
    %4387 = vmatprep.subr.bf16.mxu0 0
    %4388 = vmatpush1.bf16.msra.mxu0 %v657
    %4389 = vmatprep.subr.bf16.mxu0 0
    %4390 = vmatpush1.bf16.msra.mxu0 %v658
    %4391 = vmatprep.subr.bf16.mxu0 0
    %4392 = vmatpush1.bf16.msra.mxu0 %v659
    %4393 = vmatprep.subr.bf16.mxu0 0
    %4394 = vmatpush1.bf16.msra.mxu0 %v660
    %4395 = vmatprep.subr.bf16.mxu0 0
    %4396 = vmatpush1.bf16.msra.mxu0 %v661
    %4397 = vmatprep.subr.bf16.mxu0 0
    %4398 = vmatpush1.bf16.msra.mxu0 %v662
    %4399 = vmatprep.mubr.bf16.mxu0 %v4246
    %4400 = vmatmul.mubr.bf16.gmra.mrb[0].mxu0 %v4245
    %v4401 = vpop.f32.mrb[0].mxu0
    %v4402 = vadd.f32 %v4362, %v4401
    %v4403 = vpop.f32.mrb[0].mxu0
    %v4404 = vpop.f32.mrb[0].mxu0
    %v4405 = vpop.f32.mrb[0].mxu0
    %4406 = vdwg.mxu0
    %4407 = vmax.xlane.f32.xlu0 %v4402
    %v4408 = vpop.xlane.xlu0 %4407
    %v4409 = vsub.f32 %v4402, %v4408
    %v4410 = vmul.f32 %v4409, 1.442695
    %v4411 = vpow.pop %v4410
    %4412 = vadd.xlane.f32.xlu0 %v4411
    %v4413 = vpop.xlane.xlu0 %4412
    %v4414 = vrcp.pop %v4413
    %v4415 = vmul.f32 1.0, %v4414
    %v4416 = vmul.f32 %v4411, %v4415
    %v4417 = vsub.f32 %v4416, %v302
    %v4418 = vpack.c.bf16 %v4417, %v4417
    %4419 = vmatprep.subr.bf16.mxu0 %v1092
    %4420 = vmatpush1.bf16.msra.mxu0 %v1091
    %4421 = vmatprep.subr.bf16.mxu0 %v1100
    %4422 = vmatpush1.bf16.msra.mxu0 %v1099
    %4423 = vmatprep.subr.bf16.mxu0 %v1108
    %4424 = vmatpush1.bf16.msra.mxu0 %v1107
    %4425 = vmatprep.subr.bf16.mxu0 %v1116
    %4426 = vmatpush1.bf16.msra.mxu0 %v1115
    %4427 = vmatprep.subr.bf16.mxu0 %v1124
    %4428 = vmatpush1.bf16.msra.mxu0 %v1123
    %4429 = vmatprep.subr.bf16.mxu0 %v1132
    %4430 = vmatpush1.bf16.msra.mxu0 %v1131
    %4431 = vmatprep.subr.bf16.mxu0 %v1140
    %4432 = vmatpush1.bf16.msra.mxu0 %v1139
    %4433 = vmatprep.subr.bf16.mxu0 %v1148
    %4434 = vmatpush1.bf16.msra.mxu0 %v1147
    %4435 = vmatprep.subr.bf16.mxu0 0
    %4436 = vmatpush1.bf16.msra.mxu0 0
    %4437 = vmatprep.subr.bf16.mxu0 0
    %4438 = vmatpush1.bf16.msra.mxu0 0
    %4439 = vmatprep.subr.bf16.mxu0 0
    %4440 = vmatpush1.bf16.msra.mxu0 0
    %4441 = vmatprep.subr.bf16.mxu0 0
    %4442 = vmatpush1.bf16.msra.mxu0 0
    %4443 = vmatprep.subr.bf16.mxu0 0
    %4444 = vmatpush1.bf16.msra.mxu0 0
    %4445 = vmatprep.subr.bf16.mxu0 0
    %4446 = vmatpush1.bf16.msra.mxu0 0
    %4447 = vmatprep.subr.bf16.mxu0 0
    %4448 = vmatpush1.bf16.msra.mxu0 0
    %4449 = vmatprep.subr.bf16.mxu0 0
    %4450 = vmatpush1.bf16.msra.mxu0 0
    %4451 = vmatprep.mubr.bf16.mxu0 0
    %4452 = vmatmul.mubr.bf16.gmra.mrb[0].mxu0 %v4418
    %v4453 = vpop.f32.mrb[0].mxu0
    %v4454 = vadd.f32 0.0, %v4453
    %v4455 = vpop.f32.mrb[0].mxu0
    %v4456 = vadd.f32 0.0, %v4455
    %v4457 = vpop.f32.mrb[0].mxu0
    %v4458 = vpop.f32.mrb[0].mxu0
    %4459 = vdwg.mxu0
    %4460 = vmatprep.subr.bf16.mxu0 %v1094
    %4461 = vmatpush1.bf16.msra.mxu0 %v1093
    %4462 = vmatprep.subr.bf16.mxu0 %v1102
    %4463 = vmatpush1.bf16.msra.mxu0 %v1101
    %4464 = vmatprep.subr.bf16.mxu0 %v1110
    %4465 = vmatpush1.bf16.msra.mxu0 %v1109
    %4466 = vmatprep.subr.bf16.mxu0 %v1118
    %4467 = vmatpush1.bf16.msra.mxu0 %v1117
    %4468 = vmatprep.subr.bf16.mxu0 %v1126
    %4469 = vmatpush1.bf16.msra.mxu0 %v1125
    %4470 = vmatprep.subr.bf16.mxu0 %v1134
    %4471 = vmatpush1.bf16.msra.mxu0 %v1133
    %4472 = vmatprep.subr.bf16.mxu0 %v1142
    %4473 = vmatpush1.bf16.msra.mxu0 %v1141
    %4474 = vmatprep.subr.bf16.mxu0 %v1150
    %4475 = vmatpush1.bf16.msra.mxu0 %v1149
    %4476 = vmatprep.subr.bf16.mxu0 0
    %4477 = vmatpush1.bf16.msra.mxu0 0
    %4478 = vmatprep.subr.bf16.mxu0 0
    %4479 = vmatpush1.bf16.msra.mxu0 0
    %4480 = vmatprep.subr.bf16.mxu0 0
    %4481 = vmatpush1.bf16.msra.mxu0 0
    %4482 = vmatprep.subr.bf16.mxu0 0
    %4483 = vmatpush1.bf16.msra.mxu0 0
    %4484 = vmatprep.subr.bf16.mxu0 0
    %4485 = vmatpush1.bf16.msra.mxu0 0
    %4486 = vmatprep.subr.bf16.mxu0 0
    %4487 = vmatpush1.bf16.msra.mxu0 0
    %4488 = vmatprep.subr.bf16.mxu0 0
    %4489 = vmatpush1.bf16.msra.mxu0 0
    %4490 = vmatprep.subr.bf16.mxu0 0
    %4491 = vmatpush1.bf16.msra.mxu0 0
    %4492 = vmatprep.mubr.bf16.mxu0 0
    %4493 = vmatmul.mubr.bf16.gmra.mrb[0].mxu0 %v4418
    %v4494 = vpop.f32.mrb[0].mxu0
    %v4495 = vadd.f32 0.0, %v4494
    %v4496 = vpop.f32.mrb[0].mxu0
    %v4497 = vadd.f32 0.0, %v4496
    %v4498 = vpop.f32.mrb[0].mxu0
    %v4499 = vpop.f32.mrb[0].mxu0
    %4500 = vdwg.mxu0
    %4501 = vmatprep.subr.bf16.mxu0 %v1096
    %4502 = vmatpush1.bf16.msra.mxu0 %v1095
    %4503 = vmatprep.subr.bf16.mxu0 %v1104
    %4504 = vmatpush1.bf16.msra.mxu0 %v1103
    %4505 = vmatprep.subr.bf16.mxu0 %v1112
    %4506 = vmatpush1.bf16.msra.mxu0 %v1111
    %4507 = vmatprep.subr.bf16.mxu0 %v1120
    %4508 = vmatpush1.bf16.msra.mxu0 %v1119
    %4509 = vmatprep.subr.bf16.mxu0 %v1128
    %4510 = vmatpush1.bf16.msra.mxu0 %v1127
    %4511 = vmatprep.subr.bf16.mxu0 %v1136
    %4512 = vmatpush1.bf16.msra.mxu0 %v1135
    %4513 = vmatprep.subr.bf16.mxu0 %v1144
    %4514 = vmatpush1.bf16.msra.mxu0 %v1143
    %4515 = vmatprep.subr.bf16.mxu0 %v1152
    %4516 = vmatpush1.bf16.msra.mxu0 %v1151
    %4517 = vmatprep.subr.bf16.mxu0 0
    %4518 = vmatpush1.bf16.msra.mxu0 0
    %4519 = vmatprep.subr.bf16.mxu0 0
    %4520 = vmatpush1.bf16.msra.mxu0 0
    %4521 = vmatprep.subr.bf16.mxu0 0
    %4522 = vmatpush1.bf16.msra.mxu0 0
    %4523 = vmatprep.subr.bf16.mxu0 0
    %4524 = vmatpush1.bf16.msra.mxu0 0
    %4525 = vmatprep.subr.bf16.mxu0 0
    %4526 = vmatpush1.bf16.msra.mxu0 0
    %4527 = vmatprep.subr.bf16.mxu0 0
    %4528 = vmatpush1.bf16.msra.mxu0 0
    %4529 = vmatprep.subr.bf16.mxu0 0
    %4530 = vmatpush1.bf16.msra.mxu0 0
    %4531 = vmatprep.subr.bf16.mxu0 0
    %4532 = vmatpush1.bf16.msra.mxu0 0
    %4533 = vmatprep.mubr.bf16.mxu0 0
    %4534 = vmatmul.mubr.bf16.gmra.mrb[0].mxu0 %v4418
    %v4535 = vpop.f32.mrb[0].mxu0
    %v4536 = vadd.f32 0.0, %v4535
    %v4537 = vpop.f32.mrb[0].mxu0
    %v4538 = vadd.f32 0.0, %v4537
    %v4539 = vpop.f32.mrb[0].mxu0
    %v4540 = vpop.f32.mrb[0].mxu0
    %4541 = vdwg.mxu0
    %4542 = vmatprep.subr.bf16.mxu0 %v1098
    %4543 = vmatpush1.bf16.msra.mxu0 %v1097
    %4544 = vmatprep.subr.bf16.mxu0 %v1106
    %4545 = vmatpush1.bf16.msra.mxu0 %v1105
    %4546 = vmatprep.subr.bf16.mxu0 %v1114
    %4547 = vmatpush1.bf16.msra.mxu0 %v1113
    %4548 = vmatprep.subr.bf16.mxu0 %v1122
    %4549 = vmatpush1.bf16.msra.mxu0 %v1121
    %4550 = vmatprep.subr.bf16.mxu0 %v1130
    %4551 = vmatpush1.bf16.msra.mxu0 %v1129
    %4552 = vmatprep.subr.bf16.mxu0 %v1138
    %4553 = vmatpush1.bf16.msra.mxu0 %v1137
    %4554 = vmatprep.subr.bf16.mxu0 %v1146
    %4555 = vmatpush1.bf16.msra.mxu0 %v1145
    %4556 = vmatprep.subr.bf16.mxu0 %v1154
    %4557 = vmatpush1.bf16.msra.mxu0 %v1153
    %4558 = vmatprep.subr.bf16.mxu0 0
    %4559 = vmatpush1.bf16.msra.mxu0 0
    %4560 = vmatprep.subr.bf16.mxu0 0
    %4561 = vmatpush1.bf16.msra.mxu0 0
    %4562 = vmatprep.subr.bf16.mxu0 0
    %4563 = vmatpush1.bf16.msra.mxu0 0
    %4564 = vmatprep.subr.bf16.mxu0 0
    %4565 = vmatpush1.bf16.msra.mxu0 0
    %4566 = vmatprep.subr.bf16.mxu0 0
    %4567 = vmatpush1.bf16.msra.mxu0 0
    %4568 = vmatprep.subr.bf16.mxu0 0
    %4569 = vmatpush1.bf16.msra.mxu0 0
    %4570 = vmatprep.subr.bf16.mxu0 0
    %4571 = vmatpush1.bf16.msra.mxu0 0
    %4572 = vmatprep.subr.bf16.mxu0 0
    %4573 = vmatpush1.bf16.msra.mxu0 0
    %4574 = vmatprep.mubr.bf16.mxu0 0
    %4575 = vmatmul.mubr.bf16.gmra.mrb[0].mxu0 %v4418
    %v4576 = vpop.f32.mrb[0].mxu0
    %v4577 = vadd.f32 0.0, %v4576
    %v4578 = vpop.f32.mrb[0].mxu0
    %v4579 = vadd.f32 0.0, %v4578
    %v4580 = vpop.f32.mrb[0].mxu0
    %v4581 = vpop.f32.mrb[0].mxu0
    %4582 = vdwg.mxu0
    %v4591 = vand.u32 %v4454, 2147483648
    %v4592 = vand.u32 %v4456, 2147483648
    %v4593 = vand.u32 %v4495, 2147483648
    %v4594 = vand.u32 %v4497, 2147483648
    %v4595 = vand.u32 %v4536, 2147483648
    %v4596 = vand.u32 %v4538, 2147483648
    %v4597 = vand.u32 %v4577, 2147483648
    %v4598 = vand.u32 %v4579, 2147483648
    %v4599 = vor.u32 %v4591, 1004888130
    %v4600 = vor.u32 %v4592, 1004888130
    %v4601 = vor.u32 %v4593, 1004888130
    %v4602 = vor.u32 %v4594, 1004888130
    %v4603 = vor.u32 %v4595, 1004888130
    %v4604 = vor.u32 %v4596, 1004888130
    %v4605 = vor.u32 %v4597, 1004888130
    %v4606 = vor.u32 %v4598, 1004888130
    %v4615 = vadd.f32 %v4231, %v4599
    %v4616 = vadd.f32 %v4232, %v4600
    %v4617 = vadd.f32 %v4233, %v4601
    %v4618 = vadd.f32 %v4234, %v4602
    %v4619 = vadd.f32 %v4235, %v4603
    %v4620 = vadd.f32 %v4236, %v4604
    %v4621 = vadd.f32 %v4237, %v4605
    %v4622 = vadd.f32 %v4238, %v4606
    %v4623 = vmax.f32 %v4615, %v311
    %v4624 = vmax.f32 %v4616, %v312
    %v4625 = vmax.f32 %v4617, %v313
    %v4626 = vmax.f32 %v4618, %v314
    %v4627 = vmax.f32 %v4619, %v315
    %v4628 = vmax.f32 %v4620, %v316
    %v4629 = vmax.f32 %v4621, %v317
    %v4630 = vmax.f32 %v4622, %v318
    %v4631 = vmin.f32 %v4623, %v327
    %v4632 = vmin.f32 %v4624, %v328
    %v4633 = vmin.f32 %v4625, %v329
    %v4634 = vmin.f32 %v4626, %v330
    %v4635 = vmin.f32 %v4627, %v331
    %v4636 = vmin.f32 %v4628, %v332
    %v4637 = vmin.f32 %v4629, %v333
    %v4638 = vmin.f32 %v4630, %v334
    %v4639 = vpack.c.bf16 %v4631, %v4631
    %v4640 = vpack.c.bf16 %v4632, %v4632
    %v4641 = vpack.c.bf16 %v4633, %v4633
    %v4642 = vpack.c.bf16 %v4634, %v4634
    %v4643 = vpack.c.bf16 %v4635, %v4635
    %v4644 = vpack.c.bf16 %v4636, %v4636
    %v4645 = vpack.c.bf16 %v4637, %v4637
    %v4646 = vpack.c.bf16 %v4638, %v4638
    %4647 = vmatprep.subr.bf16.mxu0 0
    %4648 = vmatpush1.bf16.msra.mxu0 %v599
    %4649 = vmatprep.subr.bf16.mxu0 0
    %4650 = vmatpush1.bf16.msra.mxu0 %v600
    %4651 = vmatprep.subr.bf16.mxu0 0
    %4652 = vmatpush1.bf16.msra.mxu0 %v601
    %4653 = vmatprep.subr.bf16.mxu0 0
    %4654 = vmatpush1.bf16.msra.mxu0 %v602
    %4655 = vmatprep.subr.bf16.mxu0 0
    %4656 = vmatpush1.bf16.msra.mxu0 %v603
    %4657 = vmatprep.subr.bf16.mxu0 0
    %4658 = vmatpush1.bf16.msra.mxu0 %v604
    %4659 = vmatprep.subr.bf16.mxu0 0
    %4660 = vmatpush1.bf16.msra.mxu0 %v605
    %4661 = vmatprep.subr.bf16.mxu0 0
    %4662 = vmatpush1.bf16.msra.mxu0 %v606
    %4663 = vmatprep.subr.bf16.mxu0 0
    %4664 = vmatpush1.bf16.msra.mxu0 %v607
    %4665 = vmatprep.subr.bf16.mxu0 0
    %4666 = vmatpush1.bf16.msra.mxu0 %v608
    %4667 = vmatprep.subr.bf16.mxu0 0
    %4668 = vmatpush1.bf16.msra.mxu0 %v609
    %4669 = vmatprep.subr.bf16.mxu0 0
    %4670 = vmatpush1.bf16.msra.mxu0 %v610
    %4671 = vmatprep.subr.bf16.mxu0 0
    %4672 = vmatpush1.bf16.msra.mxu0 %v611
    %4673 = vmatprep.subr.bf16.mxu0 0
    %4674 = vmatpush1.bf16.msra.mxu0 %v612
    %4675 = vmatprep.subr.bf16.mxu0 0
    %4676 = vmatpush1.bf16.msra.mxu0 %v613
    %4677 = vmatprep.subr.bf16.mxu0 0
    %4678 = vmatpush1.bf16.msra.mxu0 %v614
    %4679 = vmatprep.mubr.bf16.mxu0 %v4640
    %4680 = vmatmul.mubr.bf16.gmra.mrb[0].mxu0 %v4639
    %v4681 = vpop.f32.mrb[0].mxu0
    %v4682 = vadd.f32 %v292, %v4681
    %v4683 = vpop.f32.mrb[0].mxu0
    %v4684 = vpop.f32.mrb[0].mxu0
    %v4685 = vpop.f32.mrb[0].mxu0
    %4686 = vdwg.mxu0
    %4687 = vmatprep.subr.bf16.mxu0 0
    %4688 = vmatpush1.bf16.msra.mxu0 %v615
    %4689 = vmatprep.subr.bf16.mxu0 0
    %4690 = vmatpush1.bf16.msra.mxu0 %v616
    %4691 = vmatprep.subr.bf16.mxu0 0
    %4692 = vmatpush1.bf16.msra.mxu0 %v617
    %4693 = vmatprep.subr.bf16.mxu0 0
    %4694 = vmatpush1.bf16.msra.mxu0 %v618
    %4695 = vmatprep.subr.bf16.mxu0 0
    %4696 = vmatpush1.bf16.msra.mxu0 %v619
    %4697 = vmatprep.subr.bf16.mxu0 0
    %4698 = vmatpush1.bf16.msra.mxu0 %v620
    %4699 = vmatprep.subr.bf16.mxu0 0
    %4700 = vmatpush1.bf16.msra.mxu0 %v621
    %4701 = vmatprep.subr.bf16.mxu0 0
    %4702 = vmatpush1.bf16.msra.mxu0 %v622
    %4703 = vmatprep.subr.bf16.mxu0 0
    %4704 = vmatpush1.bf16.msra.mxu0 %v623
    %4705 = vmatprep.subr.bf16.mxu0 0
    %4706 = vmatpush1.bf16.msra.mxu0 %v624
    %4707 = vmatprep.subr.bf16.mxu0 0
    %4708 = vmatpush1.bf16.msra.mxu0 %v625
    %4709 = vmatprep.subr.bf16.mxu0 0
    %4710 = vmatpush1.bf16.msra.mxu0 %v626
    %4711 = vmatprep.subr.bf16.mxu0 0
    %4712 = vmatpush1.bf16.msra.mxu0 %v627
    %4713 = vmatprep.subr.bf16.mxu0 0
    %4714 = vmatpush1.bf16.msra.mxu0 %v628
    %4715 = vmatprep.subr.bf16.mxu0 0
    %4716 = vmatpush1.bf16.msra.mxu0 %v629
    %4717 = vmatprep.subr.bf16.mxu0 0
    %4718 = vmatpush1.bf16.msra.mxu0 %v630
    %4719 = vmatprep.mubr.bf16.mxu0 %v4642
    %4720 = vmatmul.mubr.bf16.gmra.mrb[0].mxu0 %v4641
    %v4721 = vpop.f32.mrb[0].mxu0
    %v4722 = vadd.f32 %v4682, %v4721
    %v4723 = vpop.f32.mrb[0].mxu0
    %v4724 = vpop.f32.mrb[0].mxu0
    %v4725 = vpop.f32.mrb[0].mxu0
    %4726 = vdwg.mxu0
    %4727 = vmatprep.subr.bf16.mxu0 0
    %4728 = vmatpush1.bf16.msra.mxu0 %v631
    %4729 = vmatprep.subr.bf16.mxu0 0
    %4730 = vmatpush1.bf16.msra.mxu0 %v632
    %4731 = vmatprep.subr.bf16.mxu0 0
    %4732 = vmatpush1.bf16.msra.mxu0 %v633
    %4733 = vmatprep.subr.bf16.mxu0 0
    %4734 = vmatpush1.bf16.msra.mxu0 %v634
    %4735 = vmatprep.subr.bf16.mxu0 0
    %4736 = vmatpush1.bf16.msra.mxu0 %v635
    %4737 = vmatprep.subr.bf16.mxu0 0
    %4738 = vmatpush1.bf16.msra.mxu0 %v636
    %4739 = vmatprep.subr.bf16.mxu0 0
    %4740 = vmatpush1.bf16.msra.mxu0 %v637
    %4741 = vmatprep.subr.bf16.mxu0 0
    %4742 = vmatpush1.bf16.msra.mxu0 %v638
    %4743 = vmatprep.subr.bf16.mxu0 0
    %4744 = vmatpush1.bf16.msra.mxu0 %v639
    %4745 = vmatprep.subr.bf16.mxu0 0
    %4746 = vmatpush1.bf16.msra.mxu0 %v640
    %4747 = vmatprep.subr.bf16.mxu0 0
    %4748 = vmatpush1.bf16.msra.mxu0 %v641
    %4749 = vmatprep.subr.bf16.mxu0 0
    %4750 = vmatpush1.bf16.msra.mxu0 %v642
    %4751 = vmatprep.subr.bf16.mxu0 0
    %4752 = vmatpush1.bf16.msra.mxu0 %v643
    %4753 = vmatprep.subr.bf16.mxu0 0
    %4754 = vmatpush1.bf16.msra.mxu0 %v644
    %4755 = vmatprep.subr.bf16.mxu0 0
    %4756 = vmatpush1.bf16.msra.mxu0 %v645
    %4757 = vmatprep.subr.bf16.mxu0 0
    %4758 = vmatpush1.bf16.msra.mxu0 %v646
    %4759 = vmatprep.mubr.bf16.mxu0 %v4644
    %4760 = vmatmul.mubr.bf16.gmra.mrb[0].mxu0 %v4643
    %v4761 = vpop.f32.mrb[0].mxu0
    %v4762 = vadd.f32 %v4722, %v4761
    %v4763 = vpop.f32.mrb[0].mxu0
    %v4764 = vpop.f32.mrb[0].mxu0
    %v4765 = vpop.f32.mrb[0].mxu0
    %4766 = vdwg.mxu0
    %4767 = vmatprep.subr.bf16.mxu0 0
    %4768 = vmatpush1.bf16.msra.mxu0 %v647
    %4769 = vmatprep.subr.bf16.mxu0 0
    %4770 = vmatpush1.bf16.msra.mxu0 %v648
    %4771 = vmatprep.subr.bf16.mxu0 0
    %4772 = vmatpush1.bf16.msra.mxu0 %v649
    %4773 = vmatprep.subr.bf16.mxu0 0
    %4774 = vmatpush1.bf16.msra.mxu0 %v650
    %4775 = vmatprep.subr.bf16.mxu0 0
    %4776 = vmatpush1.bf16.msra.mxu0 %v651
    %4777 = vmatprep.subr.bf16.mxu0 0
    %4778 = vmatpush1.bf16.msra.mxu0 %v652
    %4779 = vmatprep.subr.bf16.mxu0 0
    %4780 = vmatpush1.bf16.msra.mxu0 %v653
    %4781 = vmatprep.subr.bf16.mxu0 0
    %4782 = vmatpush1.bf16.msra.mxu0 %v654
    %4783 = vmatprep.subr.bf16.mxu0 0
    %4784 = vmatpush1.bf16.msra.mxu0 %v655
    %4785 = vmatprep.subr.bf16.mxu0 0
    %4786 = vmatpush1.bf16.msra.mxu0 %v656
    %4787 = vmatprep.subr.bf16.mxu0 0
    %4788 = vmatpush1.bf16.msra.mxu0 %v657
    %4789 = vmatprep.subr.bf16.mxu0 0
    %4790 = vmatpush1.bf16.msra.mxu0 %v658
    %4791 = vmatprep.subr.bf16.mxu0 0
    %4792 = vmatpush1.bf16.msra.mxu0 %v659
    %4793 = vmatprep.subr.bf16.mxu0 0
    %4794 = vmatpush1.bf16.msra.mxu0 %v660
    %4795 = vmatprep.subr.bf16.mxu0 0
    %4796 = vmatpush1.bf16.msra.mxu0 %v661
    %4797 = vmatprep.subr.bf16.mxu0 0
    %4798 = vmatpush1.bf16.msra.mxu0 %v662
    %4799 = vmatprep.mubr.bf16.mxu0 %v4646
    %4800 = vmatmul.mubr.bf16.gmra.mrb[0].mxu0 %v4645
    %v4801 = vpop.f32.mrb[0].mxu0
    %v4802 = vadd.f32 %v4762, %v4801
    %v4803 = vpop.f32.mrb[0].mxu0
    %v4804 = vpop.f32.mrb[0].mxu0
    %v4805 = vpop.f32.mrb[0].mxu0
    %4806 = vdwg.mxu0
    %4807 = vmax.xlane.f32.xlu0 %v4802
    %v4808 = vpop.xlane.xlu0 %4807
    %v4809 = vsub.f32 %v4802, %v4808
    %v4810 = vmul.f32 %v4809, 1.442695
    %v4811 = vpow.pop %v4810
    %4812 = vadd.xlane.f32.xlu0 %v4811
    %v4813 = vpop.xlane.xlu0 %4812
    %v4814 = vrcp.pop %v4813
    %v4815 = vmul.f32 1.0, %v4814
    %v4816 = vmul.f32 %v4811, %v4815
    %v4817 = vsub.f32 %v4816, %v302
    %v4818 = vpack.c.bf16 %v4817, %v4817
    %4819 = vmatprep.subr.bf16.mxu0 %v1092
    %4820 = vmatpush1.bf16.msra.mxu0 %v1091
    %4821 = vmatprep.subr.bf16.mxu0 %v1100
    %4822 = vmatpush1.bf16.msra.mxu0 %v1099
    %4823 = vmatprep.subr.bf16.mxu0 %v1108
    %4824 = vmatpush1.bf16.msra.mxu0 %v1107
    %4825 = vmatprep.subr.bf16.mxu0 %v1116
    %4826 = vmatpush1.bf16.msra.mxu0 %v1115
    %4827 = vmatprep.subr.bf16.mxu0 %v1124
    %4828 = vmatpush1.bf16.msra.mxu0 %v1123
    %4829 = vmatprep.subr.bf16.mxu0 %v1132
    %4830 = vmatpush1.bf16.msra.mxu0 %v1131
    %4831 = vmatprep.subr.bf16.mxu0 %v1140
    %4832 = vmatpush1.bf16.msra.mxu0 %v1139
    %4833 = vmatprep.subr.bf16.mxu0 %v1148
    %4834 = vmatpush1.bf16.msra.mxu0 %v1147
    %4835 = vmatprep.subr.bf16.mxu0 0
    %4836 = vmatpush1.bf16.msra.mxu0 0
    %4837 = vmatprep.subr.bf16.mxu0 0
    %4838 = vmatpush1.bf16.msra.mxu0 0
    %4839 = vmatprep.subr.bf16.mxu0 0
    %4840 = vmatpush1.bf16.msra.mxu0 0
    %4841 = vmatprep.subr.bf16.mxu0 0
    %4842 = vmatpush1.bf16.msra.mxu0 0
    %4843 = vmatprep.subr.bf16.mxu0 0
    %4844 = vmatpush1.bf16.msra.mxu0 0
    %4845 = vmatprep.subr.bf16.mxu0 0
    %4846 = vmatpush1.bf16.msra.mxu0 0
    %4847 = vmatprep.subr.bf16.mxu0 0
    %4848 = vmatpush1.bf16.msra.mxu0 0
    %4849 = vmatprep.subr.bf16.mxu0 0
    %4850 = vmatpush1.bf16.msra.mxu0 0
    %4851 = vmatprep.mubr.bf16.mxu0 0
    %4852 = vmatmul.mubr.bf16.gmra.mrb[0].mxu0 %v4818
    %v4853 = vpop.f32.mrb[0].mxu0
    %v4854 = vadd.f32 0.0, %v4853
    %v4855 = vpop.f32.mrb[0].mxu0
    %v4856 = vadd.f32 0.0, %v4855
    %v4857 = vpop.f32.mrb[0].mxu0
    %v4858 = vpop.f32.mrb[0].mxu0
    %4859 = vdwg.mxu0
    %4860 = vmatprep.subr.bf16.mxu0 %v1094
    %4861 = vmatpush1.bf16.msra.mxu0 %v1093
    %4862 = vmatprep.subr.bf16.mxu0 %v1102
    %4863 = vmatpush1.bf16.msra.mxu0 %v1101
    %4864 = vmatprep.subr.bf16.mxu0 %v1110
    %4865 = vmatpush1.bf16.msra.mxu0 %v1109
    %4866 = vmatprep.subr.bf16.mxu0 %v1118
    %4867 = vmatpush1.bf16.msra.mxu0 %v1117
    %4868 = vmatprep.subr.bf16.mxu0 %v1126
    %4869 = vmatpush1.bf16.msra.mxu0 %v1125
    %4870 = vmatprep.subr.bf16.mxu0 %v1134
    %4871 = vmatpush1.bf16.msra.mxu0 %v1133
    %4872 = vmatprep.subr.bf16.mxu0 %v1142
    %4873 = vmatpush1.bf16.msra.mxu0 %v1141
    %4874 = vmatprep.subr.bf16.mxu0 %v1150
    %4875 = vmatpush1.bf16.msra.mxu0 %v1149
    %4876 = vmatprep.subr.bf16.mxu0 0
    %4877 = vmatpush1.bf16.msra.mxu0 0
    %4878 = vmatprep.subr.bf16.mxu0 0
    %4879 = vmatpush1.bf16.msra.mxu0 0
    %4880 = vmatprep.subr.bf16.mxu0 0
    %4881 = vmatpush1.bf16.msra.mxu0 0
    %4882 = vmatprep.subr.bf16.mxu0 0
    %4883 = vmatpush1.bf16.msra.mxu0 0
    %4884 = vmatprep.subr.bf16.mxu0 0
    %4885 = vmatpush1.bf16.msra.mxu0 0
    %4886 = vmatprep.subr.bf16.mxu0 0
    %4887 = vmatpush1.bf16.msra.mxu0 0
    %4888 = vmatprep.subr.bf16.mxu0 0
    %4889 = vmatpush1.bf16.msra.mxu0 0
    %4890 = vmatprep.subr.bf16.mxu0 0
    %4891 = vmatpush1.bf16.msra.mxu0 0
    %4892 = vmatprep.mubr.bf16.mxu0 0
    %4893 = vmatmul.mubr.bf16.gmra.mrb[0].mxu0 %v4818
    %v4894 = vpop.f32.mrb[0].mxu0
    %v4895 = vadd.f32 0.0, %v4894
    %v4896 = vpop.f32.mrb[0].mxu0
    %v4897 = vadd.f32 0.0, %v4896
    %v4898 = vpop.f32.mrb[0].mxu0
    %v4899 = vpop.f32.mrb[0].mxu0
    %4900 = vdwg.mxu0
    %4901 = vmatprep.subr.bf16.mxu0 %v1096
    %4902 = vmatpush1.bf16.msra.mxu0 %v1095
    %4903 = vmatprep.subr.bf16.mxu0 %v1104
    %4904 = vmatpush1.bf16.msra.mxu0 %v1103
    %4905 = vmatprep.subr.bf16.mxu0 %v1112
    %4906 = vmatpush1.bf16.msra.mxu0 %v1111
    %4907 = vmatprep.subr.bf16.mxu0 %v1120
    %4908 = vmatpush1.bf16.msra.mxu0 %v1119
    %4909 = vmatprep.subr.bf16.mxu0 %v1128
    %4910 = vmatpush1.bf16.msra.mxu0 %v1127
    %4911 = vmatprep.subr.bf16.mxu0 %v1136
    %4912 = vmatpush1.bf16.msra.mxu0 %v1135
    %4913 = vmatprep.subr.bf16.mxu0 %v1144
    %4914 = vmatpush1.bf16.msra.mxu0 %v1143
    %4915 = vmatprep.subr.bf16.mxu0 %v1152
    %4916 = vmatpush1.bf16.msra.mxu0 %v1151
    %4917 = vmatprep.subr.bf16.mxu0 0
    %4918 = vmatpush1.bf16.msra.mxu0 0
    %4919 = vmatprep.subr.bf16.mxu0 0
    %4920 = vmatpush1.bf16.msra.mxu0 0
    %4921 = vmatprep.subr.bf16.mxu0 0
    %4922 = vmatpush1.bf16.msra.mxu0 0
    %4923 = vmatprep.subr.bf16.mxu0 0
    %4924 = vmatpush1.bf16.msra.mxu0 0
    %4925 = vmatprep.subr.bf16.mxu0 0
    %4926 = vmatpush1.bf16.msra.mxu0 0
    %4927 = vmatprep.subr.bf16.mxu0 0
    %4928 = vmatpush1.bf16.msra.mxu0 0
    %4929 = vmatprep.subr.bf16.mxu0 0
    %4930 = vmatpush1.bf16.msra.mxu0 0
    %4931 = vmatprep.subr.bf16.mxu0 0
    %4932 = vmatpush1.bf16.msra.mxu0 0
    %4933 = vmatprep.mubr.bf16.mxu0 0
    %4934 = vmatmul.mubr.bf16.gmra.mrb[0].mxu0 %v4818
    %v4935 = vpop.f32.mrb[0].mxu0
    %v4936 = vadd.f32 0.0, %v4935
    %v4937 = vpop.f32.mrb[0].mxu0
    %v4938 = vadd.f32 0.0, %v4937
    %v4939 = vpop.f32.mrb[0].mxu0
    %v4940 = vpop.f32.mrb[0].mxu0
    %4941 = vdwg.mxu0
    %4942 = vmatprep.subr.bf16.mxu0 %v1098
    %4943 = vmatpush1.bf16.msra.mxu0 %v1097
    %4944 = vmatprep.subr.bf16.mxu0 %v1106
    %4945 = vmatpush1.bf16.msra.mxu0 %v1105
    %4946 = vmatprep.subr.bf16.mxu0 %v1114
    %4947 = vmatpush1.bf16.msra.mxu0 %v1113
    %4948 = vmatprep.subr.bf16.mxu0 %v1122
    %4949 = vmatpush1.bf16.msra.mxu0 %v1121
    %4950 = vmatprep.subr.bf16.mxu0 %v1130
    %4951 = vmatpush1.bf16.msra.mxu0 %v1129
    %4952 = vmatprep.subr.bf16.mxu0 %v1138
    %4953 = vmatpush1.bf16.msra.mxu0 %v1137
    %4954 = vmatprep.subr.bf16.mxu0 %v1146
    %4955 = vmatpush1.bf16.msra.mxu0 %v1145
    %4956 = vmatprep.subr.bf16.mxu0 %v1154
    %4957 = vmatpush1.bf16.msra.mxu0 %v1153
    %4958 = vmatprep.subr.bf16.mxu0 0
    %4959 = vmatpush1.bf16.msra.mxu0 0
    %4960 = vmatprep.subr.bf16.mxu0 0
    %4961 = vmatpush1.bf16.msra.mxu0 0
    %4962 = vmatprep.subr.bf16.mxu0 0
    %4963 = vmatpush1.bf16.msra.mxu0 0
    %4964 = vmatprep.subr.bf16.mxu0 0
    %4965 = vmatpush1.bf16.msra.mxu0 0
    %4966 = vmatprep.subr.bf16.mxu0 0
    %4967 = vmatpush1.bf16.msra.mxu0 0
    %4968 = vmatprep.subr.bf16.mxu0 0
    %4969 = vmatpush1.bf16.msra.mxu0 0
    %4970 = vmatprep.subr.bf16.mxu0 0
    %4971 = vmatpush1.bf16.msra.mxu0 0
    %4972 = vmatprep.subr.bf16.mxu0 0
    %4973 = vmatpush1.bf16.msra.mxu0 0
    %4974 = vmatprep.mubr.bf16.mxu0 0
    %4975 = vmatmul.mubr.bf16.gmra.mrb[0].mxu0 %v4818
    %v4976 = vpop.f32.mrb[0].mxu0
    %v4977 = vadd.f32 0.0, %v4976
    %v4978 = vpop.f32.mrb[0].mxu0
    %v4979 = vadd.f32 0.0, %v4978
    %v4980 = vpop.f32.mrb[0].mxu0
    %v4981 = vpop.f32.mrb[0].mxu0
    %4982 = vdwg.mxu0
    %v4991 = vand.u32 %v4854, 2147483648
    %v4992 = vand.u32 %v4856, 2147483648
    %v4993 = vand.u32 %v4895, 2147483648
    %v4994 = vand.u32 %v4897, 2147483648
    %v4995 = vand.u32 %v4936, 2147483648
    %v4996 = vand.u32 %v4938, 2147483648
    %v4997 = vand.u32 %v4977, 2147483648
    %v4998 = vand.u32 %v4979, 2147483648
    %v4999 = vor.u32 %v4991, 1004888130
    %v5000 = vor.u32 %v4992, 1004888130
    %v5001 = vor.u32 %v4993, 1004888130
    %v5002 = vor.u32 %v4994, 1004888130
    %v5003 = vor.u32 %v4995, 1004888130
    %v5004 = vor.u32 %v4996, 1004888130
    %v5005 = vor.u32 %v4997, 1004888130
    %v5006 = vor.u32 %v4998, 1004888130
    %v5015 = vadd.f32 %v4631, %v4999
    %v5016 = vadd.f32 %v4632, %v5000
    %v5017 = vadd.f32 %v4633, %v5001
    %v5018 = vadd.f32 %v4634, %v5002
    %v5019 = vadd.f32 %v4635, %v5003
    %v5020 = vadd.f32 %v4636, %v5004
    %v5021 = vadd.f32 %v4637, %v5005
    %v5022 = vadd.f32 %v4638, %v5006
    %v5023 = vmax.f32 %v5015, %v311
    %v5024 = vmax.f32 %v5016, %v312
    %v5025 = vmax.f32 %v5017, %v313
    %v5026 = vmax.f32 %v5018, %v314
    %v5027 = vmax.f32 %v5019, %v315
    %v5028 = vmax.f32 %v5020, %v316
    %v5029 = vmax.f32 %v5021, %v317
    %v5030 = vmax.f32 %v5022, %v318
    %v5031 = vmin.f32 %v5023, %v327
    %v5032 = vmin.f32 %v5024, %v328
    %v5033 = vmin.f32 %v5025, %v329
    %v5034 = vmin.f32 %v5026, %v330
    %v5035 = vmin.f32 %v5027, %v331
    %v5036 = vmin.f32 %v5028, %v332
    %v5037 = vmin.f32 %v5029, %v333
    %v5038 = vmin.f32 %v5030, %v334
    %5039 = vst [vmem:[#allocation11] sm:$0xff] %v5031
    %5040 = vst [vmem:[#allocation11 + $0x8] sm:$0xff] %v5032
    %5041 = vst [vmem:[#allocation11 + $0x10] sm:$0xff] %v5033
    %5042 = vst [vmem:[#allocation11 + $0x18] sm:$0xff] %v5034
    %5043 = vst [vmem:[#allocation11 + $0x20] sm:$0xff] %v5035
    %5044 = vst [vmem:[#allocation11 + $0x28] sm:$0xff] %v5036
    %5045 = vst [vmem:[#allocation11 + $0x30] sm:$0xff] %v5037
    %5046 = vst [vmem:[#allocation11 + $0x38] sm:$0xff] %v5038
    %v5047 = vpack.c.bf16 %v5031, %v5031
    %v5048 = vpack.c.bf16 %v5032, %v5032
    %v5049 = vpack.c.bf16 %v5033, %v5033
    %v5050 = vpack.c.bf16 %v5034, %v5034
    %v5051 = vpack.c.bf16 %v5035, %v5035
    %v5052 = vpack.c.bf16 %v5036, %v5036
    %v5053 = vpack.c.bf16 %v5037, %v5037
    %v5054 = vpack.c.bf16 %v5038, %v5038
    %5055 = vmatprep.subr.bf16.mxu0 0
    %5056 = vmatpush1.bf16.msra.mxu0 %v599
    %5057 = vmatprep.subr.bf16.mxu0 0
    %5058 = vmatpush1.bf16.msra.mxu0 %v600
    %5059 = vmatprep.subr.bf16.mxu0 0
    %5060 = vmatpush1.bf16.msra.mxu0 %v601
    %5061 = vmatprep.subr.bf16.mxu0 0
    %5062 = vmatpush1.bf16.msra.mxu0 %v602
    %5063 = vmatprep.subr.bf16.mxu0 0
    %5064 = vmatpush1.bf16.msra.mxu0 %v603
    %5065 = vmatprep.subr.bf16.mxu0 0
    %5066 = vmatpush1.bf16.msra.mxu0 %v604
    %5067 = vmatprep.subr.bf16.mxu0 0
    %5068 = vmatpush1.bf16.msra.mxu0 %v605
    %5069 = vmatprep.subr.bf16.mxu0 0
    %5070 = vmatpush1.bf16.msra.mxu0 %v606
    %5071 = vmatprep.subr.bf16.mxu0 0
    %5072 = vmatpush1.bf16.msra.mxu0 %v607
    %5073 = vmatprep.subr.bf16.mxu0 0
    %5074 = vmatpush1.bf16.msra.mxu0 %v608
    %5075 = vmatprep.subr.bf16.mxu0 0
    %5076 = vmatpush1.bf16.msra.mxu0 %v609
    %5077 = vmatprep.subr.bf16.mxu0 0
    %5078 = vmatpush1.bf16.msra.mxu0 %v610
    %5079 = vmatprep.subr.bf16.mxu0 0
    %5080 = vmatpush1.bf16.msra.mxu0 %v611
    %5081 = vmatprep.subr.bf16.mxu0 0
    %5082 = vmatpush1.bf16.msra.mxu0 %v612
    %5083 = vmatprep.subr.bf16.mxu0 0
    %5084 = vmatpush1.bf16.msra.mxu0 %v613
    %5085 = vmatprep.subr.bf16.mxu0 0
    %5086 = vmatpush1.bf16.msra.mxu0 %v614
    %5087 = vmatprep.mubr.bf16.mxu0 %v5048
    %5088 = vmatmul.mubr.bf16.gmra.mrb[0].mxu0 %v5047
    %v5089 = vpop.f32.mrb[0].mxu0
    %v5090 = vadd.f32 %v292, %v5089
    %v5091 = vpop.f32.mrb[0].mxu0
    %v5092 = vpop.f32.mrb[0].mxu0
    %v5093 = vpop.f32.mrb[0].mxu0
    %5094 = vdwg.mxu0
    %5095 = vmatprep.subr.bf16.mxu0 0
    %5096 = vmatpush1.bf16.msra.mxu0 %v615
    %5097 = vmatprep.subr.bf16.mxu0 0
    %5098 = vmatpush1.bf16.msra.mxu0 %v616
    %5099 = vmatprep.subr.bf16.mxu0 0
    %5100 = vmatpush1.bf16.msra.mxu0 %v617
    %5101 = vmatprep.subr.bf16.mxu0 0
    %5102 = vmatpush1.bf16.msra.mxu0 %v618
    %5103 = vmatprep.subr.bf16.mxu0 0
    %5104 = vmatpush1.bf16.msra.mxu0 %v619
    %5105 = vmatprep.subr.bf16.mxu0 0
    %5106 = vmatpush1.bf16.msra.mxu0 %v620
    %5107 = vmatprep.subr.bf16.mxu0 0
    %5108 = vmatpush1.bf16.msra.mxu0 %v621
    %5109 = vmatprep.subr.bf16.mxu0 0
    %5110 = vmatpush1.bf16.msra.mxu0 %v622
    %5111 = vmatprep.subr.bf16.mxu0 0
    %5112 = vmatpush1.bf16.msra.mxu0 %v623
    %5113 = vmatprep.subr.bf16.mxu0 0
    %5114 = vmatpush1.bf16.msra.mxu0 %v624
    %5115 = vmatprep.subr.bf16.mxu0 0
    %5116 = vmatpush1.bf16.msra.mxu0 %v625
    %5117 = vmatprep.subr.bf16.mxu0 0
    %5118 = vmatpush1.bf16.msra.mxu0 %v626
    %5119 = vmatprep.subr.bf16.mxu0 0
    %5120 = vmatpush1.bf16.msra.mxu0 %v627
    %5121 = vmatprep.subr.bf16.mxu0 0
    %5122 = vmatpush1.bf16.msra.mxu0 %v628
    %5123 = vmatprep.subr.bf16.mxu0 0
    %5124 = vmatpush1.bf16.msra.mxu0 %v629
    %5125 = vmatprep.subr.bf16.mxu0 0
    %5126 = vmatpush1.bf16.msra.mxu0 %v630
    %5127 = vmatprep.mubr.bf16.mxu0 %v5050
    %5128 = vmatmul.mubr.bf16.gmra.mrb[0].mxu0 %v5049
    %v5129 = vpop.f32.mrb[0].mxu0
    %v5130 = vadd.f32 %v5090, %v5129
    %v5131 = vpop.f32.mrb[0].mxu0
    %v5132 = vpop.f32.mrb[0].mxu0
    %v5133 = vpop.f32.mrb[0].mxu0
    %5134 = vdwg.mxu0
    %5135 = vmatprep.subr.bf16.mxu0 0
    %5136 = vmatpush1.bf16.msra.mxu0 %v631
    %5137 = vmatprep.subr.bf16.mxu0 0
    %5138 = vmatpush1.bf16.msra.mxu0 %v632
    %5139 = vmatprep.subr.bf16.mxu0 0
    %5140 = vmatpush1.bf16.msra.mxu0 %v633
    %5141 = vmatprep.subr.bf16.mxu0 0
    %5142 = vmatpush1.bf16.msra.mxu0 %v634
    %5143 = vmatprep.subr.bf16.mxu0 0
    %5144 = vmatpush1.bf16.msra.mxu0 %v635
    %5145 = vmatprep.subr.bf16.mxu0 0
    %5146 = vmatpush1.bf16.msra.mxu0 %v636
    %5147 = vmatprep.subr.bf16.mxu0 0
    %5148 = vmatpush1.bf16.msra.mxu0 %v637
    %5149 = vmatprep.subr.bf16.mxu0 0
    %5150 = vmatpush1.bf16.msra.mxu0 %v638
    %5151 = vmatprep.subr.bf16.mxu0 0
    %5152 = vmatpush1.bf16.msra.mxu0 %v639
    %5153 = vmatprep.subr.bf16.mxu0 0
    %5154 = vmatpush1.bf16.msra.mxu0 %v640
    %5155 = vmatprep.subr.bf16.mxu0 0
    %5156 = vmatpush1.bf16.msra.mxu0 %v641
    %5157 = vmatprep.subr.bf16.mxu0 0
    %5158 = vmatpush1.bf16.msra.mxu0 %v642
    %5159 = vmatprep.subr.bf16.mxu0 0
    %5160 = vmatpush1.bf16.msra.mxu0 %v643
    %5161 = vmatprep.subr.bf16.mxu0 0
    %5162 = vmatpush1.bf16.msra.mxu0 %v644
    %5163 = vmatprep.subr.bf16.mxu0 0
    %5164 = vmatpush1.bf16.msra.mxu0 %v645
    %5165 = vmatprep.subr.bf16.mxu0 0
    %5166 = vmatpush1.bf16.msra.mxu0 %v646
    %5167 = vmatprep.mubr.bf16.mxu0 %v5052
    %5168 = vmatmul.mubr.bf16.gmra.mrb[0].mxu0 %v5051
    %v5169 = vpop.f32.mrb[0].mxu0
    %v5170 = vadd.f32 %v5130, %v5169
    %v5171 = vpop.f32.mrb[0].mxu0
    %v5172 = vpop.f32.mrb[0].mxu0
    %v5173 = vpop.f32.mrb[0].mxu0
    %5174 = vdwg.mxu0
    %5175 = vmatprep.subr.bf16.mxu0 0
    %5176 = vmatpush1.bf16.msra.mxu0 %v647
    %5177 = vmatprep.subr.bf16.mxu0 0
    %5178 = vmatpush1.bf16.msra.mxu0 %v648
    %5179 = vmatprep.subr.bf16.mxu0 0
    %5180 = vmatpush1.bf16.msra.mxu0 %v649
    %5181 = vmatprep.subr.bf16.mxu0 0
    %5182 = vmatpush1.bf16.msra.mxu0 %v650
    %5183 = vmatprep.subr.bf16.mxu0 0
    %5184 = vmatpush1.bf16.msra.mxu0 %v651
    %5185 = vmatprep.subr.bf16.mxu0 0
    %5186 = vmatpush1.bf16.msra.mxu0 %v652
    %5187 = vmatprep.subr.bf16.mxu0 0
    %5188 = vmatpush1.bf16.msra.mxu0 %v653
    %5189 = vmatprep.subr.bf16.mxu0 0
    %5190 = vmatpush1.bf16.msra.mxu0 %v654
    %5191 = vmatprep.subr.bf16.mxu0 0
    %5192 = vmatpush1.bf16.msra.mxu0 %v655
    %5193 = vmatprep.subr.bf16.mxu0 0
    %5194 = vmatpush1.bf16.msra.mxu0 %v656
    %5195 = vmatprep.subr.bf16.mxu0 0
    %5196 = vmatpush1.bf16.msra.mxu0 %v657
    %5197 = vmatprep.subr.bf16.mxu0 0
    %5198 = vmatpush1.bf16.msra.mxu0 %v658
    %5199 = vmatprep.subr.bf16.mxu0 0
    %5200 = vmatpush1.bf16.msra.mxu0 %v659
    %5201 = vmatprep.subr.bf16.mxu0 0
    %5202 = vmatpush1.bf16.msra.mxu0 %v660
    %5203 = vmatprep.subr.bf16.mxu0 0
    %5204 = vmatpush1.bf16.msra.mxu0 %v661
    %5205 = vmatprep.subr.bf16.mxu0 0
    %5206 = vmatpush1.bf16.msra.mxu0 %v662
    %5207 = vmatprep.mubr.bf16.mxu0 %v5054
    %5208 = vmatmul.mubr.bf16.gmra.mrb[0].mxu0 %v5053
    %v5209 = vpop.f32.mrb[0].mxu0
    %v5210 = vadd.f32 %v5170, %v5209
    %v5211 = vpop.f32.mrb[0].mxu0
    %v5212 = vpop.f32.mrb[0].mxu0
    %v5213 = vpop.f32.mrb[0].mxu0
    %5214 = vdwg.mxu0
    %5215 = vst [vmem:[#allocation10] sm:$0xff] %v5210
    // Predicated region
    $region42: #{tpu_custom_call.1} parent=1 // pred_check
      _
    $region43: #{tpu_custom_call.1} parent=1 // pred_check_branch
      %5217 = sbr.rel (0) target = $region45
    $region44: #{tpu_custom_call.1} parent=1 // pred_region
      %s5219 = ssub.s32 128, 128
      %5220 = vsyncadd [#allocation4], %s5219
      %s5222 = sshll.u32 [#allocation10], 4
      %s5223 = int_to_ptr.vmem [resolvable:$true] %s5222
      %5225 = dma.vmem_to_hbm [thread:$0]  %s5223, 128, %s6, [#allocation4]
    $region45: #{tpu_custom_call.1} parent=1 // pred_fallthru
      _
    // Predicated region
    $region46: #{tpu_custom_call.1} parent=1 // pred_check
      _
    $region47: #{tpu_custom_call.1} parent=1 // pred_check_branch
      %5227 = sbr.rel (0) target = $region49
    $region48: #{tpu_custom_call.1} parent=1 // pred_region
      %s5229 = ssub.s32 1024, 1024
      %5230 = vsyncadd [#allocation12], %s5229
      %s5232 = sshll.u32 [#allocation11], 4
      %s5233 = int_to_ptr.vmem [resolvable:$true] %s5232
      %5235 = dma.vmem_to_hbm [thread:$0]  %s5233, 1024, %s7, [#allocation12]
    $region49: #{tpu_custom_call.1} parent=1 // pred_fallthru
      _
    // Predicated region
    $region50: #{tpu_custom_call.1} parent=1 // pred_check
      _
    $region51: #{tpu_custom_call.1} parent=1 // pred_check_branch
      %5237 = sbr.rel (0) target = $region53
    $region52: #{tpu_custom_call.1} parent=1 // pred_region
      %5238 = dma.done [#allocation4], 128
    $region53: #{tpu_custom_call.1} parent=1 // pred_fallthru
      _
    // Predicated region
    $region54: #{tpu_custom_call.1} parent=1 // pred_check
      _
    $region55: #{tpu_custom_call.1} parent=1 // pred_check_branch
      %5240 = sbr.rel (0) target = $region57
    $region56: #{tpu_custom_call.1} parent=1 // pred_region
      %5241 = dma.done [#allocation12], 1024
    $region57: #{tpu_custom_call.1} parent=1 // pred_fallthru
      _
    %5242 = vsyncpa [#allocation3], 1
    %5243 = vsyncpa [#allocation6], 1
    %5244 = vsyncpa [#allocation9], 1
    %5245 = vsyncpa [#allocation4], 1
    %5246 = vsyncpa [#allocation12], 1

</llo_original>
